<compile_context>
chip_gen: v6e
topology: v6e:2x2x1
jax: 0.10.0
libtpu: 0.0.40
codegen_flags: <defaults>
</compile_context>

<pallas_src>
import functools

import jax
import jax.numpy as jnp
from jax.experimental import pallas as pl
from jax.experimental.pallas import tpu as pltpu


def _round_up(x, m):
    return ((x + m - 1) // m) * m


def _num_tensorcores():
    """Number of TensorCores a single Pallas program can shard a 'parallel' axis over."""
    kind = jax.devices()[0].device_kind.lower()
    if ("lite" in kind) or ("v5e" in kind) or ("v6e" in kind):
        return 1                      # single-TC chips: parallel axis would be a serial loop
    if ("v4" in kind) or ("v5p" in kind) or ("v5" in kind) or ("7" in kind):
        return 2                      # megacore (v4/v5p) and v7x: 2 TCs per chip
    return 1


# ---------------- fused Pallas kernel ----------------

def _fused_seg_kernel(x_ref, we_ref, be_ref, wd_ref, bd_ref, lab_ref,
                      stats_ref, nll_acc, cor_acc, val_acc, *, m_real):
    """Per pixel tile: encoder matmul+ReLU -> decoder matmul -> log-softmax stats ->
    NLL / pixel-accuracy counts, accumulated across the reduction grid axis."""
    c = pl.program_id(0)                  # core-parallel axis
    t = pl.program_id(1)                  # reduction (tile) axis
    n_t = pl.num_programs(1)

    @pl.when(t == 0)
    def _init():
        nll_acc[...] = jnp.zeros_like(nll_acc)
        cor_acc[...] = jnp.zeros_like(cor_acc)
        val_acc[...] = jnp.zeros_like(val_acc)

    # encoder: 3x3 conv as matmul over im2col columns (bf16 MXU, f32 accumulate) + ReLU
    feat = jnp.dot(x_ref[...], we_ref[...], preferred_element_type=jnp.float32)
    feat = jnp.maximum(feat + be_ref[...], 0.0)

    # decoder: 1x1 conv to (padded) classes; pad classes carry -1e30 bias so they are
    # ignored by both the softmax and the row-max check below
    logits = jnp.dot(feat.astype(jnp.bfloat16), wd_ref[...],
                     preferred_element_type=jnp.float32) + bd_ref[...]

    tm, c_pad = logits.shape
    labels = lab_ref[...]                                          # [tm, 1] int32
    class_ids = jax.lax.broadcasted_iota(jnp.int32, (1, c_pad), 1)  # [1, C_pad]
    is_label = class_ids == labels                                  # [tm, C_pad] (broadcast)

    # log-sum-exp (stable); pad classes contribute exp(-huge) = 0
    m = jnp.max(logits, axis=-1, keepdims=True)                     # [tm, 1]
    s = logits - m
    lse = jnp.log(jnp.sum(jnp.exp(s), axis=-1, keepdims=True))      # [tm, 1]

    # shifted logit at the label column (0 when label == -1; masked out below)
    s_at_label = jnp.sum(jnp.where(is_label, s, 0.0), axis=-1, keepdims=True)

    # mask rows that are only M-padding
    row0 = (c * n_t + t) * tm
    rows = row0 + jax.lax.broadcasted_iota(jnp.int32, (tm, 1), 0)
    valid_row = (rows < m_real).astype(jnp.float32)                 # [tm, 1]

    # NLL contribution: -log p[label] = lse - s[label]  (sum; mean taken in wrapper)
    nll = (lse - s_at_label) * valid_row

    # pixel accuracy: label's logit equals the row max  ->  prediction == label
    valid = (labels >= 0).astype(jnp.float32) * valid_row
    correct = (s_at_label == 0.0).astype(jnp.float32) * valid

    nll_acc[...] += jnp.sum(nll, axis=0, keepdims=True)
    cor_acc[...] += jnp.sum(correct, axis=0, keepdims=True)
    val_acc[...] += jnp.sum(valid, axis=0, keepdims=True)

    @pl.when(t == n_t - 1)
    def _finalize():
        lane = jax.lax.broadcasted_iota(jnp.int32, stats_ref.shape, 1)
        nll_b = jnp.broadcast_to(nll_acc[...], stats_ref.shape)
        cor_b = jnp.broadcast_to(cor_acc[...], stats_ref.shape)
        val_b = jnp.broadcast_to(val_acc[...], stats_ref.shape)
        stats_ref[...] = (jnp.where(lane == 0, nll_b, 0.0)
                          + jnp.where(lane == 1, cor_b, 0.0)
                          + jnp.where(lane == 2, val_b, 0.0))


# ---------------- wrapper ----------------

def segmentation_module_forward(img_data_nchw, seg_label_0, params):
    """Equivalent of SegmentationModule.forward(feed_dict) with segSize=None,
    quad_sup=False, deep_sup_scale=None. Returns (loss, acc)."""
    # NCHW -> NHWC, bf16 (matmul operand dtype; avoids a second f32 materialization)
    x = jnp.transpose(img_data_nchw, (0, 2, 3, 1)).astype(jnp.bfloat16)
    B, H, W, Cin = x.shape
    M = B * H * W
    K = 9 * Cin

    # im2col for the 3x3 / pad=1 / stride=1 encoder conv, directly in bf16.
    # TODO(synk): replace with an in-kernel halo-row conv (9 shifted accumulating
    #             matmuls) to remove this 9x encoder-input HBM expansion.
    xp = jnp.pad(x, ((0, 0), (1, 1), (1, 1), (0, 0)))
    patches = jnp.concatenate(
        [xp[:, i:i + H, j:j + W, :] for i in range(3) for j in range(3)], axis=-1)
    xm = patches.reshape(M, K)

    hidden = params["w_enc"].shape[1]
    num_classes = params["w_dec"].shape[1]

    # Contraction dim: pad only to the bf16 sublane tile (16), NOT to 128 lanes.
    # Hidden / class dims stay at one 128-lane tile (MXU occupancy is irrelevant here).
    K_al = _round_up(K, 16)
    H_pad = _round_up(max(hidden, 128), 128)
    C_pad = _round_up(max(num_classes, 128), 128)

    # grid sizing: leading parallel axis only on 2-TC chips; large pixel tiles to
    # amortize the ~0.35us/step grid overhead (VMEM stays tiny even at tm=2048).
    NCORES = _num_tensorcores()
    per_core = -(-M // NCORES)
    tm = min(2048, _round_up(per_core, 8))
    n_per_core = -(-per_core // tm)
    M_pad = NCORES * n_per_core * tm

    # pad + cast operands (bf16 matmul operands, f32 biases)
    xm_p = jnp.zeros((M_pad, K_al), jnp.bfloat16).at[:M, :K].set(xm)
    we_p = jnp.zeros((K_al, H_pad), jnp.bfloat16).at[:K, :hidden].set(
        params["w_enc"].astype(jnp.bfloat16))
    be_p = jnp.zeros((1, H_pad), jnp.float32).at[:, :hidden].set(
        params["b_enc"].astype(jnp.float32))
    wd_p = jnp.zeros((H_pad, C_pad), jnp.bfloat16).at[:hidden, :num_classes].set(
        params["w_dec"].astype(jnp.bfloat16))
    bd_p = jnp.full((1, C_pad), -1e30, jnp.float32).at[:, :num_classes].set(
        params["b_dec"].astype(jnp.float32))
    lab_p = jnp.full((M_pad, 1), -1, jnp.int32).at[:M, 0].set(
        seg_label_0.reshape(M).astype(jnp.int32))

    kernel = functools.partial(_fused_seg_kernel, m_real=M)

    stats = pl.pallas_call(
        kernel,
        out_shape=jax.ShapeDtypeStruct((NCORES * 8, 128), jnp.float32),
        grid_spec=pltpu.PrefetchScalarGridSpec(
            num_scalar_prefetch=0,
            grid=(NCORES, n_per_core),
            in_specs=[
                pl.BlockSpec((tm, K_al), lambda c, t: (c * n_per_core + t, 0)),
                pl.BlockSpec((K_al, H_pad), lambda c, t: (0, 0)),   # resident weights
                pl.BlockSpec((1, H_pad), lambda c, t: (0, 0)),
                pl.BlockSpec((H_pad, C_pad), lambda c, t: (0, 0)),
                pl.BlockSpec((1, C_pad), lambda c, t: (0, 0)),
                pl.BlockSpec((tm, 1), lambda c, t: (c * n_per_core + t, 0)),
            ],
            out_specs=pl.BlockSpec((8, 128), lambda c, t: (c, 0)),
            scratch_shapes=[
                pltpu.VMEM((1, 1), jnp.float32),
                pltpu.VMEM((1, 1), jnp.float32),
                pltpu.VMEM((1, 1), jnp.float32),
            ],
        ),
        compiler_params=pltpu.CompilerParams(
            dimension_semantics=("parallel", "arbitrary"),
            vmem_limit_bytes=48 * 1024 * 1024,
        ),
    )(xm_p, we_p, be_p, wd_p, bd_p, lab_p)

    # combine per-core partial sums (trivial scalar glue)
    part = stats.reshape(NCORES, 8, 128)[:, 0, :]   # one stats row per core
    totals = jnp.sum(part, axis=0)                  # [128]
    nll_tot, cor_tot, val_tot = totals[0], totals[1], totals[2]

    loss = nll_tot / jnp.float32(M)                 # NLLLoss mean over pixels
    acc = cor_tot / (val_tot + 1e-10)               # pixel_acc (quad_sup=False)
    return loss, acc


# ---------------- main ----------------

if __name__ == "__main__":
    B, Cin, H, W = 2, 4, 16, 16
    hidden = 32
    num_classes = 8

    key = jax.random.PRNGKey(0)
    k_img, k_lab, k_we, k_be, k_wd, k_bd = jax.random.split(key, 6)

    img_data = jax.random.normal(k_img, (B, Cin, H, W), dtype=jnp.float32)
    seg_label_0 = jax.random.randint(k_lab, (B, H, W), 0, num_classes, dtype=jnp.int32)

    params = {
        "w_enc": 0.1 * jax.random.normal(k_we, (9 * Cin, hidden), dtype=jnp.float32),
        "b_enc": 0.1 * jax.random.normal(k_be, (1, hidden), dtype=jnp.float32),
        "w_dec": 0.1 * jax.random.normal(k_wd, (hidden, num_classes), dtype=jnp.float32),
        "b_dec": 0.1 * jax.random.normal(k_bd, (1, num_classes), dtype=jnp.float32),
    }

    loss, acc = jax.jit(segmentation_module_forward)(img_data, seg_label_0, params)
    jax.block_until_ready((loss, acc))

    assert jnp.isfinite(loss) and jnp.isfinite(acc)
    assert (acc >= 0.0) and (acc <= 1.0)
    print("KERNEL_OK")
</pallas_src>

<mosaic_0001>
module attributes {stable_mosaic.version = 11 : i64} {
  func.func @_fused_seg_kernel(%arg0: i32, %arg1: i32, %arg2: memref<512x48xbf16, #tpu.memory_space<vmem>>, %arg3: memref<48x128xbf16, #tpu.memory_space<vmem>>, %arg4: memref<1x128xf32, #tpu.memory_space<vmem>>, %arg5: memref<128x128xbf16, #tpu.memory_space<vmem>>, %arg6: memref<1x128xf32, #tpu.memory_space<vmem>>, %arg7: memref<512x1xi32, #tpu.memory_space<vmem>>, %arg8: memref<8x128xf32, #tpu.memory_space<vmem>>, %arg9: memref<1x1xf32, #tpu.memory_space<vmem>>, %arg10: memref<1x1xf32, #tpu.memory_space<vmem>>, %arg11: memref<1x1xf32, #tpu.memory_space<vmem>>) attributes {dimension_semantics = [#tpu.dimension_semantics<parallel>, #tpu.dimension_semantics<arbitrary>], iteration_bounds = array<i64: 1, 1>, scalar_prefetch = 0 : i64, scratch_operands = 3 : i64, tpu.core_type = #tpu.core_type<tc>, window_params = [{transform_indices = @transform_0, window_bounds = array<i64: 512, 48>}, {pipeline_mode = #tpu.pipeline_mode<synchronous>, transform_indices = @transform_1, window_bounds = array<i64: 48, 128>}, {pipeline_mode = #tpu.pipeline_mode<synchronous>, transform_indices = @transform_2, window_bounds = array<i64: 1, 128>}, {pipeline_mode = #tpu.pipeline_mode<synchronous>, transform_indices = @transform_3, window_bounds = array<i64: 128, 128>}, {pipeline_mode = #tpu.pipeline_mode<synchronous>, transform_indices = @transform_4, window_bounds = array<i64: 1, 128>}, {transform_indices = @transform_5, window_bounds = array<i64: 512, 1>}, {transform_indices = @transform_6, window_bounds = array<i64: 8, 128>}]} {
    %c0_i32 = arith.constant 0 : i32
    %0 = arith.cmpi eq, %arg1, %c0_i32 : i32
    %1 = arith.extui %0 : i1 to i32
    %c0_i32_0 = arith.constant 0 : i32
    %2 = arith.cmpi ne, %1, %c0_i32_0 : i32
    scf.if %2 {
      %cst_38 = arith.constant 0.000000e+00 : f32
      %74 = vector.broadcast %cst_38 : f32 to vector<1x1xf32>
      %c0_39 = arith.constant 0 : index
      %c0_40 = arith.constant 0 : index
      %75 = vector.load %arg9[%c0_39, %c0_40] : memref<1x1xf32, #tpu.memory_space<vmem>>, vector<1x1xf32>
      tpu.vector_store %arg9[%c0_39, %c0_40], %74 {strides = array<i32>} : memref<1x1xf32, #tpu.memory_space<vmem>>, vector<1x1xf32>,
      %cst_41 = arith.constant 0.000000e+00 : f32
      %76 = vector.broadcast %cst_41 : f32 to vector<1x1xf32>
      %c0_42 = arith.constant 0 : index
      %c0_43 = arith.constant 0 : index
      %77 = vector.load %arg10[%c0_42, %c0_43] : memref<1x1xf32, #tpu.memory_space<vmem>>, vector<1x1xf32>
      tpu.vector_store %arg10[%c0_42, %c0_43], %76 {strides = array<i32>} : memref<1x1xf32, #tpu.memory_space<vmem>>, vector<1x1xf32>,
      %cst_44 = arith.constant 0.000000e+00 : f32
      %78 = vector.broadcast %cst_44 : f32 to vector<1x1xf32>
      %c0_45 = arith.constant 0 : index
      %c0_46 = arith.constant 0 : index
      %79 = vector.load %arg11[%c0_45, %c0_46] : memref<1x1xf32, #tpu.memory_space<vmem>>, vector<1x1xf32>
      tpu.vector_store %arg11[%c0_45, %c0_46], %78 {strides = array<i32>} : memref<1x1xf32, #tpu.memory_space<vmem>>, vector<1x1xf32>,
    } else {
    }
    %c0 = arith.constant 0 : index
    %c0_1 = arith.constant 0 : index
    %3 = vector.load %arg2[%c0, %c0_1] : memref<512x48xbf16, #tpu.memory_space<vmem>>, vector<512x48xbf16>
    %c0_2 = arith.constant 0 : index
    %c0_3 = arith.constant 0 : index
    %4 = vector.load %arg3[%c0_2, %c0_3] : memref<48x128xbf16, #tpu.memory_space<vmem>>, vector<48x128xbf16>
    %cst = arith.constant dense<0.000000e+00> : vector<512x128xf32>
    %5 = tpu.matmul %3, %4, %cst {dimension_numbers = #tpu.dot_dimension_numbers<[1], [0], [0], [1], [0, 0, 1, 1], [], []>} : vector<512x48xbf16>, vector<48x128xbf16>, vector<512x128xf32> -> vector<512x128xf32>
    %c0_4 = arith.constant 0 : index
    %c0_5 = arith.constant 0 : index
    %6 = vector.load %arg4[%c0_4, %c0_5] : memref<1x128xf32, #tpu.memory_space<vmem>>, vector<1x128xf32>
    %7 = vector.broadcast %6 : vector<1x128xf32> to vector<512x128xf32>
    %8 = arith.addf %5, %7 : vector<512x128xf32>
    %cst_6 = arith.constant 0.000000e+00 : f32
    %9 = vector.broadcast %cst_6 : f32 to vector<512x128xf32>
    %10 = arith.maximumf %8, %9 : vector<512x128xf32>
    %11 = arith.truncf %10 : vector<512x128xf32> to vector<512x128xbf16>
    %c0_7 = arith.constant 0 : index
    %c0_8 = arith.constant 0 : index
    %12 = vector.load %arg5[%c0_7, %c0_8] : memref<128x128xbf16, #tpu.memory_space<vmem>>, vector<128x128xbf16>
    %cst_9 = arith.constant dense<0.000000e+00> : vector<512x128xf32>
    %13 = tpu.matmul %11, %12, %cst_9 {dimension_numbers = #tpu.dot_dimension_numbers<[1], [0], [0], [1], [0, 0, 1, 1], [], []>} : vector<512x128xbf16>, vector<128x128xbf16>, vector<512x128xf32> -> vector<512x128xf32>
    %c0_10 = arith.constant 0 : index
    %c0_11 = arith.constant 0 : index
    %14 = vector.load %arg6[%c0_10, %c0_11] : memref<1x128xf32, #tpu.memory_space<vmem>>, vector<1x128xf32>
    %15 = vector.broadcast %14 : vector<1x128xf32> to vector<512x128xf32>
    %16 = arith.addf %13, %15 : vector<512x128xf32>
    %c0_12 = arith.constant 0 : index
    %c0_13 = arith.constant 0 : index
    %17 = vector.load %arg7[%c0_12, %c0_13] : memref<512x1xi32, #tpu.memory_space<vmem>>, vector<512x1xi32>
    %18 = tpu.iota {dimensions = array<i32: 1>} : vector<1x128xi32>
    %19 = vector.broadcast %18 : vector<1x128xi32> to vector<512x128xi32>
    %20 = vector.broadcast %17 : vector<512x1xi32> to vector<512x128xi32>
    %21 = arith.cmpi eq, %19, %20 : vector<512x128xi32>
    %cst_14 = arith.constant dense<0xFF800000> : vector<512xf32>
    %22 = vector.multi_reduction <maximumf>, %16, %cst_14 [1] : vector<512x128xf32> to vector<512xf32>
    %23 = vector.shape_cast %22 : vector<512xf32> to vector<512x1xf32>
    %24 = vector.broadcast %23 : vector<512x1xf32> to vector<512x128xf32>
    %25 = arith.subf %16, %24 : vector<512x128xf32>
    %26 = math.exp %25 : vector<512x128xf32>
    %cst_15 = arith.constant dense<0.000000e+00> : vector<512xf32>
    %27 = vector.multi_reduction <add>, %26, %cst_15 [1] : vector<512x128xf32> to vector<512xf32>
    %28 = vector.shape_cast %27 : vector<512xf32> to vector<512x1xf32>
    %29 = math.log %28 : vector<512x1xf32>
    %cst_16 = arith.constant 0.000000e+00 : f32
    %30 = vector.broadcast %cst_16 : f32 to vector<512x128xf32>
    %31 = arith.select %21, %25, %30 : vector<512x128xi1>, vector<512x128xf32>
    %cst_17 = arith.constant dense<0.000000e+00> : vector<512xf32>
    %32 = vector.multi_reduction <add>, %31, %cst_17 [1] : vector<512x128xf32> to vector<512xf32>
    %33 = vector.shape_cast %32 : vector<512xf32> to vector<512x1xf32>
    %c1_i32 = arith.constant 1 : i32
    %34 = arith.muli %arg0, %c1_i32 : i32
    %35 = arith.addi %34, %arg1 : i32
    %c512_i32 = arith.constant 512 : i32
    %36 = arith.muli %35, %c512_i32 : i32
    %37 = tpu.iota {dimensions = array<i32: 0>} : vector<512x1xi32>
    %38 = vector.broadcast %36 : i32 to vector<512x1xi32>
    %39 = arith.addi %38, %37 : vector<512x1xi32>
    %c512_i32_18 = arith.constant 512 : i32
    %40 = vector.broadcast %c512_i32_18 : i32 to vector<512x1xi32>
    %41 = arith.cmpi slt, %39, %40 : vector<512x1xi32>
    %42 = arith.extui %41 : vector<512x1xi1> to vector<512x1xi32>
    %43 = arith.sitofp %42 : vector<512x1xi32> to vector<512x1xf32>
    %44 = arith.subf %29, %33 : vector<512x1xf32>
    %45 = arith.mulf %44, %43 : vector<512x1xf32>
    %c0_i32_19 = arith.constant 0 : i32
    %46 = vector.broadcast %c0_i32_19 : i32 to vector<512x1xi32>
    %47 = arith.cmpi sge, %17, %46 : vector<512x1xi32>
    %48 = arith.extui %47 : vector<512x1xi1> to vector<512x1xi32>
    %49 = arith.sitofp %48 : vector<512x1xi32> to vector<512x1xf32>
    %50 = arith.mulf %49, %43 : vector<512x1xf32>
    %cst_20 = arith.constant 0.000000e+00 : f32
    %51 = vector.broadcast %cst_20 : f32 to vector<512x1xf32>
    %52 = arith.cmpf oeq, %33, %51 : vector<512x1xf32>
    %53 = arith.extui %52 : vector<512x1xi1> to vector<512x1xi32>
    %54 = arith.sitofp %53 : vector<512x1xi32> to vector<512x1xf32>
    %55 = arith.mulf %54, %50 : vector<512x1xf32>
    %c0_21 = arith.constant 0 : index
    %c0_22 = arith.constant 0 : index
    %56 = vector.load %arg9[%c0_21, %c0_22] : memref<1x1xf32, #tpu.memory_space<vmem>>, vector<1x1xf32>
    %cst_23 = arith.constant dense<0.000000e+00> : vector<1xf32>
    %57 = vector.multi_reduction <add>, %45, %cst_23 [0] : vector<512x1xf32> to vector<1xf32>
    %58 = vector.shape_cast %57 : vector<1xf32> to vector<1x1xf32>
    %59 = arith.addf %56, %58 : vector<1x1xf32>
    %c0_24 = arith.constant 0 : index
    %c0_25 = arith.constant 0 : index
    %60 = vector.load %arg9[%c0_24, %c0_25] : memref<1x1xf32, #tpu.memory_space<vmem>>, vector<1x1xf32>
    tpu.vector_store %arg9[%c0_24, %c0_25], %59 {strides = array<i32>} : memref<1x1xf32, #tpu.memory_space<vmem>>, vector<1x1xf32>,
    %c0_26 = arith.constant 0 : index
    %c0_27 = arith.constant 0 : index
    %61 = vector.load %arg10[%c0_26, %c0_27] : memref<1x1xf32, #tpu.memory_space<vmem>>, vector<1x1xf32>
    %cst_28 = arith.constant dense<0.000000e+00> : vector<1xf32>
    %62 = vector.multi_reduction <add>, %55, %cst_28 [0] : vector<512x1xf32> to vector<1xf32>
    %63 = vector.shape_cast %62 : vector<1xf32> to vector<1x1xf32>
    %64 = arith.addf %61, %63 : vector<1x1xf32>
    %c0_29 = arith.constant 0 : index
    %c0_30 = arith.constant 0 : index
    %65 = vector.load %arg10[%c0_29, %c0_30] : memref<1x1xf32, #tpu.memory_space<vmem>>, vector<1x1xf32>
    tpu.vector_store %arg10[%c0_29, %c0_30], %64 {strides = array<i32>} : memref<1x1xf32, #tpu.memory_space<vmem>>, vector<1x1xf32>,
    %c0_31 = arith.constant 0 : index
    %c0_32 = arith.constant 0 : index
    %66 = vector.load %arg11[%c0_31, %c0_32] : memref<1x1xf32, #tpu.memory_space<vmem>>, vector<1x1xf32>
    %cst_33 = arith.constant dense<0.000000e+00> : vector<1xf32>
    %67 = vector.multi_reduction <add>, %50, %cst_33 [0] : vector<512x1xf32> to vector<1xf32>
    %68 = vector.shape_cast %67 : vector<1xf32> to vector<1x1xf32>
    %69 = arith.addf %66, %68 : vector<1x1xf32>
    %c0_34 = arith.constant 0 : index
    %c0_35 = arith.constant 0 : index
    %70 = vector.load %arg11[%c0_34, %c0_35] : memref<1x1xf32, #tpu.memory_space<vmem>>, vector<1x1xf32>
    tpu.vector_store %arg11[%c0_34, %c0_35], %69 {strides = array<i32>} : memref<1x1xf32, #tpu.memory_space<vmem>>, vector<1x1xf32>,
    %c0_i32_36 = arith.constant 0 : i32
    %71 = arith.cmpi eq, %arg1, %c0_i32_36 : i32
    %72 = arith.extui %71 : i1 to i32
    %c0_i32_37 = arith.constant 0 : i32
    %73 = arith.cmpi ne, %72, %c0_i32_37 : i32
    scf.if %73 {
      %74 = tpu.iota {dimensions = array<i32: 1>} : vector<8x128xi32>
      %c0_38 = arith.constant 0 : index
      %c0_39 = arith.constant 0 : index
      %75 = vector.load %arg9[%c0_38, %c0_39] : memref<1x1xf32, #tpu.memory_space<vmem>>, vector<1x1xf32>
      %76 = vector.shape_cast %75 : vector<1x1xf32> to vector<1x1xf32>
      %77 = vector.broadcast %76 : vector<1x1xf32> to vector<8x128xf32>
      %c0_40 = arith.constant 0 : index
      %c0_41 = arith.constant 0 : index
      %78 = vector.load %arg10[%c0_40, %c0_41] : memref<1x1xf32, #tpu.memory_space<vmem>>, vector<1x1xf32>
      %79 = vector.shape_cast %78 : vector<1x1xf32> to vector<1x1xf32>
      %80 = vector.broadcast %79 : vector<1x1xf32> to vector<8x128xf32>
      %c0_42 = arith.constant 0 : index
      %c0_43 = arith.constant 0 : index
      %81 = vector.load %arg11[%c0_42, %c0_43] : memref<1x1xf32, #tpu.memory_space<vmem>>, vector<1x1xf32>
      %82 = vector.shape_cast %81 : vector<1x1xf32> to vector<1x1xf32>
      %83 = vector.broadcast %82 : vector<1x1xf32> to vector<8x128xf32>
      %c0_i32_44 = arith.constant 0 : i32
      %84 = vector.broadcast %c0_i32_44 : i32 to vector<8x128xi32>
      %85 = arith.cmpi eq, %74, %84 : vector<8x128xi32>
      %cst_45 = arith.constant 0.000000e+00 : f32
      %86 = vector.broadcast %cst_45 : f32 to vector<8x128xf32>
      %87 = arith.select %85, %77, %86 : vector<8x128xi1>, vector<8x128xf32>
      %c1_i32_46 = arith.constant 1 : i32
      %88 = vector.broadcast %c1_i32_46 : i32 to vector<8x128xi32>
      %89 = arith.cmpi eq, %74, %88 : vector<8x128xi32>
      %cst_47 = arith.constant 0.000000e+00 : f32
      %90 = vector.broadcast %cst_47 : f32 to vector<8x128xf32>
      %91 = arith.select %89, %80, %90 : vector<8x128xi1>, vector<8x128xf32>
      %92 = arith.addf %87, %91 : vector<8x128xf32>
      %c2_i32 = arith.constant 2 : i32
      %93 = vector.broadcast %c2_i32 : i32 to vector<8x128xi32>
      %94 = arith.cmpi eq, %74, %93 : vector<8x128xi32>
      %cst_48 = arith.constant 0.000000e+00 : f32
      %95 = vector.broadcast %cst_48 : f32 to vector<8x128xf32>
      %96 = arith.select %94, %83, %95 : vector<8x128xi1>, vector<8x128xf32>
      %97 = arith.addf %92, %96 : vector<8x128xf32>
      %c0_49 = arith.constant 0 : index
      %c0_50 = arith.constant 0 : index
      %98 = vector.load %arg8[%c0_49, %c0_50] : memref<8x128xf32, #tpu.memory_space<vmem>>, vector<8x128xf32>
      tpu.vector_store %arg8[%c0_49, %c0_50], %97 {strides = array<i32>} : memref<8x128xf32, #tpu.memory_space<vmem>>, vector<8x128xf32>,
    } else {
    }
    return
  }
  func.func @transform_0(%arg0: i32, %arg1: i32) -> (i32, i32) {
    %c1_i32 = arith.constant 1 : i32
    %0 = arith.muli %arg0, %c1_i32 : i32
    %1 = arith.addi %0, %arg1 : i32
    %c0_i32 = arith.constant 0 : i32
    %c0_i32_0 = arith.constant 0 : i32
    return %1, %c0_i32 : i32, i32
  }
  func.func @transform_1(%arg0: i32, %arg1: i32) -> (i32, i32) {
    %c0_i32 = arith.constant 0 : i32
    %c0_i32_0 = arith.constant 0 : i32
    %c0_i32_1 = arith.constant 0 : i32
    return %c0_i32, %c0_i32_0 : i32, i32
  }
  func.func @transform_2(%arg0: i32, %arg1: i32) -> (i32, i32) {
    %c0_i32 = arith.constant 0 : i32
    %c0_i32_0 = arith.constant 0 : i32
    %c0_i32_1 = arith.constant 0 : i32
    return %c0_i32, %c0_i32_0 : i32, i32
  }
  func.func @transform_3(%arg0: i32, %arg1: i32) -> (i32, i32) {
    %c0_i32 = arith.constant 0 : i32
    %c0_i32_0 = arith.constant 0 : i32
    %c0_i32_1 = arith.constant 0 : i32
    return %c0_i32, %c0_i32_0 : i32, i32
  }
  func.func @transform_4(%arg0: i32, %arg1: i32) -> (i32, i32) {
    %c0_i32 = arith.constant 0 : i32
    %c0_i32_0 = arith.constant 0 : i32
    %c0_i32_1 = arith.constant 0 : i32
    return %c0_i32, %c0_i32_0 : i32, i32
  }
  func.func @transform_5(%arg0: i32, %arg1: i32) -> (i32, i32) {
    %c1_i32 = arith.constant 1 : i32
    %0 = arith.muli %arg0, %c1_i32 : i32
    %1 = arith.addi %0, %arg1 : i32
    %c0_i32 = arith.constant 0 : i32
    %c0_i32_0 = arith.constant 0 : i32
    return %1, %c0_i32 : i32, i32
  }
  func.func @transform_6(%arg0: i32, %arg1: i32) -> (i32, i32) {
    %c0_i32 = arith.constant 0 : i32
    %c0_i32_0 = arith.constant 0 : i32
    return %arg0, %c0_i32 : i32, i32
  }
}

</mosaic_0001>

<llo_original>
// kernel: segmentation_module_forward.1
$region0: #{segmentation_module_forward.1}
  #allocation0 [shape = 'u32[]', space=smem, size = 0x4, offset = 0x4, fixed_abs, tag = 'smem constant byte address 0x4 - core index']
  #allocation1 [shape = 'u32[144,128]{1,0:T(1,128)}', space=vmem, size = 0x12000, scoped, tag = 'internal scratch']
  #allocation2 [shape = 'f32[1,1]{1,0:T(1,128)}', space=vmem, size = 0x200, scoped, tag = 'scratch operand']
  #allocation3 [shape = 'f32[1,1]{1,0:T(1,128)}', space=vmem, size = 0x200, scoped, tag = 'scratch operand']
  #allocation4 [shape = 'f32[1,1]{1,0:T(1,128)}', space=vmem, size = 0x200, scoped, tag = 'scratch operand']
  %s0 = inlined_call_operand.vmem [shape: bf16[512,48], index: 0, kind: input, shape index: {}]
  %s1 = inlined_call_operand.vmem [shape: bf16[48,128], index: 1, kind: input, shape index: {}]
  %s2 = inlined_call_operand.vmem [shape: f32[1,128], index: 2, kind: input, shape index: {}]
  %s3 = inlined_call_operand.vmem [shape: bf16[128,128], index: 3, kind: input, shape index: {}]
  %s4 = inlined_call_operand.vmem [shape: f32[1,128], index: 4, kind: input, shape index: {}]
  %s5 = inlined_call_operand.vmem [shape: s32[512,1], index: 5, kind: input, shape index: {}]
  %s6 = inlined_call_operand.vmem [shape: f32[8,128], index: 6, kind: output, shape index: {}]
  %s7 = sld [smem:[#allocation0]]
  $region42: #{segmentation_module_forward.1} parent=0
    _
  %s9 = ssub.s32 1, %s7
  %s10 = scalar_select 0, %s9, %s7
  // Predicated region
  $region2: #{segmentation_module_forward.1} parent=0 // pred_check
    _
  $region3: #{segmentation_module_forward.1} parent=0 // pred_check_branch
    %12 = sbr.rel (0) target = $region5
  $region4: #{segmentation_module_forward.1} parent=0 // pred_region
    %s13 = sadd.s32 0, 0
    %s14 = smul.u32 64, %s13
    %p15 = scmp.lt.s32.totalorder %s14, 63
    %s16 = scalar_select %p15, %s14, 63
    %s17 = smul.addr %s16, 4
    %s18 = scalar_lea.vmem %s0, %s17
    %s19 = sadd.s32 0, 0
    %s20 = smul.u32 64, %s19
  $region5: #{segmentation_module_forward.1} parent=0 // pred_fallthru
    _
  // Predicated region
  $region6: #{segmentation_module_forward.1} parent=0 // pred_check
    _
  $region7: #{segmentation_module_forward.1} parent=0 // pred_check_branch
    %22 = sbr.rel (0) target = $region9
  $region8: #{segmentation_module_forward.1} parent=0 // pred_region
    _
  $region9: #{segmentation_module_forward.1} parent=0 // pred_fallthru
    _
  // Predicated region
  $region10: #{segmentation_module_forward.1} parent=0 // pred_check
    _
  $region11: #{segmentation_module_forward.1} parent=0 // pred_check_branch
    %24 = sbr.rel (0) target = $region13
  $region12: #{segmentation_module_forward.1} parent=0 // pred_region
    _
  $region13: #{segmentation_module_forward.1} parent=0 // pred_fallthru
    _
  // Predicated region
  $region14: #{segmentation_module_forward.1} parent=0 // pred_check
    _
  $region15: #{segmentation_module_forward.1} parent=0 // pred_check_branch
    %26 = sbr.rel (0) target = $region17
  $region16: #{segmentation_module_forward.1} parent=0 // pred_region
    _
  $region17: #{segmentation_module_forward.1} parent=0 // pred_fallthru
    _
  // Predicated region
  $region18: #{segmentation_module_forward.1} parent=0 // pred_check
    _
  $region19: #{segmentation_module_forward.1} parent=0 // pred_check_branch
    %28 = sbr.rel (0) target = $region21
  $region20: #{segmentation_module_forward.1} parent=0 // pred_region
    _
  $region21: #{segmentation_module_forward.1} parent=0 // pred_fallthru
    _
  // Predicated region
  $region22: #{segmentation_module_forward.1} parent=0 // pred_check
    _
  $region23: #{segmentation_module_forward.1} parent=0 // pred_check_branch
    %30 = sbr.rel (0) target = $region25
  $region24: #{segmentation_module_forward.1} parent=0 // pred_region
    %s31 = sadd.s32 0, 0
    %s32 = smul.u32 64, %s31
    %p33 = scmp.lt.s32.totalorder %s32, 63
    %s34 = scalar_select %p33, %s32, 63
    %s35 = smul.addr %s34, 8
    %s36 = scalar_lea.vmem %s5, %s35
    %s37 = sadd.s32 0, 0
    %s38 = smul.u32 64, %s37
  $region25: #{segmentation_module_forward.1} parent=0 // pred_fallthru
    _
  %s39 = sadd.s32 0, 0
  %s40 = smul.u32 64, %s39
  %p41 = scmp.lt.s32.totalorder %s40, 63
  %s42 = scalar_select %p41, %s40, 63
  %s43 = smul.addr %s42, 4
  %s44 = scalar_lea.vmem %s0, %s43
  %s45 = sadd.s32 0, 0
  %s46 = smul.u32 64, %s45
  %p47 = scmp.lt.s32.totalorder %s46, 63
  %s48 = scalar_select %p47, %s46, 63
  %s49 = smul.addr %s48, 8
  %s50 = scalar_lea.vmem %s5, %s49
  %s51 = sadd.s32 0, 0
  %s52 = smul.u32 64, %s51
  %p53 = scmp.lt.s32.totalorder %s52, 63
  %s54 = scalar_select %p53, %s52, 63
  %s55 = smul.addr %s54, 4
  %s56 = scalar_lea.vmem %s0, %s55
  %s57 = sadd.s32 0, 0
  %s58 = smul.u32 64, %s57
  %s59 = sadd.s32 0, 0
  %s60 = smul.u32 64, %s59
  %p61 = scmp.lt.s32.totalorder %s60, 63
  %s62 = scalar_select %p61, %s60, 63
  %s63 = smul.addr %s62, 8
  %s64 = scalar_lea.vmem %s5, %s63
  %s65 = sadd.s32 0, 0
  %s66 = smul.u32 64, %s65
  %p68 = scmp.eq.s32.totalorder 0, 0
  // Predicated region
  $region26: #{segmentation_module_forward.1} parent=0 // pred_check
    %p69 = pneg %p68
  $region27: #{segmentation_module_forward.1} parent=0 // pred_check_branch
    %71 = sbr.rel (%p69) target = $region29
  $region28: #{segmentation_module_forward.1} parent=0 // pred_region
    %vm72 = vcmask 0
    %73 = vst.msk [vmem:[#allocation2] sm:$0x1] %vm72, 0.0
    %74 = vst.msk [vmem:[#allocation3] sm:$0x1] %vm72, 0.0
    %75 = vst.msk [vmem:[#allocation4] sm:$0x1] %vm72, 0.0
  $region29: #{segmentation_module_forward.1} parent=0 // pred_fallthru
    _
  %v76 = vld [vmem:[%s56] sm:$0xf]
  %v77 = vld [vmem:[%s56 + $0x4] sm:$0xf]
  %v78 = vld [vmem:[%s56 + $0x8] sm:$0xf]
  %v79 = vld [vmem:[%s56 + $0xc] sm:$0xf]
  %v80 = vld [vmem:[%s56 + $0x10] sm:$0xf]
  %v81 = vld [vmem:[%s56 + $0x14] sm:$0xf]
  %v82 = vld [vmem:[%s56 + $0x18] sm:$0xf]
  %v83 = vld [vmem:[%s56 + $0x1c] sm:$0xf]
  %v84 = vld [vmem:[%s56 + $0x20] sm:$0xf]
  %v85 = vld [vmem:[%s56 + $0x24] sm:$0xf]
  %v86 = vld [vmem:[%s56 + $0x28] sm:$0xf]
  %v87 = vld [vmem:[%s56 + $0x2c] sm:$0xf]
  %v88 = vld [vmem:[%s56 + $0x30] sm:$0xf]
  %v89 = vld [vmem:[%s56 + $0x34] sm:$0xf]
  %v90 = vld [vmem:[%s56 + $0x38] sm:$0xf]
  %v91 = vld [vmem:[%s56 + $0x3c] sm:$0xf]
  %v92 = vld [vmem:[%s56 + $0x40] sm:$0xf]
  %v93 = vld [vmem:[%s56 + $0x44] sm:$0xf]
  %v94 = vld [vmem:[%s56 + $0x48] sm:$0xf]
  %v95 = vld [vmem:[%s56 + $0x4c] sm:$0xf]
  %v96 = vld [vmem:[%s56 + $0x50] sm:$0xf]
  %v97 = vld [vmem:[%s56 + $0x54] sm:$0xf]
  %v98 = vld [vmem:[%s56 + $0x58] sm:$0xf]
  %v99 = vld [vmem:[%s56 + $0x5c] sm:$0xf]
  %v100 = vld [vmem:[%s56 + $0x60] sm:$0xf]
  %v101 = vld [vmem:[%s56 + $0x64] sm:$0xf]
  %v102 = vld [vmem:[%s56 + $0x68] sm:$0xf]
  %v103 = vld [vmem:[%s56 + $0x6c] sm:$0xf]
  %v104 = vld [vmem:[%s56 + $0x70] sm:$0xf]
  %v105 = vld [vmem:[%s56 + $0x74] sm:$0xf]
  %v106 = vld [vmem:[%s56 + $0x78] sm:$0xf]
  %v107 = vld [vmem:[%s56 + $0x7c] sm:$0xf]
  %v108 = vld [vmem:[%s56 + $0x80] sm:$0xf]
  %v109 = vld [vmem:[%s56 + $0x84] sm:$0xf]
  %v110 = vld [vmem:[%s56 + $0x88] sm:$0xf]
  %v111 = vld [vmem:[%s56 + $0x8c] sm:$0xf]
  %v112 = vld [vmem:[%s56 + $0x90] sm:$0xf]
  %v113 = vld [vmem:[%s56 + $0x94] sm:$0xf]
  %v114 = vld [vmem:[%s56 + $0x98] sm:$0xf]
  %v115 = vld [vmem:[%s56 + $0x9c] sm:$0xf]
  %v116 = vld [vmem:[%s56 + $0xa0] sm:$0xf]
  %v117 = vld [vmem:[%s56 + $0xa4] sm:$0xf]
  %v118 = vld [vmem:[%s56 + $0xa8] sm:$0xf]
  %v119 = vld [vmem:[%s56 + $0xac] sm:$0xf]
  %v120 = vld [vmem:[%s56 + $0xb0] sm:$0xf]
  %v121 = vld [vmem:[%s56 + $0xb4] sm:$0xf]
  %v122 = vld [vmem:[%s56 + $0xb8] sm:$0xf]
  %v123 = vld [vmem:[%s56 + $0xbc] sm:$0xf]
  %v124 = vld [vmem:[%s56 + $0xc0] sm:$0xf]
  %v125 = vld [vmem:[%s56 + $0xc4] sm:$0xf]
  %v126 = vld [vmem:[%s56 + $0xc8] sm:$0xf]
  %v127 = vld [vmem:[%s56 + $0xcc] sm:$0xf]
  %v128 = vld [vmem:[%s56 + $0xd0] sm:$0xf]
  %v129 = vld [vmem:[%s56 + $0xd4] sm:$0xf]
  %v130 = vld [vmem:[%s56 + $0xd8] sm:$0xf]
  %v131 = vld [vmem:[%s56 + $0xdc] sm:$0xf]
  %v132 = vld [vmem:[%s56 + $0xe0] sm:$0xf]
  %v133 = vld [vmem:[%s56 + $0xe4] sm:$0xf]
  %v134 = vld [vmem:[%s56 + $0xe8] sm:$0xf]
  %v135 = vld [vmem:[%s56 + $0xec] sm:$0xf]
  %v136 = vld [vmem:[%s56 + $0xf0] sm:$0xf]
  %v137 = vld [vmem:[%s56 + $0xf4] sm:$0xf]
  %v138 = vld [vmem:[%s56 + $0xf8] sm:$0xf]
  %v139 = vld [vmem:[%s56 + $0xfc] sm:$0xf]
  %v140 = vld [vmem:[%s1] sm:$0xf]
  %v141 = vld [vmem:[%s1 + $0x4] sm:$0xf]
  %v142 = vld [vmem:[%s1 + $0x8] sm:$0xf]
  %v143 = vld [vmem:[%s1 + $0xc] sm:$0xf]
  %v144 = vld [vmem:[%s1 + $0x10] sm:$0xf]
  %v145 = vld [vmem:[%s1 + $0x14] sm:$0xf]
  %v146 = vld [vmem:[%s2] sm:$0x1]
  %v148 = vlaneseq
  %v149 = vshrl.u32 %v148, 7
  %v150 = vsub.s32 0, %v149
  %v151 = vrot.slane %v146, %v150
  %v217 = vunpack.c.l.b16 %v76
  %v218 = vunpack.c.l.b16 %v77
  %v219 = vunpack.c.l.b16 %v78
  %v220 = vunpack.c.l.b16 %v79
  %v221 = vunpack.c.l.b16 %v80
  %v222 = vunpack.c.l.b16 %v81
  %v223 = vunpack.c.l.b16 %v82
  %v224 = vunpack.c.l.b16 %v83
  %v225 = vunpack.c.l.b16 %v84
  %v226 = vunpack.c.l.b16 %v85
  %v227 = vunpack.c.l.b16 %v86
  %v228 = vunpack.c.l.b16 %v87
  %v229 = vunpack.c.l.b16 %v88
  %v230 = vunpack.c.l.b16 %v89
  %v231 = vunpack.c.l.b16 %v90
  %v232 = vunpack.c.l.b16 %v91
  %v233 = vunpack.c.l.b16 %v92
  %v234 = vunpack.c.l.b16 %v93
  %v235 = vunpack.c.l.b16 %v94
  %v236 = vunpack.c.l.b16 %v95
  %v237 = vunpack.c.l.b16 %v96
  %v238 = vunpack.c.l.b16 %v97
  %v239 = vunpack.c.l.b16 %v98
  %v240 = vunpack.c.l.b16 %v99
  %v241 = vunpack.c.l.b16 %v100
  %v242 = vunpack.c.l.b16 %v101
  %v243 = vunpack.c.l.b16 %v102
  %v244 = vunpack.c.l.b16 %v103
  %v245 = vunpack.c.l.b16 %v104
  %v246 = vunpack.c.l.b16 %v105
  %v247 = vunpack.c.l.b16 %v106
  %v248 = vunpack.c.l.b16 %v107
  %v249 = vunpack.c.l.b16 %v108
  %v250 = vunpack.c.l.b16 %v109
  %v251 = vunpack.c.l.b16 %v110
  %v252 = vunpack.c.l.b16 %v111
  %v253 = vunpack.c.l.b16 %v112
  %v254 = vunpack.c.l.b16 %v113
  %v255 = vunpack.c.l.b16 %v114
  %v256 = vunpack.c.l.b16 %v115
  %v257 = vunpack.c.l.b16 %v116
  %v258 = vunpack.c.l.b16 %v117
  %v259 = vunpack.c.l.b16 %v118
  %v260 = vunpack.c.l.b16 %v119
  %v261 = vunpack.c.l.b16 %v120
  %v262 = vunpack.c.l.b16 %v121
  %v263 = vunpack.c.l.b16 %v122
  %v264 = vunpack.c.l.b16 %v123
  %v265 = vunpack.c.l.b16 %v124
  %v266 = vunpack.c.l.b16 %v125
  %v267 = vunpack.c.l.b16 %v126
  %v268 = vunpack.c.l.b16 %v127
  %v269 = vunpack.c.l.b16 %v128
  %v270 = vunpack.c.l.b16 %v129
  %v271 = vunpack.c.l.b16 %v130
  %v272 = vunpack.c.l.b16 %v131
  %v273 = vunpack.c.l.b16 %v132
  %v274 = vunpack.c.l.b16 %v133
  %v275 = vunpack.c.l.b16 %v134
  %v276 = vunpack.c.l.b16 %v135
  %v277 = vunpack.c.l.b16 %v136
  %v278 = vunpack.c.l.b16 %v137
  %v279 = vunpack.c.l.b16 %v138
  %v280 = vunpack.c.l.b16 %v139
  %v281 = vpack.c.b16 %v218, %v217
  %v282 = vpack.c.b16 %v220, %v219
  %v283 = vpack.c.b16 %v222, %v221
  %v284 = vpack.c.b16 %v224, %v223
  %v285 = vpack.c.b16 %v226, %v225
  %v286 = vpack.c.b16 %v228, %v227
  %v287 = vpack.c.b16 %v230, %v229
  %v288 = vpack.c.b16 %v232, %v231
  %v289 = vpack.c.b16 %v234, %v233
  %v290 = vpack.c.b16 %v236, %v235
  %v291 = vpack.c.b16 %v238, %v237
  %v292 = vpack.c.b16 %v240, %v239
  %v293 = vpack.c.b16 %v242, %v241
  %v294 = vpack.c.b16 %v244, %v243
  %v295 = vpack.c.b16 %v246, %v245
  %v296 = vpack.c.b16 %v248, %v247
  %v297 = vpack.c.b16 %v250, %v249
  %v298 = vpack.c.b16 %v252, %v251
  %v299 = vpack.c.b16 %v254, %v253
  %v300 = vpack.c.b16 %v256, %v255
  %v301 = vpack.c.b16 %v258, %v257
  %v302 = vpack.c.b16 %v260, %v259
  %v303 = vpack.c.b16 %v262, %v261
  %v304 = vpack.c.b16 %v264, %v263
  %v305 = vpack.c.b16 %v266, %v265
  %v306 = vpack.c.b16 %v268, %v267
  %v307 = vpack.c.b16 %v270, %v269
  %v308 = vpack.c.b16 %v272, %v271
  %v309 = vpack.c.b16 %v274, %v273
  %v310 = vpack.c.b16 %v276, %v275
  %v311 = vpack.c.b16 %v278, %v277
  %v312 = vpack.c.b16 %v280, %v279
  %v319 = vunpack.c.l.b16 %v140
  %v320 = vunpack.c.l.b16 %v141
  %v321 = vunpack.c.l.b16 %v142
  %v322 = vunpack.c.l.b16 %v143
  %v323 = vunpack.c.l.b16 %v144
  %v324 = vunpack.c.l.b16 %v145
  %v325 = vpack.c.b16 %v320, %v319
  %v326 = vpack.c.b16 %v322, %v321
  %v327 = vpack.c.b16 %v324, %v323
  %vm331 = vcmask 392192
  %v333 = vsel %vm331, %v281, 0
  %v336 = vsel %vm331, %v282, 0
  %v339 = vsel %vm331, %v283, 0
  %v342 = vsel %vm331, %v284, 0
  %v345 = vsel %vm331, %v285, 0
  %v348 = vsel %vm331, %v286, 0
  %v351 = vsel %vm331, %v287, 0
  %v354 = vsel %vm331, %v288, 0
  %v357 = vsel %vm331, %v289, 0
  %v360 = vsel %vm331, %v290, 0
  %v363 = vsel %vm331, %v291, 0
  %v366 = vsel %vm331, %v292, 0
  %v369 = vsel %vm331, %v293, 0
  %v372 = vsel %vm331, %v294, 0
  %v375 = vsel %vm331, %v295, 0
  %v378 = vsel %vm331, %v296, 0
  %v381 = vsel %vm331, %v297, 0
  %v384 = vsel %vm331, %v298, 0
  %v387 = vsel %vm331, %v299, 0
  %v390 = vsel %vm331, %v300, 0
  %v393 = vsel %vm331, %v301, 0
  %v396 = vsel %vm331, %v302, 0
  %v399 = vsel %vm331, %v303, 0
  %v402 = vsel %vm331, %v304, 0
  %v405 = vsel %vm331, %v305, 0
  %v408 = vsel %vm331, %v306, 0
  %v411 = vsel %vm331, %v307, 0
  %v414 = vsel %vm331, %v308, 0
  %v417 = vsel %vm331, %v309, 0
  %v420 = vsel %vm331, %v310, 0
  %v423 = vsel %vm331, %v311, 0
  %v426 = vsel %vm331, %v312, 0
  %428 = vmatprep.subr.bf16.mxu0 0
  %429 = vmatpush1.bf16.msra.mxu0 0
  %430 = vmatprep.subr.bf16.mxu0 0
  %431 = vmatpush1.bf16.msra.mxu0 0
  %432 = vmatprep.subr.bf16.mxu0 0
  %433 = vmatpush1.bf16.msra.mxu0 0
  %434 = vmatprep.subr.bf16.mxu0 0
  %435 = vmatpush1.bf16.msra.mxu0 0
  %436 = vmatprep.subr.bf16.mxu0 0
  %437 = vmatpush1.bf16.msra.mxu0 0
  %438 = vmatprep.subr.bf16.mxu0 0
  %439 = vmatpush1.bf16.msra.mxu0 %v327
  %440 = vmatprep.subr.bf16.mxu0 0
  %441 = vmatpush1.bf16.msra.mxu0 %v326
  %442 = vmatprep.subr.bf16.mxu0 0
  %443 = vmatpush1.bf16.msra.mxu0 %v325
  %444 = vmatprep.subr.bf16.mxu0 0
  %445 = vmatpush2.bf16.msra.mxu0 0
  %446 = vmatprep.subr.bf16.mxu0 0
  %447 = vmatpush2.bf16.msra.mxu0 0
  %448 = vmatprep.subr.bf16.mxu0 0
  %449 = vmatpush2.bf16.msra.mxu0 0
  %450 = vmatprep.subr.bf16.mxu0 0
  %451 = vmatpush2.bf16.msra.mxu0 0
  %452 = vmatprep.subr.bf16.mxu0 0
  %453 = vmatpush2.bf16.msra.mxu0 0
  %454 = vmatprep.subr.bf16.mxu0 0
  %455 = vmatpush2.bf16.msra.mxu0 0
  %456 = vmatprep.subr.bf16.mxu0 0
  %457 = vmatpush2.bf16.msra.mxu0 0
  %458 = vmatprep.subr.bf16.mxu0 0
  %459 = vmatpush2.bf16.msra.mxu0 0
  %460 = vmatprep.mubr.bf16.mxu0 0
  %461 = vmatmul.mubr.bf16.gmra.mxu0 %v333
  %v462 = vpop.f32.mrf.mxu0
  %v463 = vadd.f32 %v151, %v462
  %v464 = vpop.f32.mrf.mxu0
  %v465 = vpop.f32.mrf.mxu0
  %v466 = vadd.f32 %v151, %v465
  %v467 = vpop.f32.mrf.mxu0
  %468 = vmatprep.mubr.bf16.mxu0 0
  %469 = vmatmul.mubr.bf16.gmra.mxu0 %v336
  %v470 = vpop.f32.mrf.mxu0
  %v471 = vadd.f32 %v151, %v470
  %v472 = vpop.f32.mrf.mxu0
  %v473 = vpop.f32.mrf.mxu0
  %v474 = vadd.f32 %v151, %v473
  %v475 = vpop.f32.mrf.mxu0
  %476 = vmatprep.mubr.bf16.mxu0 0
  %477 = vmatmul.mubr.bf16.gmra.mxu0 %v339
  %v478 = vpop.f32.mrf.mxu0
  %v479 = vadd.f32 %v151, %v478
  %v480 = vpop.f32.mrf.mxu0
  %v481 = vpop.f32.mrf.mxu0
  %v482 = vadd.f32 %v151, %v481
  %v483 = vpop.f32.mrf.mxu0
  %484 = vmatprep.mubr.bf16.mxu0 0
  %485 = vmatmul.mubr.bf16.gmra.mxu0 %v342
  %v486 = vpop.f32.mrf.mxu0
  %v487 = vadd.f32 %v151, %v486
  %v488 = vpop.f32.mrf.mxu0
  %v489 = vpop.f32.mrf.mxu0
  %v490 = vadd.f32 %v151, %v489
  %v491 = vpop.f32.mrf.mxu0
  %492 = vmatprep.mubr.bf16.mxu0 0
  %493 = vmatmul.mubr.bf16.gmra.mxu0 %v345
  %v494 = vpop.f32.mrf.mxu0
  %v495 = vadd.f32 %v151, %v494
  %v496 = vpop.f32.mrf.mxu0
  %v497 = vpop.f32.mrf.mxu0
  %v498 = vadd.f32 %v151, %v497
  %v499 = vpop.f32.mrf.mxu0
  %500 = vmatprep.mubr.bf16.mxu0 0
  %501 = vmatmul.mubr.bf16.gmra.mxu0 %v348
  %v502 = vpop.f32.mrf.mxu0
  %v503 = vadd.f32 %v151, %v502
  %v504 = vpop.f32.mrf.mxu0
  %v505 = vpop.f32.mrf.mxu0
  %v506 = vadd.f32 %v151, %v505
  %v507 = vpop.f32.mrf.mxu0
  %508 = vmatprep.mubr.bf16.mxu0 0
  %509 = vmatmul.mubr.bf16.gmra.mxu0 %v351
  %v510 = vpop.f32.mrf.mxu0
  %v511 = vadd.f32 %v151, %v510
  %v512 = vpop.f32.mrf.mxu0
  %v513 = vpop.f32.mrf.mxu0
  %v514 = vadd.f32 %v151, %v513
  %v515 = vpop.f32.mrf.mxu0
  %516 = vmatprep.mubr.bf16.mxu0 0
  %517 = vmatmul.mubr.bf16.gmra.mxu0 %v354
  %v518 = vpop.f32.mrf.mxu0
  %v519 = vadd.f32 %v151, %v518
  %v520 = vpop.f32.mrf.mxu0
  %v521 = vpop.f32.mrf.mxu0
  %v522 = vadd.f32 %v151, %v521
  %v523 = vpop.f32.mrf.mxu0
  %524 = vmatprep.mubr.bf16.mxu0 0
  %525 = vmatmul.mubr.bf16.gmra.mxu0 %v357
  %v526 = vpop.f32.mrf.mxu0
  %v527 = vadd.f32 %v151, %v526
  %v528 = vpop.f32.mrf.mxu0
  %v529 = vpop.f32.mrf.mxu0
  %v530 = vadd.f32 %v151, %v529
  %v531 = vpop.f32.mrf.mxu0
  %532 = vmatprep.mubr.bf16.mxu0 0
  %533 = vmatmul.mubr.bf16.gmra.mxu0 %v360
  %v534 = vpop.f32.mrf.mxu0
  %v535 = vadd.f32 %v151, %v534
  %v536 = vpop.f32.mrf.mxu0
  %v537 = vpop.f32.mrf.mxu0
  %v538 = vadd.f32 %v151, %v537
  %v539 = vpop.f32.mrf.mxu0
  %540 = vmatprep.mubr.bf16.mxu0 0
  %541 = vmatmul.mubr.bf16.gmra.mxu0 %v363
  %v542 = vpop.f32.mrf.mxu0
  %v543 = vadd.f32 %v151, %v542
  %v544 = vpop.f32.mrf.mxu0
  %v545 = vpop.f32.mrf.mxu0
  %v546 = vadd.f32 %v151, %v545
  %v547 = vpop.f32.mrf.mxu0
  %548 = vmatprep.mubr.bf16.mxu0 0
  %549 = vmatmul.mubr.bf16.gmra.mxu0 %v366
  %v550 = vpop.f32.mrf.mxu0
  %v551 = vadd.f32 %v151, %v550
  %v552 = vpop.f32.mrf.mxu0
  %v553 = vpop.f32.mrf.mxu0
  %v554 = vadd.f32 %v151, %v553
  %v555 = vpop.f32.mrf.mxu0
  %556 = vmatprep.mubr.bf16.mxu0 0
  %557 = vmatmul.mubr.bf16.gmra.mxu0 %v369
  %v558 = vpop.f32.mrf.mxu0
  %v559 = vadd.f32 %v151, %v558
  %v560 = vpop.f32.mrf.mxu0
  %v561 = vpop.f32.mrf.mxu0
  %v562 = vadd.f32 %v151, %v561
  %v563 = vpop.f32.mrf.mxu0
  %564 = vmatprep.mubr.bf16.mxu0 0
  %565 = vmatmul.mubr.bf16.gmra.mxu0 %v372
  %v566 = vpop.f32.mrf.mxu0
  %v567 = vadd.f32 %v151, %v566
  %v568 = vpop.f32.mrf.mxu0
  %v569 = vpop.f32.mrf.mxu0
  %v570 = vadd.f32 %v151, %v569
  %v571 = vpop.f32.mrf.mxu0
  %572 = vmatprep.mubr.bf16.mxu0 0
  %573 = vmatmul.mubr.bf16.gmra.mxu0 %v375
  %v574 = vpop.f32.mrf.mxu0
  %v575 = vadd.f32 %v151, %v574
  %v576 = vpop.f32.mrf.mxu0
  %v577 = vpop.f32.mrf.mxu0
  %v578 = vadd.f32 %v151, %v577
  %v579 = vpop.f32.mrf.mxu0
  %580 = vmatprep.mubr.bf16.mxu0 0
  %581 = vmatmul.mubr.bf16.gmra.mxu0 %v378
  %v582 = vpop.f32.mrf.mxu0
  %v583 = vadd.f32 %v151, %v582
  %v584 = vpop.f32.mrf.mxu0
  %v585 = vpop.f32.mrf.mxu0
  %v586 = vadd.f32 %v151, %v585
  %v587 = vpop.f32.mrf.mxu0
  %588 = vmatprep.mubr.bf16.mxu0 0
  %589 = vmatmul.mubr.bf16.gmra.mxu0 %v381
  %v590 = vpop.f32.mrf.mxu0
  %v591 = vadd.f32 %v151, %v590
  %v592 = vpop.f32.mrf.mxu0
  %v593 = vpop.f32.mrf.mxu0
  %v594 = vadd.f32 %v151, %v593
  %v595 = vpop.f32.mrf.mxu0
  %596 = vmatprep.mubr.bf16.mxu0 0
  %597 = vmatmul.mubr.bf16.gmra.mxu0 %v384
  %v598 = vpop.f32.mrf.mxu0
  %v599 = vadd.f32 %v151, %v598
  %v600 = vpop.f32.mrf.mxu0
  %v601 = vpop.f32.mrf.mxu0
  %v602 = vadd.f32 %v151, %v601
  %v603 = vpop.f32.mrf.mxu0
  %604 = vmatprep.mubr.bf16.mxu0 0
  %605 = vmatmul.mubr.bf16.gmra.mxu0 %v387
  %v606 = vpop.f32.mrf.mxu0
  %v607 = vadd.f32 %v151, %v606
  %v608 = vpop.f32.mrf.mxu0
  %v609 = vpop.f32.mrf.mxu0
  %v610 = vadd.f32 %v151, %v609
  %v611 = vpop.f32.mrf.mxu0
  %612 = vmatprep.mubr.bf16.mxu0 0
  %613 = vmatmul.mubr.bf16.gmra.mxu0 %v390
  %v614 = vpop.f32.mrf.mxu0
  %v615 = vadd.f32 %v151, %v614
  %v616 = vpop.f32.mrf.mxu0
  %v617 = vpop.f32.mrf.mxu0
  %v618 = vadd.f32 %v151, %v617
  %v619 = vpop.f32.mrf.mxu0
  %620 = vmatprep.mubr.bf16.mxu0 0
  %621 = vmatmul.mubr.bf16.gmra.mxu0 %v393
  %v622 = vpop.f32.mrf.mxu0
  %v623 = vadd.f32 %v151, %v622
  %v624 = vpop.f32.mrf.mxu0
  %v625 = vpop.f32.mrf.mxu0
  %v626 = vadd.f32 %v151, %v625
  %v627 = vpop.f32.mrf.mxu0
  %628 = vmatprep.mubr.bf16.mxu0 0
  %629 = vmatmul.mubr.bf16.gmra.mxu0 %v396
  %v630 = vpop.f32.mrf.mxu0
  %v631 = vadd.f32 %v151, %v630
  %v632 = vpop.f32.mrf.mxu0
  %v633 = vpop.f32.mrf.mxu0
  %v634 = vadd.f32 %v151, %v633
  %v635 = vpop.f32.mrf.mxu0
  %636 = vmatprep.mubr.bf16.mxu0 0
  %637 = vmatmul.mubr.bf16.gmra.mxu0 %v399
  %v638 = vpop.f32.mrf.mxu0
  %v639 = vadd.f32 %v151, %v638
  %v640 = vpop.f32.mrf.mxu0
  %v641 = vpop.f32.mrf.mxu0
  %v642 = vadd.f32 %v151, %v641
  %v643 = vpop.f32.mrf.mxu0
  %644 = vmatprep.mubr.bf16.mxu0 0
  %645 = vmatmul.mubr.bf16.gmra.mxu0 %v402
  %v646 = vpop.f32.mrf.mxu0
  %v647 = vadd.f32 %v151, %v646
  %v648 = vpop.f32.mrf.mxu0
  %v649 = vpop.f32.mrf.mxu0
  %v650 = vadd.f32 %v151, %v649
  %v651 = vpop.f32.mrf.mxu0
  %652 = vmatprep.mubr.bf16.mxu0 0
  %653 = vmatmul.mubr.bf16.gmra.mxu0 %v405
  %v654 = vpop.f32.mrf.mxu0
  %v655 = vadd.f32 %v151, %v654
  %v656 = vpop.f32.mrf.mxu0
  %v657 = vpop.f32.mrf.mxu0
  %v658 = vadd.f32 %v151, %v657
  %v659 = vpop.f32.mrf.mxu0
  %660 = vmatprep.mubr.bf16.mxu0 0
  %661 = vmatmul.mubr.bf16.gmra.mxu0 %v408
  %v662 = vpop.f32.mrf.mxu0
  %v663 = vadd.f32 %v151, %v662
  %v664 = vpop.f32.mrf.mxu0
  %v665 = vpop.f32.mrf.mxu0
  %v666 = vadd.f32 %v151, %v665
  %v667 = vpop.f32.mrf.mxu0
  %668 = vmatprep.mubr.bf16.mxu0 0
  %669 = vmatmul.mubr.bf16.gmra.mxu0 %v411
  %v670 = vpop.f32.mrf.mxu0
  %v671 = vadd.f32 %v151, %v670
  %v672 = vpop.f32.mrf.mxu0
  %v673 = vpop.f32.mrf.mxu0
  %v674 = vadd.f32 %v151, %v673
  %v675 = vpop.f32.mrf.mxu0
  %676 = vmatprep.mubr.bf16.mxu0 0
  %677 = vmatmul.mubr.bf16.gmra.mxu0 %v414
  %v678 = vpop.f32.mrf.mxu0
  %v679 = vadd.f32 %v151, %v678
  %v680 = vpop.f32.mrf.mxu0
  %v681 = vpop.f32.mrf.mxu0
  %v682 = vadd.f32 %v151, %v681
  %v683 = vpop.f32.mrf.mxu0
  %684 = vmatprep.mubr.bf16.mxu0 0
  %685 = vmatmul.mubr.bf16.gmra.mxu0 %v417
  %v686 = vpop.f32.mrf.mxu0
  %v687 = vadd.f32 %v151, %v686
  %v688 = vpop.f32.mrf.mxu0
  %v689 = vpop.f32.mrf.mxu0
  %v690 = vadd.f32 %v151, %v689
  %v691 = vpop.f32.mrf.mxu0
  %692 = vmatprep.mubr.bf16.mxu0 0
  %693 = vmatmul.mubr.bf16.gmra.mxu0 %v420
  %v694 = vpop.f32.mrf.mxu0
  %v695 = vadd.f32 %v151, %v694
  %v696 = vpop.f32.mrf.mxu0
  %v697 = vpop.f32.mrf.mxu0
  %v698 = vadd.f32 %v151, %v697
  %v699 = vpop.f32.mrf.mxu0
  %700 = vmatprep.mubr.bf16.mxu0 0
  %701 = vmatmul.mubr.bf16.gmra.mxu0 %v423
  %v702 = vpop.f32.mrf.mxu0
  %v703 = vadd.f32 %v151, %v702
  %v704 = vpop.f32.mrf.mxu0
  %v705 = vpop.f32.mrf.mxu0
  %v706 = vadd.f32 %v151, %v705
  %v707 = vpop.f32.mrf.mxu0
  %708 = vmatprep.mubr.bf16.mxu0 0
  %709 = vmatmul.mubr.bf16.gmra.mxu0 %v426
  %v710 = vpop.f32.mrf.mxu0
  %v711 = vadd.f32 %v151, %v710
  %v712 = vpop.f32.mrf.mxu0
  %v713 = vpop.f32.mrf.mxu0
  %v714 = vadd.f32 %v151, %v713
  %v715 = vpop.f32.mrf.mxu0
  %716 = vdwg.mxu0
  %v717 = vmax.f32 %v463, 0.0
  %v718 = vmax.f32 %v466, 0.0
  %v719 = vmax.f32 %v471, 0.0
  %v720 = vmax.f32 %v474, 0.0
  %v721 = vmax.f32 %v479, 0.0
  %v722 = vmax.f32 %v482, 0.0
  %v723 = vmax.f32 %v487, 0.0
  %v724 = vmax.f32 %v490, 0.0
  %v725 = vmax.f32 %v495, 0.0
  %v726 = vmax.f32 %v498, 0.0
  %v727 = vmax.f32 %v503, 0.0
  %v728 = vmax.f32 %v506, 0.0
  %v729 = vmax.f32 %v511, 0.0
  %v730 = vmax.f32 %v514, 0.0
  %v731 = vmax.f32 %v519, 0.0
  %v732 = vmax.f32 %v522, 0.0
  %v733 = vmax.f32 %v527, 0.0
  %v734 = vmax.f32 %v530, 0.0
  %v735 = vmax.f32 %v535, 0.0
  %v736 = vmax.f32 %v538, 0.0
  %v737 = vmax.f32 %v543, 0.0
  %v738 = vmax.f32 %v546, 0.0
  %v739 = vmax.f32 %v551, 0.0
  %v740 = vmax.f32 %v554, 0.0
  %v741 = vmax.f32 %v559, 0.0
  %v742 = vmax.f32 %v562, 0.0
  %v743 = vmax.f32 %v567, 0.0
  %v744 = vmax.f32 %v570, 0.0
  %v745 = vmax.f32 %v575, 0.0
  %v746 = vmax.f32 %v578, 0.0
  %v747 = vmax.f32 %v583, 0.0
  %v748 = vmax.f32 %v586, 0.0
  %v749 = vmax.f32 %v591, 0.0
  %v750 = vmax.f32 %v594, 0.0
  %v751 = vmax.f32 %v599, 0.0
  %v752 = vmax.f32 %v602, 0.0
  %v753 = vmax.f32 %v607, 0.0
  %v754 = vmax.f32 %v610, 0.0
  %v755 = vmax.f32 %v615, 0.0
  %v756 = vmax.f32 %v618, 0.0
  %v757 = vmax.f32 %v623, 0.0
  %v758 = vmax.f32 %v626, 0.0
  %v759 = vmax.f32 %v631, 0.0
  %v760 = vmax.f32 %v634, 0.0
  %v761 = vmax.f32 %v639, 0.0
  %v762 = vmax.f32 %v642, 0.0
  %v763 = vmax.f32 %v647, 0.0
  %v764 = vmax.f32 %v650, 0.0
  %v765 = vmax.f32 %v655, 0.0
  %v766 = vmax.f32 %v658, 0.0
  %v767 = vmax.f32 %v663, 0.0
  %v768 = vmax.f32 %v666, 0.0
  %v769 = vmax.f32 %v671, 0.0
  %v770 = vmax.f32 %v674, 0.0
  %v771 = vmax.f32 %v679, 0.0
  %v772 = vmax.f32 %v682, 0.0
  %v773 = vmax.f32 %v687, 0.0
  %v774 = vmax.f32 %v690, 0.0
  %v775 = vmax.f32 %v695, 0.0
  %v776 = vmax.f32 %v698, 0.0
  %v777 = vmax.f32 %v703, 0.0
  %v778 = vmax.f32 %v706, 0.0
  %v779 = vmax.f32 %v711, 0.0
  %v780 = vmax.f32 %v714, 0.0
  %v781 = vpack.c.bf16 %v718, %v717
  %v782 = vpack.c.bf16 %v720, %v719
  %v783 = vpack.c.bf16 %v722, %v721
  %v784 = vpack.c.bf16 %v724, %v723
  %v785 = vpack.c.bf16 %v726, %v725
  %v786 = vpack.c.bf16 %v728, %v727
  %v787 = vpack.c.bf16 %v730, %v729
  %v788 = vpack.c.bf16 %v732, %v731
  %v789 = vpack.c.bf16 %v734, %v733
  %v790 = vpack.c.bf16 %v736, %v735
  %v791 = vpack.c.bf16 %v738, %v737
  %v792 = vpack.c.bf16 %v740, %v739
  %v793 = vpack.c.bf16 %v742, %v741
  %v794 = vpack.c.bf16 %v744, %v743
  %v795 = vpack.c.bf16 %v746, %v745
  %v796 = vpack.c.bf16 %v748, %v747
  %v797 = vpack.c.bf16 %v750, %v749
  %v798 = vpack.c.bf16 %v752, %v751
  %v799 = vpack.c.bf16 %v754, %v753
  %v800 = vpack.c.bf16 %v756, %v755
  %v801 = vpack.c.bf16 %v758, %v757
  %v802 = vpack.c.bf16 %v760, %v759
  %v803 = vpack.c.bf16 %v762, %v761
  %v804 = vpack.c.bf16 %v764, %v763
  %v805 = vpack.c.bf16 %v766, %v765
  %v806 = vpack.c.bf16 %v768, %v767
  %v807 = vpack.c.bf16 %v770, %v769
  %v808 = vpack.c.bf16 %v772, %v771
  %v809 = vpack.c.bf16 %v774, %v773
  %v810 = vpack.c.bf16 %v776, %v775
  %v811 = vpack.c.bf16 %v778, %v777
  %v812 = vpack.c.bf16 %v780, %v779
  %v813 = vld [vmem:[%s3] sm:$0xf]
  %v814 = vld [vmem:[%s3 + $0x4] sm:$0xf]
  %v815 = vld [vmem:[%s3 + $0x8] sm:$0xf]
  %v816 = vld [vmem:[%s3 + $0xc] sm:$0xf]
  %v817 = vld [vmem:[%s3 + $0x10] sm:$0xf]
  %v818 = vld [vmem:[%s3 + $0x14] sm:$0xf]
  %v819 = vld [vmem:[%s3 + $0x18] sm:$0xf]
  %v820 = vld [vmem:[%s3 + $0x1c] sm:$0xf]
  %v821 = vld [vmem:[%s3 + $0x20] sm:$0xf]
  %v822 = vld [vmem:[%s3 + $0x24] sm:$0xf]
  %v823 = vld [vmem:[%s3 + $0x28] sm:$0xf]
  %v824 = vld [vmem:[%s3 + $0x2c] sm:$0xf]
  %v825 = vld [vmem:[%s3 + $0x30] sm:$0xf]
  %v826 = vld [vmem:[%s3 + $0x34] sm:$0xf]
  %v827 = vld [vmem:[%s3 + $0x38] sm:$0xf]
  %v828 = vld [vmem:[%s3 + $0x3c] sm:$0xf]
  %v829 = vld [vmem:[%s4] sm:$0x1]
  %v831 = vlaneseq
  %v832 = vshrl.u32 %v831, 7
  %v833 = vsub.s32 0, %v832
  %v834 = vrot.slane %v829, %v833
  %v852 = vunpack.c.l.b16 %v813
  %v853 = vunpack.c.l.b16 %v814
  %v854 = vunpack.c.l.b16 %v815
  %v855 = vunpack.c.l.b16 %v816
  %v856 = vunpack.c.l.b16 %v817
  %v857 = vunpack.c.l.b16 %v818
  %v858 = vunpack.c.l.b16 %v819
  %v859 = vunpack.c.l.b16 %v820
  %v860 = vunpack.c.l.b16 %v821
  %v861 = vunpack.c.l.b16 %v822
  %v862 = vunpack.c.l.b16 %v823
  %v863 = vunpack.c.l.b16 %v824
  %v864 = vunpack.c.l.b16 %v825
  %v865 = vunpack.c.l.b16 %v826
  %v866 = vunpack.c.l.b16 %v827
  %v867 = vunpack.c.l.b16 %v828
  %v868 = vpack.c.b16 %v853, %v852
  %v869 = vpack.c.b16 %v855, %v854
  %v870 = vpack.c.b16 %v857, %v856
  %v871 = vpack.c.b16 %v859, %v858
  %v872 = vpack.c.b16 %v861, %v860
  %v873 = vpack.c.b16 %v863, %v862
  %v874 = vpack.c.b16 %v865, %v864
  %v875 = vpack.c.b16 %v867, %v866
  %884 = vmatprep.subr.bf16.mxu0 0
  %885 = vmatpush1.bf16.msra.mxu0 %v875
  %886 = vmatprep.subr.bf16.mxu0 0
  %887 = vmatpush1.bf16.msra.mxu0 %v874
  %888 = vmatprep.subr.bf16.mxu0 0
  %889 = vmatpush1.bf16.msra.mxu0 %v873
  %890 = vmatprep.subr.bf16.mxu0 0
  %891 = vmatpush1.bf16.msra.mxu0 %v872
  %892 = vmatprep.subr.bf16.mxu0 0
  %893 = vmatpush1.bf16.msra.mxu0 %v871
  %894 = vmatprep.subr.bf16.mxu0 0
  %895 = vmatpush1.bf16.msra.mxu0 %v870
  %896 = vmatprep.subr.bf16.mxu0 0
  %897 = vmatpush1.bf16.msra.mxu0 %v869
  %898 = vmatprep.subr.bf16.mxu0 0
  %899 = vmatpush1.bf16.msra.mxu0 %v868
  %900 = vmatprep.subr.bf16.mxu0 0
  %901 = vmatpush2.bf16.msra.mxu0 0
  %902 = vmatprep.subr.bf16.mxu0 0
  %903 = vmatpush2.bf16.msra.mxu0 0
  %904 = vmatprep.subr.bf16.mxu0 0
  %905 = vmatpush2.bf16.msra.mxu0 0
  %906 = vmatprep.subr.bf16.mxu0 0
  %907 = vmatpush2.bf16.msra.mxu0 0
  %908 = vmatprep.subr.bf16.mxu0 0
  %909 = vmatpush2.bf16.msra.mxu0 0
  %910 = vmatprep.subr.bf16.mxu0 0
  %911 = vmatpush2.bf16.msra.mxu0 0
  %912 = vmatprep.subr.bf16.mxu0 0
  %913 = vmatpush2.bf16.msra.mxu0 0
  %914 = vmatprep.subr.bf16.mxu0 0
  %915 = vmatpush2.bf16.msra.mxu0 0
  %916 = vmatprep.mubr.bf16.mxu0 0
  %917 = vmatmul.mubr.bf16.gmra.mxu0 %v781
  %v918 = vpop.f32.mrf.mxu0
  %v919 = vadd.f32 %v834, %v918
  %v920 = vpop.f32.mrf.mxu0
  %v921 = vpop.f32.mrf.mxu0
  %v922 = vadd.f32 %v834, %v921
  %v923 = vpop.f32.mrf.mxu0
  %924 = vmatprep.mubr.bf16.mxu0 0
  %925 = vmatmul.mubr.bf16.gmra.mxu0 %v782
  %v926 = vpop.f32.mrf.mxu0
  %v927 = vadd.f32 %v834, %v926
  %v928 = vpop.f32.mrf.mxu0
  %v929 = vpop.f32.mrf.mxu0
  %v930 = vadd.f32 %v834, %v929
  %v931 = vpop.f32.mrf.mxu0
  %932 = vmatprep.mubr.bf16.mxu0 0
  %933 = vmatmul.mubr.bf16.gmra.mxu0 %v783
  %v934 = vpop.f32.mrf.mxu0
  %v935 = vadd.f32 %v834, %v934
  %v936 = vpop.f32.mrf.mxu0
  %v937 = vpop.f32.mrf.mxu0
  %v938 = vadd.f32 %v834, %v937
  %v939 = vpop.f32.mrf.mxu0
  %940 = vmatprep.mubr.bf16.mxu0 0
  %941 = vmatmul.mubr.bf16.gmra.mxu0 %v784
  %v942 = vpop.f32.mrf.mxu0
  %v943 = vadd.f32 %v834, %v942
  %v944 = vpop.f32.mrf.mxu0
  %v945 = vpop.f32.mrf.mxu0
  %v946 = vadd.f32 %v834, %v945
  %v947 = vpop.f32.mrf.mxu0
  %948 = vmatprep.mubr.bf16.mxu0 0
  %949 = vmatmul.mubr.bf16.gmra.mxu0 %v785
  %v950 = vpop.f32.mrf.mxu0
  %v951 = vadd.f32 %v834, %v950
  %v952 = vpop.f32.mrf.mxu0
  %v953 = vpop.f32.mrf.mxu0
  %v954 = vadd.f32 %v834, %v953
  %v955 = vpop.f32.mrf.mxu0
  %956 = vmatprep.mubr.bf16.mxu0 0
  %957 = vmatmul.mubr.bf16.gmra.mxu0 %v786
  %v958 = vpop.f32.mrf.mxu0
  %v959 = vadd.f32 %v834, %v958
  %v960 = vpop.f32.mrf.mxu0
  %v961 = vpop.f32.mrf.mxu0
  %v962 = vadd.f32 %v834, %v961
  %v963 = vpop.f32.mrf.mxu0
  %964 = vmatprep.mubr.bf16.mxu0 0
  %965 = vmatmul.mubr.bf16.gmra.mxu0 %v787
  %v966 = vpop.f32.mrf.mxu0
  %v967 = vadd.f32 %v834, %v966
  %v968 = vpop.f32.mrf.mxu0
  %v969 = vpop.f32.mrf.mxu0
  %v970 = vadd.f32 %v834, %v969
  %v971 = vpop.f32.mrf.mxu0
  %972 = vmatprep.mubr.bf16.mxu0 0
  %973 = vmatmul.mubr.bf16.gmra.mxu0 %v788
  %v974 = vpop.f32.mrf.mxu0
  %v975 = vadd.f32 %v834, %v974
  %v976 = vpop.f32.mrf.mxu0
  %v977 = vpop.f32.mrf.mxu0
  %v978 = vadd.f32 %v834, %v977
  %v979 = vpop.f32.mrf.mxu0
  %980 = vmatprep.mubr.bf16.mxu0 0
  %981 = vmatmul.mubr.bf16.gmra.mxu0 %v789
  %v982 = vpop.f32.mrf.mxu0
  %v983 = vadd.f32 %v834, %v982
  %v984 = vpop.f32.mrf.mxu0
  %v985 = vpop.f32.mrf.mxu0
  %v986 = vadd.f32 %v834, %v985
  %v987 = vpop.f32.mrf.mxu0
  %988 = vmatprep.mubr.bf16.mxu0 0
  %989 = vmatmul.mubr.bf16.gmra.mxu0 %v790
  %v990 = vpop.f32.mrf.mxu0
  %v991 = vadd.f32 %v834, %v990
  %v992 = vpop.f32.mrf.mxu0
  %v993 = vpop.f32.mrf.mxu0
  %v994 = vadd.f32 %v834, %v993
  %v995 = vpop.f32.mrf.mxu0
  %996 = vmatprep.mubr.bf16.mxu0 0
  %997 = vmatmul.mubr.bf16.gmra.mxu0 %v791
  %v998 = vpop.f32.mrf.mxu0
  %v999 = vadd.f32 %v834, %v998
  %v1000 = vpop.f32.mrf.mxu0
  %v1001 = vpop.f32.mrf.mxu0
  %v1002 = vadd.f32 %v834, %v1001
  %v1003 = vpop.f32.mrf.mxu0
  %1004 = vmatprep.mubr.bf16.mxu0 0
  %1005 = vmatmul.mubr.bf16.gmra.mxu0 %v792
  %v1006 = vpop.f32.mrf.mxu0
  %v1007 = vadd.f32 %v834, %v1006
  %v1008 = vpop.f32.mrf.mxu0
  %v1009 = vpop.f32.mrf.mxu0
  %v1010 = vadd.f32 %v834, %v1009
  %v1011 = vpop.f32.mrf.mxu0
  %1012 = vmatprep.mubr.bf16.mxu0 0
  %1013 = vmatmul.mubr.bf16.gmra.mxu0 %v793
  %v1014 = vpop.f32.mrf.mxu0
  %v1015 = vadd.f32 %v834, %v1014
  %v1016 = vpop.f32.mrf.mxu0
  %v1017 = vpop.f32.mrf.mxu0
  %v1018 = vadd.f32 %v834, %v1017
  %v1019 = vpop.f32.mrf.mxu0
  %1020 = vmatprep.mubr.bf16.mxu0 0
  %1021 = vmatmul.mubr.bf16.gmra.mxu0 %v794
  %v1022 = vpop.f32.mrf.mxu0
  %v1023 = vadd.f32 %v834, %v1022
  %v1024 = vpop.f32.mrf.mxu0
  %v1025 = vpop.f32.mrf.mxu0
  %v1026 = vadd.f32 %v834, %v1025
  %v1027 = vpop.f32.mrf.mxu0
  %1028 = vmatprep.mubr.bf16.mxu0 0
  %1029 = vmatmul.mubr.bf16.gmra.mxu0 %v795
  %v1030 = vpop.f32.mrf.mxu0
  %v1031 = vadd.f32 %v834, %v1030
  %v1032 = vpop.f32.mrf.mxu0
  %v1033 = vpop.f32.mrf.mxu0
  %v1034 = vadd.f32 %v834, %v1033
  %v1035 = vpop.f32.mrf.mxu0
  %1036 = vmatprep.mubr.bf16.mxu0 0
  %1037 = vmatmul.mubr.bf16.gmra.mxu0 %v796
  %v1038 = vpop.f32.mrf.mxu0
  %v1039 = vadd.f32 %v834, %v1038
  %v1040 = vpop.f32.mrf.mxu0
  %v1041 = vpop.f32.mrf.mxu0
  %v1042 = vadd.f32 %v834, %v1041
  %v1043 = vpop.f32.mrf.mxu0
  %1044 = vmatprep.mubr.bf16.mxu0 0
  %1045 = vmatmul.mubr.bf16.gmra.mxu0 %v797
  %v1046 = vpop.f32.mrf.mxu0
  %v1047 = vadd.f32 %v834, %v1046
  %v1048 = vpop.f32.mrf.mxu0
  %v1049 = vpop.f32.mrf.mxu0
  %v1050 = vadd.f32 %v834, %v1049
  %v1051 = vpop.f32.mrf.mxu0
  %1052 = vmatprep.mubr.bf16.mxu0 0
  %1053 = vmatmul.mubr.bf16.gmra.mxu0 %v798
  %v1054 = vpop.f32.mrf.mxu0
  %v1055 = vadd.f32 %v834, %v1054
  %v1056 = vpop.f32.mrf.mxu0
  %v1057 = vpop.f32.mrf.mxu0
  %v1058 = vadd.f32 %v834, %v1057
  %v1059 = vpop.f32.mrf.mxu0
  %1060 = vmatprep.mubr.bf16.mxu0 0
  %1061 = vmatmul.mubr.bf16.gmra.mxu0 %v799
  %v1062 = vpop.f32.mrf.mxu0
  %v1063 = vadd.f32 %v834, %v1062
  %v1064 = vpop.f32.mrf.mxu0
  %v1065 = vpop.f32.mrf.mxu0
  %v1066 = vadd.f32 %v834, %v1065
  %v1067 = vpop.f32.mrf.mxu0
  %1068 = vmatprep.mubr.bf16.mxu0 0
  %1069 = vmatmul.mubr.bf16.gmra.mxu0 %v800
  %v1070 = vpop.f32.mrf.mxu0
  %v1071 = vadd.f32 %v834, %v1070
  %v1072 = vpop.f32.mrf.mxu0
  %v1073 = vpop.f32.mrf.mxu0
  %v1074 = vadd.f32 %v834, %v1073
  %v1075 = vpop.f32.mrf.mxu0
  %1076 = vmatprep.mubr.bf16.mxu0 0
  %1077 = vmatmul.mubr.bf16.gmra.mxu0 %v801
  %v1078 = vpop.f32.mrf.mxu0
  %v1079 = vadd.f32 %v834, %v1078
  %v1080 = vpop.f32.mrf.mxu0
  %v1081 = vpop.f32.mrf.mxu0
  %v1082 = vadd.f32 %v834, %v1081
  %v1083 = vpop.f32.mrf.mxu0
  %1084 = vmatprep.mubr.bf16.mxu0 0
  %1085 = vmatmul.mubr.bf16.gmra.mxu0 %v802
  %v1086 = vpop.f32.mrf.mxu0
  %v1087 = vadd.f32 %v834, %v1086
  %v1088 = vpop.f32.mrf.mxu0
  %v1089 = vpop.f32.mrf.mxu0
  %v1090 = vadd.f32 %v834, %v1089
  %v1091 = vpop.f32.mrf.mxu0
  %1092 = vmatprep.mubr.bf16.mxu0 0
  %1093 = vmatmul.mubr.bf16.gmra.mxu0 %v803
  %v1094 = vpop.f32.mrf.mxu0
  %v1095 = vadd.f32 %v834, %v1094
  %v1096 = vpop.f32.mrf.mxu0
  %v1097 = vpop.f32.mrf.mxu0
  %v1098 = vadd.f32 %v834, %v1097
  %v1099 = vpop.f32.mrf.mxu0
  %1100 = vmatprep.mubr.bf16.mxu0 0
  %1101 = vmatmul.mubr.bf16.gmra.mxu0 %v804
  %v1102 = vpop.f32.mrf.mxu0
  %v1103 = vadd.f32 %v834, %v1102
  %v1104 = vpop.f32.mrf.mxu0
  %v1105 = vpop.f32.mrf.mxu0
  %v1106 = vadd.f32 %v834, %v1105
  %v1107 = vpop.f32.mrf.mxu0
  %1108 = vmatprep.mubr.bf16.mxu0 0
  %1109 = vmatmul.mubr.bf16.gmra.mxu0 %v805
  %v1110 = vpop.f32.mrf.mxu0
  %v1111 = vadd.f32 %v834, %v1110
  %v1112 = vpop.f32.mrf.mxu0
  %v1113 = vpop.f32.mrf.mxu0
  %v1114 = vadd.f32 %v834, %v1113
  %v1115 = vpop.f32.mrf.mxu0
  %1116 = vmatprep.mubr.bf16.mxu0 0
  %1117 = vmatmul.mubr.bf16.gmra.mxu0 %v806
  %v1118 = vpop.f32.mrf.mxu0
  %v1119 = vadd.f32 %v834, %v1118
  %v1120 = vpop.f32.mrf.mxu0
  %v1121 = vpop.f32.mrf.mxu0
  %v1122 = vadd.f32 %v834, %v1121
  %v1123 = vpop.f32.mrf.mxu0
  %1124 = vmatprep.mubr.bf16.mxu0 0
  %1125 = vmatmul.mubr.bf16.gmra.mxu0 %v807
  %v1126 = vpop.f32.mrf.mxu0
  %v1127 = vadd.f32 %v834, %v1126
  %v1128 = vpop.f32.mrf.mxu0
  %v1129 = vpop.f32.mrf.mxu0
  %v1130 = vadd.f32 %v834, %v1129
  %v1131 = vpop.f32.mrf.mxu0
  %1132 = vmatprep.mubr.bf16.mxu0 0
  %1133 = vmatmul.mubr.bf16.gmra.mxu0 %v808
  %v1134 = vpop.f32.mrf.mxu0
  %v1135 = vadd.f32 %v834, %v1134
  %v1136 = vpop.f32.mrf.mxu0
  %v1137 = vpop.f32.mrf.mxu0
  %v1138 = vadd.f32 %v834, %v1137
  %v1139 = vpop.f32.mrf.mxu0
  %1140 = vmatprep.mubr.bf16.mxu0 0
  %1141 = vmatmul.mubr.bf16.gmra.mxu0 %v809
  %v1142 = vpop.f32.mrf.mxu0
  %v1143 = vadd.f32 %v834, %v1142
  %v1144 = vpop.f32.mrf.mxu0
  %v1145 = vpop.f32.mrf.mxu0
  %v1146 = vadd.f32 %v834, %v1145
  %v1147 = vpop.f32.mrf.mxu0
  %1148 = vmatprep.mubr.bf16.mxu0 0
  %1149 = vmatmul.mubr.bf16.gmra.mxu0 %v810
  %v1150 = vpop.f32.mrf.mxu0
  %v1151 = vadd.f32 %v834, %v1150
  %v1152 = vpop.f32.mrf.mxu0
  %v1153 = vpop.f32.mrf.mxu0
  %v1154 = vadd.f32 %v834, %v1153
  %v1155 = vpop.f32.mrf.mxu0
  %1156 = vmatprep.mubr.bf16.mxu0 0
  %1157 = vmatmul.mubr.bf16.gmra.mxu0 %v811
  %v1158 = vpop.f32.mrf.mxu0
  %v1159 = vadd.f32 %v834, %v1158
  %v1160 = vpop.f32.mrf.mxu0
  %v1161 = vpop.f32.mrf.mxu0
  %v1162 = vadd.f32 %v834, %v1161
  %v1163 = vpop.f32.mrf.mxu0
  %1164 = vmatprep.mubr.bf16.mxu0 0
  %1165 = vmatmul.mubr.bf16.gmra.mxu0 %v812
  %v1166 = vpop.f32.mrf.mxu0
  %v1167 = vadd.f32 %v834, %v1166
  %v1168 = vpop.f32.mrf.mxu0
  %v1169 = vpop.f32.mrf.mxu0
  %v1170 = vadd.f32 %v834, %v1169
  %v1171 = vpop.f32.mrf.mxu0
  %1172 = vdwg.mxu0
  %v1173 = vld [vmem:[%s64] sm:$0xff]
  %v1174 = vld [vmem:[%s64 + $0x8] sm:$0xff]
  %v1175 = vld [vmem:[%s64 + $0x10] sm:$0xff]
  %v1176 = vld [vmem:[%s64 + $0x18] sm:$0xff]
  %v1177 = vld [vmem:[%s64 + $0x20] sm:$0xff]
  %v1178 = vld [vmem:[%s64 + $0x28] sm:$0xff]
  %v1179 = vld [vmem:[%s64 + $0x30] sm:$0xff]
  %v1180 = vld [vmem:[%s64 + $0x38] sm:$0xff]
  %v1181 = vld [vmem:[%s64 + $0x40] sm:$0xff]
  %v1182 = vld [vmem:[%s64 + $0x48] sm:$0xff]
  %v1183 = vld [vmem:[%s64 + $0x50] sm:$0xff]
  %v1184 = vld [vmem:[%s64 + $0x58] sm:$0xff]
  %v1185 = vld [vmem:[%s64 + $0x60] sm:$0xff]
  %v1186 = vld [vmem:[%s64 + $0x68] sm:$0xff]
  %v1187 = vld [vmem:[%s64 + $0x70] sm:$0xff]
  %v1188 = vld [vmem:[%s64 + $0x78] sm:$0xff]
  %v1189 = vld [vmem:[%s64 + $0x80] sm:$0xff]
  %v1190 = vld [vmem:[%s64 + $0x88] sm:$0xff]
  %v1191 = vld [vmem:[%s64 + $0x90] sm:$0xff]
  %v1192 = vld [vmem:[%s64 + $0x98] sm:$0xff]
  %v1193 = vld [vmem:[%s64 + $0xa0] sm:$0xff]
  %v1194 = vld [vmem:[%s64 + $0xa8] sm:$0xff]
  %v1195 = vld [vmem:[%s64 + $0xb0] sm:$0xff]
  %v1196 = vld [vmem:[%s64 + $0xb8] sm:$0xff]
  %v1197 = vld [vmem:[%s64 + $0xc0] sm:$0xff]
  %v1198 = vld [vmem:[%s64 + $0xc8] sm:$0xff]
  %v1199 = vld [vmem:[%s64 + $0xd0] sm:$0xff]
  %v1200 = vld [vmem:[%s64 + $0xd8] sm:$0xff]
  %v1201 = vld [vmem:[%s64 + $0xe0] sm:$0xff]
  %v1202 = vld [vmem:[%s64 + $0xe8] sm:$0xff]
  %v1203 = vld [vmem:[%s64 + $0xf0] sm:$0xff]
  %v1204 = vld [vmem:[%s64 + $0xf8] sm:$0xff]
  %v1205 = vld [vmem:[%s64 + $0x100] sm:$0xff]
  %v1206 = vld [vmem:[%s64 + $0x108] sm:$0xff]
  %v1207 = vld [vmem:[%s64 + $0x110] sm:$0xff]
  %v1208 = vld [vmem:[%s64 + $0x118] sm:$0xff]
  %v1209 = vld [vmem:[%s64 + $0x120] sm:$0xff]
  %v1210 = vld [vmem:[%s64 + $0x128] sm:$0xff]
  %v1211 = vld [vmem:[%s64 + $0x130] sm:$0xff]
  %v1212 = vld [vmem:[%s64 + $0x138] sm:$0xff]
  %v1213 = vld [vmem:[%s64 + $0x140] sm:$0xff]
  %v1214 = vld [vmem:[%s64 + $0x148] sm:$0xff]
  %v1215 = vld [vmem:[%s64 + $0x150] sm:$0xff]
  %v1216 = vld [vmem:[%s64 + $0x158] sm:$0xff]
  %v1217 = vld [vmem:[%s64 + $0x160] sm:$0xff]
  %v1218 = vld [vmem:[%s64 + $0x168] sm:$0xff]
  %v1219 = vld [vmem:[%s64 + $0x170] sm:$0xff]
  %v1220 = vld [vmem:[%s64 + $0x178] sm:$0xff]
  %v1221 = vld [vmem:[%s64 + $0x180] sm:$0xff]
  %v1222 = vld [vmem:[%s64 + $0x188] sm:$0xff]
  %v1223 = vld [vmem:[%s64 + $0x190] sm:$0xff]
  %v1224 = vld [vmem:[%s64 + $0x198] sm:$0xff]
  %v1225 = vld [vmem:[%s64 + $0x1a0] sm:$0xff]
  %v1226 = vld [vmem:[%s64 + $0x1a8] sm:$0xff]
  %v1227 = vld [vmem:[%s64 + $0x1b0] sm:$0xff]
  %v1228 = vld [vmem:[%s64 + $0x1b8] sm:$0xff]
  %v1229 = vld [vmem:[%s64 + $0x1c0] sm:$0xff]
  %v1230 = vld [vmem:[%s64 + $0x1c8] sm:$0xff]
  %v1231 = vld [vmem:[%s64 + $0x1d0] sm:$0xff]
  %v1232 = vld [vmem:[%s64 + $0x1d8] sm:$0xff]
  %v1233 = vld [vmem:[%s64 + $0x1e0] sm:$0xff]
  %v1234 = vld [vmem:[%s64 + $0x1e8] sm:$0xff]
  %v1235 = vld [vmem:[%s64 + $0x1f0] sm:$0xff]
  %v1236 = vld [vmem:[%s64 + $0x1f8] sm:$0xff]
  %v1237 = vlaneseq
  %v1238 = vand.u32 %v1237, 127
  %1239 = vset.pattern.permute.xlu0 0
  %1240 = vperm.xlu0 %1239, %v1173
  %v1241 = vpop.permute.xlu0 %1240
  %1242 = vset.pattern.permute.xlu0 0
  %1243 = vperm.xlu0 %1242, %v1174
  %v1244 = vpop.permute.xlu0 %1243
  %1245 = vset.pattern.permute.xlu0 0
  %1246 = vperm.xlu0 %1245, %v1175
  %v1247 = vpop.permute.xlu0 %1246
  %1248 = vset.pattern.permute.xlu0 0
  %1249 = vperm.xlu0 %1248, %v1176
  %v1250 = vpop.permute.xlu0 %1249
  %1251 = vset.pattern.permute.xlu0 0
  %1252 = vperm.xlu0 %1251, %v1177
  %v1253 = vpop.permute.xlu0 %1252
  %1254 = vset.pattern.permute.xlu0 0
  %1255 = vperm.xlu0 %1254, %v1178
  %v1256 = vpop.permute.xlu0 %1255
  %1257 = vset.pattern.permute.xlu0 0
  %1258 = vperm.xlu0 %1257, %v1179
  %v1259 = vpop.permute.xlu0 %1258
  %1260 = vset.pattern.permute.xlu0 0
  %1261 = vperm.xlu0 %1260, %v1180
  %v1262 = vpop.permute.xlu0 %1261
  %1263 = vset.pattern.permute.xlu0 0
  %1264 = vperm.xlu0 %1263, %v1181
  %v1265 = vpop.permute.xlu0 %1264
  %1266 = vset.pattern.permute.xlu0 0
  %1267 = vperm.xlu0 %1266, %v1182
  %v1268 = vpop.permute.xlu0 %1267
  %1269 = vset.pattern.permute.xlu0 0
  %1270 = vperm.xlu0 %1269, %v1183
  %v1271 = vpop.permute.xlu0 %1270
  %1272 = vset.pattern.permute.xlu0 0
  %1273 = vperm.xlu0 %1272, %v1184
  %v1274 = vpop.permute.xlu0 %1273
  %1275 = vset.pattern.permute.xlu0 0
  %1276 = vperm.xlu0 %1275, %v1185
  %v1277 = vpop.permute.xlu0 %1276
  %1278 = vset.pattern.permute.xlu0 0
  %1279 = vperm.xlu0 %1278, %v1186
  %v1280 = vpop.permute.xlu0 %1279
  %1281 = vset.pattern.permute.xlu0 0
  %1282 = vperm.xlu0 %1281, %v1187
  %v1283 = vpop.permute.xlu0 %1282
  %1284 = vset.pattern.permute.xlu0 0
  %1285 = vperm.xlu0 %1284, %v1188
  %v1286 = vpop.permute.xlu0 %1285
  %1287 = vset.pattern.permute.xlu0 0
  %1288 = vperm.xlu0 %1287, %v1189
  %v1289 = vpop.permute.xlu0 %1288
  %1290 = vset.pattern.permute.xlu0 0
  %1291 = vperm.xlu0 %1290, %v1190
  %v1292 = vpop.permute.xlu0 %1291
  %1293 = vset.pattern.permute.xlu0 0
  %1294 = vperm.xlu0 %1293, %v1191
  %v1295 = vpop.permute.xlu0 %1294
  %1296 = vset.pattern.permute.xlu0 0
  %1297 = vperm.xlu0 %1296, %v1192
  %v1298 = vpop.permute.xlu0 %1297
  %1299 = vset.pattern.permute.xlu0 0
  %1300 = vperm.xlu0 %1299, %v1193
  %v1301 = vpop.permute.xlu0 %1300
  %1302 = vset.pattern.permute.xlu0 0
  %1303 = vperm.xlu0 %1302, %v1194
  %v1304 = vpop.permute.xlu0 %1303
  %1305 = vset.pattern.permute.xlu0 0
  %1306 = vperm.xlu0 %1305, %v1195
  %v1307 = vpop.permute.xlu0 %1306
  %1308 = vset.pattern.permute.xlu0 0
  %1309 = vperm.xlu0 %1308, %v1196
  %v1310 = vpop.permute.xlu0 %1309
  %1311 = vset.pattern.permute.xlu0 0
  %1312 = vperm.xlu0 %1311, %v1197
  %v1313 = vpop.permute.xlu0 %1312
  %1314 = vset.pattern.permute.xlu0 0
  %1315 = vperm.xlu0 %1314, %v1198
  %v1316 = vpop.permute.xlu0 %1315
  %1317 = vset.pattern.permute.xlu0 0
  %1318 = vperm.xlu0 %1317, %v1199
  %v1319 = vpop.permute.xlu0 %1318
  %1320 = vset.pattern.permute.xlu0 0
  %1321 = vperm.xlu0 %1320, %v1200
  %v1322 = vpop.permute.xlu0 %1321
  %1323 = vset.pattern.permute.xlu0 0
  %1324 = vperm.xlu0 %1323, %v1201
  %v1325 = vpop.permute.xlu0 %1324
  %1326 = vset.pattern.permute.xlu0 0
  %1327 = vperm.xlu0 %1326, %v1202
  %v1328 = vpop.permute.xlu0 %1327
  %1329 = vset.pattern.permute.xlu0 0
  %1330 = vperm.xlu0 %1329, %v1203
  %v1331 = vpop.permute.xlu0 %1330
  %1332 = vset.pattern.permute.xlu0 0
  %1333 = vperm.xlu0 %1332, %v1204
  %v1334 = vpop.permute.xlu0 %1333
  %1335 = vset.pattern.permute.xlu0 0
  %1336 = vperm.xlu0 %1335, %v1205
  %v1337 = vpop.permute.xlu0 %1336
  %1338 = vset.pattern.permute.xlu0 0
  %1339 = vperm.xlu0 %1338, %v1206
  %v1340 = vpop.permute.xlu0 %1339
  %1341 = vset.pattern.permute.xlu0 0
  %1342 = vperm.xlu0 %1341, %v1207
  %v1343 = vpop.permute.xlu0 %1342
  %1344 = vset.pattern.permute.xlu0 0
  %1345 = vperm.xlu0 %1344, %v1208
  %v1346 = vpop.permute.xlu0 %1345
  %1347 = vset.pattern.permute.xlu0 0
  %1348 = vperm.xlu0 %1347, %v1209
  %v1349 = vpop.permute.xlu0 %1348
  %1350 = vset.pattern.permute.xlu0 0
  %1351 = vperm.xlu0 %1350, %v1210
  %v1352 = vpop.permute.xlu0 %1351
  %1353 = vset.pattern.permute.xlu0 0
  %1354 = vperm.xlu0 %1353, %v1211
  %v1355 = vpop.permute.xlu0 %1354
  %1356 = vset.pattern.permute.xlu0 0
  %1357 = vperm.xlu0 %1356, %v1212
  %v1358 = vpop.permute.xlu0 %1357
  %1359 = vset.pattern.permute.xlu0 0
  %1360 = vperm.xlu0 %1359, %v1213
  %v1361 = vpop.permute.xlu0 %1360
  %1362 = vset.pattern.permute.xlu0 0
  %1363 = vperm.xlu0 %1362, %v1214
  %v1364 = vpop.permute.xlu0 %1363
  %1365 = vset.pattern.permute.xlu0 0
  %1366 = vperm.xlu0 %1365, %v1215
  %v1367 = vpop.permute.xlu0 %1366
  %1368 = vset.pattern.permute.xlu0 0
  %1369 = vperm.xlu0 %1368, %v1216
  %v1370 = vpop.permute.xlu0 %1369
  %1371 = vset.pattern.permute.xlu0 0
  %1372 = vperm.xlu0 %1371, %v1217
  %v1373 = vpop.permute.xlu0 %1372
  %1374 = vset.pattern.permute.xlu0 0
  %1375 = vperm.xlu0 %1374, %v1218
  %v1376 = vpop.permute.xlu0 %1375
  %1377 = vset.pattern.permute.xlu0 0
  %1378 = vperm.xlu0 %1377, %v1219
  %v1379 = vpop.permute.xlu0 %1378
  %1380 = vset.pattern.permute.xlu0 0
  %1381 = vperm.xlu0 %1380, %v1220
  %v1382 = vpop.permute.xlu0 %1381
  %1383 = vset.pattern.permute.xlu0 0
  %1384 = vperm.xlu0 %1383, %v1221
  %v1385 = vpop.permute.xlu0 %1384
  %1386 = vset.pattern.permute.xlu0 0
  %1387 = vperm.xlu0 %1386, %v1222
  %v1388 = vpop.permute.xlu0 %1387
  %1389 = vset.pattern.permute.xlu0 0
  %1390 = vperm.xlu0 %1389, %v1223
  %v1391 = vpop.permute.xlu0 %1390
  %1392 = vset.pattern.permute.xlu0 0
  %1393 = vperm.xlu0 %1392, %v1224
  %v1394 = vpop.permute.xlu0 %1393
  %1395 = vset.pattern.permute.xlu0 0
  %1396 = vperm.xlu0 %1395, %v1225
  %v1397 = vpop.permute.xlu0 %1396
  %1398 = vset.pattern.permute.xlu0 0
  %1399 = vperm.xlu0 %1398, %v1226
  %v1400 = vpop.permute.xlu0 %1399
  %1401 = vset.pattern.permute.xlu0 0
  %1402 = vperm.xlu0 %1401, %v1227
  %v1403 = vpop.permute.xlu0 %1402
  %1404 = vset.pattern.permute.xlu0 0
  %1405 = vperm.xlu0 %1404, %v1228
  %v1406 = vpop.permute.xlu0 %1405
  %1407 = vset.pattern.permute.xlu0 0
  %1408 = vperm.xlu0 %1407, %v1229
  %v1409 = vpop.permute.xlu0 %1408
  %1410 = vset.pattern.permute.xlu0 0
  %1411 = vperm.xlu0 %1410, %v1230
  %v1412 = vpop.permute.xlu0 %1411
  %1413 = vset.pattern.permute.xlu0 0
  %1414 = vperm.xlu0 %1413, %v1231
  %v1415 = vpop.permute.xlu0 %1414
  %1416 = vset.pattern.permute.xlu0 0
  %1417 = vperm.xlu0 %1416, %v1232
  %v1418 = vpop.permute.xlu0 %1417
  %1419 = vset.pattern.permute.xlu0 0
  %1420 = vperm.xlu0 %1419, %v1233
  %v1421 = vpop.permute.xlu0 %1420
  %1422 = vset.pattern.permute.xlu0 0
  %1423 = vperm.xlu0 %1422, %v1234
  %v1424 = vpop.permute.xlu0 %1423
  %1425 = vset.pattern.permute.xlu0 0
  %1426 = vperm.xlu0 %1425, %v1235
  %v1427 = vpop.permute.xlu0 %1426
  %1428 = vset.pattern.permute.xlu0 0
  %1429 = vperm.xlu0 %1428, %v1236
  %v1430 = vpop.permute.xlu0 %1429
  %vm1431 = vcmp.eq.s32.totalorder %v1238, %v1241
  %vm1432 = vcmp.eq.s32.totalorder %v1238, %v1244
  %vm1433 = vcmp.eq.s32.totalorder %v1238, %v1247
  %vm1434 = vcmp.eq.s32.totalorder %v1238, %v1250
  %vm1435 = vcmp.eq.s32.totalorder %v1238, %v1253
  %vm1436 = vcmp.eq.s32.totalorder %v1238, %v1256
  %vm1437 = vcmp.eq.s32.totalorder %v1238, %v1259
  %vm1438 = vcmp.eq.s32.totalorder %v1238, %v1262
  %vm1439 = vcmp.eq.s32.totalorder %v1238, %v1265
  %vm1440 = vcmp.eq.s32.totalorder %v1238, %v1268
  %vm1441 = vcmp.eq.s32.totalorder %v1238, %v1271
  %vm1442 = vcmp.eq.s32.totalorder %v1238, %v1274
  %vm1443 = vcmp.eq.s32.totalorder %v1238, %v1277
  %vm1444 = vcmp.eq.s32.totalorder %v1238, %v1280
  %vm1445 = vcmp.eq.s32.totalorder %v1238, %v1283
  %vm1446 = vcmp.eq.s32.totalorder %v1238, %v1286
  %vm1447 = vcmp.eq.s32.totalorder %v1238, %v1289
  %vm1448 = vcmp.eq.s32.totalorder %v1238, %v1292
  %vm1449 = vcmp.eq.s32.totalorder %v1238, %v1295
  %vm1450 = vcmp.eq.s32.totalorder %v1238, %v1298
  %vm1451 = vcmp.eq.s32.totalorder %v1238, %v1301
  %vm1452 = vcmp.eq.s32.totalorder %v1238, %v1304
  %vm1453 = vcmp.eq.s32.totalorder %v1238, %v1307
  %vm1454 = vcmp.eq.s32.totalorder %v1238, %v1310
  %vm1455 = vcmp.eq.s32.totalorder %v1238, %v1313
  %vm1456 = vcmp.eq.s32.totalorder %v1238, %v1316
  %vm1457 = vcmp.eq.s32.totalorder %v1238, %v1319
  %vm1458 = vcmp.eq.s32.totalorder %v1238, %v1322
  %vm1459 = vcmp.eq.s32.totalorder %v1238, %v1325
  %vm1460 = vcmp.eq.s32.totalorder %v1238, %v1328
  %vm1461 = vcmp.eq.s32.totalorder %v1238, %v1331
  %vm1462 = vcmp.eq.s32.totalorder %v1238, %v1334
  %vm1463 = vcmp.eq.s32.totalorder %v1238, %v1337
  %vm1464 = vcmp.eq.s32.totalorder %v1238, %v1340
  %vm1465 = vcmp.eq.s32.totalorder %v1238, %v1343
  %vm1466 = vcmp.eq.s32.totalorder %v1238, %v1346
  %vm1467 = vcmp.eq.s32.totalorder %v1238, %v1349
  %vm1468 = vcmp.eq.s32.totalorder %v1238, %v1352
  %vm1469 = vcmp.eq.s32.totalorder %v1238, %v1355
  %vm1470 = vcmp.eq.s32.totalorder %v1238, %v1358
  %vm1471 = vcmp.eq.s32.totalorder %v1238, %v1361
  %vm1472 = vcmp.eq.s32.totalorder %v1238, %v1364
  %vm1473 = vcmp.eq.s32.totalorder %v1238, %v1367
  %vm1474 = vcmp.eq.s32.totalorder %v1238, %v1370
  %vm1475 = vcmp.eq.s32.totalorder %v1238, %v1373
  %vm1476 = vcmp.eq.s32.totalorder %v1238, %v1376
  %vm1477 = vcmp.eq.s32.totalorder %v1238, %v1379
  %vm1478 = vcmp.eq.s32.totalorder %v1238, %v1382
  %vm1479 = vcmp.eq.s32.totalorder %v1238, %v1385
  %vm1480 = vcmp.eq.s32.totalorder %v1238, %v1388
  %vm1481 = vcmp.eq.s32.totalorder %v1238, %v1391
  %vm1482 = vcmp.eq.s32.totalorder %v1238, %v1394
  %vm1483 = vcmp.eq.s32.totalorder %v1238, %v1397
  %vm1484 = vcmp.eq.s32.totalorder %v1238, %v1400
  %vm1485 = vcmp.eq.s32.totalorder %v1238, %v1403
  %vm1486 = vcmp.eq.s32.totalorder %v1238, %v1406
  %vm1487 = vcmp.eq.s32.totalorder %v1238, %v1409
  %vm1488 = vcmp.eq.s32.totalorder %v1238, %v1412
  %vm1489 = vcmp.eq.s32.totalorder %v1238, %v1415
  %vm1490 = vcmp.eq.s32.totalorder %v1238, %v1418
  %vm1491 = vcmp.eq.s32.totalorder %v1238, %v1421
  %vm1492 = vcmp.eq.s32.totalorder %v1238, %v1424
  %vm1493 = vcmp.eq.s32.totalorder %v1238, %v1427
  %vm1494 = vcmp.eq.s32.totalorder %v1238, %v1430
  %1495 = vmax.xlane.f32.xlu0 %v919
  %v1496 = vpop.xlane.xlu0 %1495
  %1497 = vmax.xlane.f32.xlu0 %v922
  %v1498 = vpop.xlane.xlu0 %1497
  %1499 = vmax.xlane.f32.xlu0 %v927
  %v1500 = vpop.xlane.xlu0 %1499
  %1501 = vmax.xlane.f32.xlu0 %v930
  %v1502 = vpop.xlane.xlu0 %1501
  %1503 = vmax.xlane.f32.xlu0 %v935
  %v1504 = vpop.xlane.xlu0 %1503
  %1505 = vmax.xlane.f32.xlu0 %v938
  %v1506 = vpop.xlane.xlu0 %1505
  %1507 = vmax.xlane.f32.xlu0 %v943
  %v1508 = vpop.xlane.xlu0 %1507
  %1509 = vmax.xlane.f32.xlu0 %v946
  %v1510 = vpop.xlane.xlu0 %1509
  %1511 = vmax.xlane.f32.xlu0 %v951
  %v1512 = vpop.xlane.xlu0 %1511
  %1513 = vmax.xlane.f32.xlu0 %v954
  %v1514 = vpop.xlane.xlu0 %1513
  %1515 = vmax.xlane.f32.xlu0 %v959
  %v1516 = vpop.xlane.xlu0 %1515
  %1517 = vmax.xlane.f32.xlu0 %v962
  %v1518 = vpop.xlane.xlu0 %1517
  %1519 = vmax.xlane.f32.xlu0 %v967
  %v1520 = vpop.xlane.xlu0 %1519
  %1521 = vmax.xlane.f32.xlu0 %v970
  %v1522 = vpop.xlane.xlu0 %1521
  %1523 = vmax.xlane.f32.xlu0 %v975
  %v1524 = vpop.xlane.xlu0 %1523
  %1525 = vmax.xlane.f32.xlu0 %v978
  %v1526 = vpop.xlane.xlu0 %1525
  %1527 = vmax.xlane.f32.xlu0 %v983
  %v1528 = vpop.xlane.xlu0 %1527
  %1529 = vmax.xlane.f32.xlu0 %v986
  %v1530 = vpop.xlane.xlu0 %1529
  %1531 = vmax.xlane.f32.xlu0 %v991
  %v1532 = vpop.xlane.xlu0 %1531
  %1533 = vmax.xlane.f32.xlu0 %v994
  %v1534 = vpop.xlane.xlu0 %1533
  %1535 = vmax.xlane.f32.xlu0 %v999
  %v1536 = vpop.xlane.xlu0 %1535
  %1537 = vmax.xlane.f32.xlu0 %v1002
  %v1538 = vpop.xlane.xlu0 %1537
  %1539 = vmax.xlane.f32.xlu0 %v1007
  %v1540 = vpop.xlane.xlu0 %1539
  %1541 = vmax.xlane.f32.xlu0 %v1010
  %v1542 = vpop.xlane.xlu0 %1541
  %1543 = vmax.xlane.f32.xlu0 %v1015
  %v1544 = vpop.xlane.xlu0 %1543
  %1545 = vmax.xlane.f32.xlu0 %v1018
  %v1546 = vpop.xlane.xlu0 %1545
  %1547 = vmax.xlane.f32.xlu0 %v1023
  %v1548 = vpop.xlane.xlu0 %1547
  %1549 = vmax.xlane.f32.xlu0 %v1026
  %v1550 = vpop.xlane.xlu0 %1549
  %1551 = vmax.xlane.f32.xlu0 %v1031
  %v1552 = vpop.xlane.xlu0 %1551
  %1553 = vmax.xlane.f32.xlu0 %v1034
  %v1554 = vpop.xlane.xlu0 %1553
  %1555 = vmax.xlane.f32.xlu0 %v1039
  %v1556 = vpop.xlane.xlu0 %1555
  %1557 = vmax.xlane.f32.xlu0 %v1042
  %v1558 = vpop.xlane.xlu0 %1557
  %1559 = vmax.xlane.f32.xlu0 %v1047
  %v1560 = vpop.xlane.xlu0 %1559
  %1561 = vmax.xlane.f32.xlu0 %v1050
  %v1562 = vpop.xlane.xlu0 %1561
  %1563 = vmax.xlane.f32.xlu0 %v1055
  %v1564 = vpop.xlane.xlu0 %1563
  %1565 = vmax.xlane.f32.xlu0 %v1058
  %v1566 = vpop.xlane.xlu0 %1565
  %1567 = vmax.xlane.f32.xlu0 %v1063
  %v1568 = vpop.xlane.xlu0 %1567
  %1569 = vmax.xlane.f32.xlu0 %v1066
  %v1570 = vpop.xlane.xlu0 %1569
  %1571 = vmax.xlane.f32.xlu0 %v1071
  %v1572 = vpop.xlane.xlu0 %1571
  %1573 = vmax.xlane.f32.xlu0 %v1074
  %v1574 = vpop.xlane.xlu0 %1573
  %1575 = vmax.xlane.f32.xlu0 %v1079
  %v1576 = vpop.xlane.xlu0 %1575
  %1577 = vmax.xlane.f32.xlu0 %v1082
  %v1578 = vpop.xlane.xlu0 %1577
  %1579 = vmax.xlane.f32.xlu0 %v1087
  %v1580 = vpop.xlane.xlu0 %1579
  %1581 = vmax.xlane.f32.xlu0 %v1090
  %v1582 = vpop.xlane.xlu0 %1581
  %1583 = vmax.xlane.f32.xlu0 %v1095
  %v1584 = vpop.xlane.xlu0 %1583
  %1585 = vmax.xlane.f32.xlu0 %v1098
  %v1586 = vpop.xlane.xlu0 %1585
  %1587 = vmax.xlane.f32.xlu0 %v1103
  %v1588 = vpop.xlane.xlu0 %1587
  %1589 = vmax.xlane.f32.xlu0 %v1106
  %v1590 = vpop.xlane.xlu0 %1589
  %1591 = vmax.xlane.f32.xlu0 %v1111
  %v1592 = vpop.xlane.xlu0 %1591
  %1593 = vmax.xlane.f32.xlu0 %v1114
  %v1594 = vpop.xlane.xlu0 %1593
  %1595 = vmax.xlane.f32.xlu0 %v1119
  %v1596 = vpop.xlane.xlu0 %1595
  %1597 = vmax.xlane.f32.xlu0 %v1122
  %v1598 = vpop.xlane.xlu0 %1597
  %1599 = vmax.xlane.f32.xlu0 %v1127
  %v1600 = vpop.xlane.xlu0 %1599
  %1601 = vmax.xlane.f32.xlu0 %v1130
  %v1602 = vpop.xlane.xlu0 %1601
  %1603 = vmax.xlane.f32.xlu0 %v1135
  %v1604 = vpop.xlane.xlu0 %1603
  %1605 = vmax.xlane.f32.xlu0 %v1138
  %v1606 = vpop.xlane.xlu0 %1605
  %1607 = vmax.xlane.f32.xlu0 %v1143
  %v1608 = vpop.xlane.xlu0 %1607
  %1609 = vmax.xlane.f32.xlu0 %v1146
  %v1610 = vpop.xlane.xlu0 %1609
  %1611 = vmax.xlane.f32.xlu0 %v1151
  %v1612 = vpop.xlane.xlu0 %1611
  %1613 = vmax.xlane.f32.xlu0 %v1154
  %v1614 = vpop.xlane.xlu0 %1613
  %1615 = vmax.xlane.f32.xlu0 %v1159
  %v1616 = vpop.xlane.xlu0 %1615
  %1617 = vmax.xlane.f32.xlu0 %v1162
  %v1618 = vpop.xlane.xlu0 %1617
  %1619 = vmax.xlane.f32.xlu0 %v1167
  %v1620 = vpop.xlane.xlu0 %1619
  %1621 = vmax.xlane.f32.xlu0 %v1170
  %v1622 = vpop.xlane.xlu0 %1621
  %v1623 = vsub.f32 %v919, %v1496
  %v1624 = vsub.f32 %v922, %v1498
  %v1625 = vsub.f32 %v927, %v1500
  %v1626 = vsub.f32 %v930, %v1502
  %v1627 = vsub.f32 %v935, %v1504
  %v1628 = vsub.f32 %v938, %v1506
  %v1629 = vsub.f32 %v943, %v1508
  %v1630 = vsub.f32 %v946, %v1510
  %v1631 = vsub.f32 %v951, %v1512
  %v1632 = vsub.f32 %v954, %v1514
  %v1633 = vsub.f32 %v959, %v1516
  %v1634 = vsub.f32 %v962, %v1518
  %v1635 = vsub.f32 %v967, %v1520
  %v1636 = vsub.f32 %v970, %v1522
  %v1637 = vsub.f32 %v975, %v1524
  %v1638 = vsub.f32 %v978, %v1526
  %v1639 = vsub.f32 %v983, %v1528
  %v1640 = vsub.f32 %v986, %v1530
  %v1641 = vsub.f32 %v991, %v1532
  %v1642 = vsub.f32 %v994, %v1534
  %v1643 = vsub.f32 %v999, %v1536
  %v1644 = vsub.f32 %v1002, %v1538
  %v1645 = vsub.f32 %v1007, %v1540
  %v1646 = vsub.f32 %v1010, %v1542
  %v1647 = vsub.f32 %v1015, %v1544
  %v1648 = vsub.f32 %v1018, %v1546
  %v1649 = vsub.f32 %v1023, %v1548
  %v1650 = vsub.f32 %v1026, %v1550
  %v1651 = vsub.f32 %v1031, %v1552
  %v1652 = vsub.f32 %v1034, %v1554
  %v1653 = vsub.f32 %v1039, %v1556
  %v1654 = vsub.f32 %v1042, %v1558
  %v1655 = vsub.f32 %v1047, %v1560
  %v1656 = vsub.f32 %v1050, %v1562
  %v1657 = vsub.f32 %v1055, %v1564
  %v1658 = vsub.f32 %v1058, %v1566
  %v1659 = vsub.f32 %v1063, %v1568
  %v1660 = vsub.f32 %v1066, %v1570
  %v1661 = vsub.f32 %v1071, %v1572
  %v1662 = vsub.f32 %v1074, %v1574
  %v1663 = vsub.f32 %v1079, %v1576
  %v1664 = vsub.f32 %v1082, %v1578
  %v1665 = vsub.f32 %v1087, %v1580
  %v1666 = vsub.f32 %v1090, %v1582
  %v1667 = vsub.f32 %v1095, %v1584
  %v1668 = vsub.f32 %v1098, %v1586
  %v1669 = vsub.f32 %v1103, %v1588
  %v1670 = vsub.f32 %v1106, %v1590
  %v1671 = vsub.f32 %v1111, %v1592
  %v1672 = vsub.f32 %v1114, %v1594
  %v1673 = vsub.f32 %v1119, %v1596
  %v1674 = vsub.f32 %v1122, %v1598
  %v1675 = vsub.f32 %v1127, %v1600
  %v1676 = vsub.f32 %v1130, %v1602
  %v1677 = vsub.f32 %v1135, %v1604
  %v1678 = vsub.f32 %v1138, %v1606
  %v1679 = vsub.f32 %v1143, %v1608
  %v1680 = vsub.f32 %v1146, %v1610
  %v1681 = vsub.f32 %v1151, %v1612
  %v1682 = vsub.f32 %v1154, %v1614
  %v1683 = vsub.f32 %v1159, %v1616
  %v1684 = vsub.f32 %v1162, %v1618
  %v1685 = vsub.f32 %v1167, %v1620
  %v1686 = vsub.f32 %v1170, %v1622
  %v1687 = vmul.f32 %v1623, 1.442695
  %v1688 = vpow.pop %v1687
  %v1689 = vmul.f32 %v1624, 1.442695
  %v1690 = vpow.pop %v1689
  %v1691 = vmul.f32 %v1625, 1.442695
  %v1692 = vpow.pop %v1691
  %v1693 = vmul.f32 %v1626, 1.442695
  %v1694 = vpow.pop %v1693
  %v1695 = vmul.f32 %v1627, 1.442695
  %v1696 = vpow.pop %v1695
  %v1697 = vmul.f32 %v1628, 1.442695
  %v1698 = vpow.pop %v1697
  %v1699 = vmul.f32 %v1629, 1.442695
  %v1700 = vpow.pop %v1699
  %v1701 = vmul.f32 %v1630, 1.442695
  %v1702 = vpow.pop %v1701
  %v1703 = vmul.f32 %v1631, 1.442695
  %v1704 = vpow.pop %v1703
  %v1705 = vmul.f32 %v1632, 1.442695
  %v1706 = vpow.pop %v1705
  %v1707 = vmul.f32 %v1633, 1.442695
  %v1708 = vpow.pop %v1707
  %v1709 = vmul.f32 %v1634, 1.442695
  %v1710 = vpow.pop %v1709
  %v1711 = vmul.f32 %v1635, 1.442695
  %v1712 = vpow.pop %v1711
  %v1713 = vmul.f32 %v1636, 1.442695
  %v1714 = vpow.pop %v1713
  %v1715 = vmul.f32 %v1637, 1.442695
  %v1716 = vpow.pop %v1715
  %v1717 = vmul.f32 %v1638, 1.442695
  %v1718 = vpow.pop %v1717
  %v1719 = vmul.f32 %v1639, 1.442695
  %v1720 = vpow.pop %v1719
  %v1721 = vmul.f32 %v1640, 1.442695
  %v1722 = vpow.pop %v1721
  %v1723 = vmul.f32 %v1641, 1.442695
  %v1724 = vpow.pop %v1723
  %v1725 = vmul.f32 %v1642, 1.442695
  %v1726 = vpow.pop %v1725
  %v1727 = vmul.f32 %v1643, 1.442695
  %v1728 = vpow.pop %v1727
  %v1729 = vmul.f32 %v1644, 1.442695
  %v1730 = vpow.pop %v1729
  %v1731 = vmul.f32 %v1645, 1.442695
  %v1732 = vpow.pop %v1731
  %v1733 = vmul.f32 %v1646, 1.442695
  %v1734 = vpow.pop %v1733
  %v1735 = vmul.f32 %v1647, 1.442695
  %v1736 = vpow.pop %v1735
  %v1737 = vmul.f32 %v1648, 1.442695
  %v1738 = vpow.pop %v1737
  %v1739 = vmul.f32 %v1649, 1.442695
  %v1740 = vpow.pop %v1739
  %v1741 = vmul.f32 %v1650, 1.442695
  %v1742 = vpow.pop %v1741
  %v1743 = vmul.f32 %v1651, 1.442695
  %v1744 = vpow.pop %v1743
  %v1745 = vmul.f32 %v1652, 1.442695
  %v1746 = vpow.pop %v1745
  %v1747 = vmul.f32 %v1653, 1.442695
  %v1748 = vpow.pop %v1747
  %v1749 = vmul.f32 %v1654, 1.442695
  %v1750 = vpow.pop %v1749
  %v1751 = vmul.f32 %v1655, 1.442695
  %v1752 = vpow.pop %v1751
  %v1753 = vmul.f32 %v1656, 1.442695
  %v1754 = vpow.pop %v1753
  %v1755 = vmul.f32 %v1657, 1.442695
  %v1756 = vpow.pop %v1755
  %v1757 = vmul.f32 %v1658, 1.442695
  %v1758 = vpow.pop %v1757
  %v1759 = vmul.f32 %v1659, 1.442695
  %v1760 = vpow.pop %v1759
  %v1761 = vmul.f32 %v1660, 1.442695
  %v1762 = vpow.pop %v1761
  %v1763 = vmul.f32 %v1661, 1.442695
  %v1764 = vpow.pop %v1763
  %v1765 = vmul.f32 %v1662, 1.442695
  %v1766 = vpow.pop %v1765
  %v1767 = vmul.f32 %v1663, 1.442695
  %v1768 = vpow.pop %v1767
  %v1769 = vmul.f32 %v1664, 1.442695
  %v1770 = vpow.pop %v1769
  %v1771 = vmul.f32 %v1665, 1.442695
  %v1772 = vpow.pop %v1771
  %v1773 = vmul.f32 %v1666, 1.442695
  %v1774 = vpow.pop %v1773
  %v1775 = vmul.f32 %v1667, 1.442695
  %v1776 = vpow.pop %v1775
  %v1777 = vmul.f32 %v1668, 1.442695
  %v1778 = vpow.pop %v1777
  %v1779 = vmul.f32 %v1669, 1.442695
  %v1780 = vpow.pop %v1779
  %v1781 = vmul.f32 %v1670, 1.442695
  %v1782 = vpow.pop %v1781
  %v1783 = vmul.f32 %v1671, 1.442695
  %v1784 = vpow.pop %v1783
  %v1785 = vmul.f32 %v1672, 1.442695
  %v1786 = vpow.pop %v1785
  %v1787 = vmul.f32 %v1673, 1.442695
  %v1788 = vpow.pop %v1787
  %v1789 = vmul.f32 %v1674, 1.442695
  %v1790 = vpow.pop %v1789
  %v1791 = vmul.f32 %v1675, 1.442695
  %v1792 = vpow.pop %v1791
  %v1793 = vmul.f32 %v1676, 1.442695
  %v1794 = vpow.pop %v1793
  %v1795 = vmul.f32 %v1677, 1.442695
  %v1796 = vpow.pop %v1795
  %v1797 = vmul.f32 %v1678, 1.442695
  %v1798 = vpow.pop %v1797
  %v1799 = vmul.f32 %v1679, 1.442695
  %v1800 = vpow.pop %v1799
  %v1801 = vmul.f32 %v1680, 1.442695
  %v1802 = vpow.pop %v1801
  %v1803 = vmul.f32 %v1681, 1.442695
  %v1804 = vpow.pop %v1803
  %v1805 = vmul.f32 %v1682, 1.442695
  %v1806 = vpow.pop %v1805
  %v1807 = vmul.f32 %v1683, 1.442695
  %v1808 = vpow.pop %v1807
  %v1809 = vmul.f32 %v1684, 1.442695
  %v1810 = vpow.pop %v1809
  %v1811 = vmul.f32 %v1685, 1.442695
  %v1812 = vpow.pop %v1811
  %v1813 = vmul.f32 %v1686, 1.442695
  %v1814 = vpow.pop %v1813
  %1815 = vadd.xlane.f32.xlu0 %v1688
  %v1816 = vpop.xlane.xlu0 %1815
  %1817 = vadd.xlane.f32.xlu0 %v1690
  %v1818 = vpop.xlane.xlu0 %1817
  %1819 = vadd.xlane.f32.xlu0 %v1692
  %v1820 = vpop.xlane.xlu0 %1819
  %1821 = vadd.xlane.f32.xlu0 %v1694
  %v1822 = vpop.xlane.xlu0 %1821
  %1823 = vadd.xlane.f32.xlu0 %v1696
  %v1824 = vpop.xlane.xlu0 %1823
  %1825 = vadd.xlane.f32.xlu0 %v1698
  %v1826 = vpop.xlane.xlu0 %1825
  %1827 = vadd.xlane.f32.xlu0 %v1700
  %v1828 = vpop.xlane.xlu0 %1827
  %1829 = vadd.xlane.f32.xlu0 %v1702
  %v1830 = vpop.xlane.xlu0 %1829
  %1831 = vadd.xlane.f32.xlu0 %v1704
  %v1832 = vpop.xlane.xlu0 %1831
  %1833 = vadd.xlane.f32.xlu0 %v1706
  %v1834 = vpop.xlane.xlu0 %1833
  %1835 = vadd.xlane.f32.xlu0 %v1708
  %v1836 = vpop.xlane.xlu0 %1835
  %1837 = vadd.xlane.f32.xlu0 %v1710
  %v1838 = vpop.xlane.xlu0 %1837
  %1839 = vadd.xlane.f32.xlu0 %v1712
  %v1840 = vpop.xlane.xlu0 %1839
  %1841 = vadd.xlane.f32.xlu0 %v1714
  %v1842 = vpop.xlane.xlu0 %1841
  %1843 = vadd.xlane.f32.xlu0 %v1716
  %v1844 = vpop.xlane.xlu0 %1843
  %1845 = vadd.xlane.f32.xlu0 %v1718
  %v1846 = vpop.xlane.xlu0 %1845
  %1847 = vadd.xlane.f32.xlu0 %v1720
  %v1848 = vpop.xlane.xlu0 %1847
  %1849 = vadd.xlane.f32.xlu0 %v1722
  %v1850 = vpop.xlane.xlu0 %1849
  %1851 = vadd.xlane.f32.xlu0 %v1724
  %v1852 = vpop.xlane.xlu0 %1851
  %1853 = vadd.xlane.f32.xlu0 %v1726
  %v1854 = vpop.xlane.xlu0 %1853
  %1855 = vadd.xlane.f32.xlu0 %v1728
  %v1856 = vpop.xlane.xlu0 %1855
  %1857 = vadd.xlane.f32.xlu0 %v1730
  %v1858 = vpop.xlane.xlu0 %1857
  %1859 = vadd.xlane.f32.xlu0 %v1732
  %v1860 = vpop.xlane.xlu0 %1859
  %1861 = vadd.xlane.f32.xlu0 %v1734
  %v1862 = vpop.xlane.xlu0 %1861
  %1863 = vadd.xlane.f32.xlu0 %v1736
  %v1864 = vpop.xlane.xlu0 %1863
  %1865 = vadd.xlane.f32.xlu0 %v1738
  %v1866 = vpop.xlane.xlu0 %1865
  %1867 = vadd.xlane.f32.xlu0 %v1740
  %v1868 = vpop.xlane.xlu0 %1867
  %1869 = vadd.xlane.f32.xlu0 %v1742
  %v1870 = vpop.xlane.xlu0 %1869
  %1871 = vadd.xlane.f32.xlu0 %v1744
  %v1872 = vpop.xlane.xlu0 %1871
  %1873 = vadd.xlane.f32.xlu0 %v1746
  %v1874 = vpop.xlane.xlu0 %1873
  %1875 = vadd.xlane.f32.xlu0 %v1748
  %v1876 = vpop.xlane.xlu0 %1875
  %1877 = vadd.xlane.f32.xlu0 %v1750
  %v1878 = vpop.xlane.xlu0 %1877
  %1879 = vadd.xlane.f32.xlu0 %v1752
  %v1880 = vpop.xlane.xlu0 %1879
  %1881 = vadd.xlane.f32.xlu0 %v1754
  %v1882 = vpop.xlane.xlu0 %1881
  %1883 = vadd.xlane.f32.xlu0 %v1756
  %v1884 = vpop.xlane.xlu0 %1883
  %1885 = vadd.xlane.f32.xlu0 %v1758
  %v1886 = vpop.xlane.xlu0 %1885
  %1887 = vadd.xlane.f32.xlu0 %v1760
  %v1888 = vpop.xlane.xlu0 %1887
  %1889 = vadd.xlane.f32.xlu0 %v1762
  %v1890 = vpop.xlane.xlu0 %1889
  %1891 = vadd.xlane.f32.xlu0 %v1764
  %v1892 = vpop.xlane.xlu0 %1891
  %1893 = vadd.xlane.f32.xlu0 %v1766
  %v1894 = vpop.xlane.xlu0 %1893
  %1895 = vadd.xlane.f32.xlu0 %v1768
  %v1896 = vpop.xlane.xlu0 %1895
  %1897 = vadd.xlane.f32.xlu0 %v1770
  %v1898 = vpop.xlane.xlu0 %1897
  %1899 = vadd.xlane.f32.xlu0 %v1772
  %v1900 = vpop.xlane.xlu0 %1899
  %1901 = vadd.xlane.f32.xlu0 %v1774
  %v1902 = vpop.xlane.xlu0 %1901
  %1903 = vadd.xlane.f32.xlu0 %v1776
  %v1904 = vpop.xlane.xlu0 %1903
  %1905 = vadd.xlane.f32.xlu0 %v1778
  %v1906 = vpop.xlane.xlu0 %1905
  %1907 = vadd.xlane.f32.xlu0 %v1780
  %v1908 = vpop.xlane.xlu0 %1907
  %1909 = vadd.xlane.f32.xlu0 %v1782
  %v1910 = vpop.xlane.xlu0 %1909
  %1911 = vadd.xlane.f32.xlu0 %v1784
  %v1912 = vpop.xlane.xlu0 %1911
  %1913 = vadd.xlane.f32.xlu0 %v1786
  %v1914 = vpop.xlane.xlu0 %1913
  %1915 = vadd.xlane.f32.xlu0 %v1788
  %v1916 = vpop.xlane.xlu0 %1915
  %1917 = vadd.xlane.f32.xlu0 %v1790
  %v1918 = vpop.xlane.xlu0 %1917
  %1919 = vadd.xlane.f32.xlu0 %v1792
  %v1920 = vpop.xlane.xlu0 %1919
  %1921 = vadd.xlane.f32.xlu0 %v1794
  %v1922 = vpop.xlane.xlu0 %1921
  %1923 = vadd.xlane.f32.xlu0 %v1796
  %v1924 = vpop.xlane.xlu0 %1923
  %1925 = vadd.xlane.f32.xlu0 %v1798
  %v1926 = vpop.xlane.xlu0 %1925
  %1927 = vadd.xlane.f32.xlu0 %v1800
  %v1928 = vpop.xlane.xlu0 %1927
  %1929 = vadd.xlane.f32.xlu0 %v1802
  %v1930 = vpop.xlane.xlu0 %1929
  %1931 = vadd.xlane.f32.xlu0 %v1804
  %v1932 = vpop.xlane.xlu0 %1931
  %1933 = vadd.xlane.f32.xlu0 %v1806
  %v1934 = vpop.xlane.xlu0 %1933
  %1935 = vadd.xlane.f32.xlu0 %v1808
  %v1936 = vpop.xlane.xlu0 %1935
  %1937 = vadd.xlane.f32.xlu0 %v1810
  %v1938 = vpop.xlane.xlu0 %1937
  %1939 = vadd.xlane.f32.xlu0 %v1812
  %v1940 = vpop.xlane.xlu0 %1939
  %1941 = vadd.xlane.f32.xlu0 %v1814
  %v1942 = vpop.xlane.xlu0 %1941
  %v1943 = vlog2.pop %v1816
  %v1944 = vmul.f32 %v1943, 0.6931472
  %v1945 = vlog2.pop %v1818
  %v1946 = vmul.f32 %v1945, 0.6931472
  %v1947 = vlog2.pop %v1820
  %v1948 = vmul.f32 %v1947, 0.6931472
  %v1949 = vlog2.pop %v1822
  %v1950 = vmul.f32 %v1949, 0.6931472
  %v1951 = vlog2.pop %v1824
  %v1952 = vmul.f32 %v1951, 0.6931472
  %v1953 = vlog2.pop %v1826
  %v1954 = vmul.f32 %v1953, 0.6931472
  %v1955 = vlog2.pop %v1828
  %v1956 = vmul.f32 %v1955, 0.6931472
  %v1957 = vlog2.pop %v1830
  %v1958 = vmul.f32 %v1957, 0.6931472
  %v1959 = vlog2.pop %v1832
  %v1960 = vmul.f32 %v1959, 0.6931472
  %v1961 = vlog2.pop %v1834
  %v1962 = vmul.f32 %v1961, 0.6931472
  %v1963 = vlog2.pop %v1836
  %v1964 = vmul.f32 %v1963, 0.6931472
  %v1965 = vlog2.pop %v1838
  %v1966 = vmul.f32 %v1965, 0.6931472
  %v1967 = vlog2.pop %v1840
  %v1968 = vmul.f32 %v1967, 0.6931472
  %v1969 = vlog2.pop %v1842
  %v1970 = vmul.f32 %v1969, 0.6931472
  %v1971 = vlog2.pop %v1844
  %v1972 = vmul.f32 %v1971, 0.6931472
  %v1973 = vlog2.pop %v1846
  %v1974 = vmul.f32 %v1973, 0.6931472
  %v1975 = vlog2.pop %v1848
  %v1976 = vmul.f32 %v1975, 0.6931472
  %v1977 = vlog2.pop %v1850
  %v1978 = vmul.f32 %v1977, 0.6931472
  %v1979 = vlog2.pop %v1852
  %v1980 = vmul.f32 %v1979, 0.6931472
  %v1981 = vlog2.pop %v1854
  %v1982 = vmul.f32 %v1981, 0.6931472
  %v1983 = vlog2.pop %v1856
  %v1984 = vmul.f32 %v1983, 0.6931472
  %v1985 = vlog2.pop %v1858
  %v1986 = vmul.f32 %v1985, 0.6931472
  %v1987 = vlog2.pop %v1860
  %v1988 = vmul.f32 %v1987, 0.6931472
  %v1989 = vlog2.pop %v1862
  %v1990 = vmul.f32 %v1989, 0.6931472
  %v1991 = vlog2.pop %v1864
  %v1992 = vmul.f32 %v1991, 0.6931472
  %v1993 = vlog2.pop %v1866
  %v1994 = vmul.f32 %v1993, 0.6931472
  %v1995 = vlog2.pop %v1868
  %v1996 = vmul.f32 %v1995, 0.6931472
  %v1997 = vlog2.pop %v1870
  %v1998 = vmul.f32 %v1997, 0.6931472
  %v1999 = vlog2.pop %v1872
  %v2000 = vmul.f32 %v1999, 0.6931472
  %v2001 = vlog2.pop %v1874
  %v2002 = vmul.f32 %v2001, 0.6931472
  %v2003 = vlog2.pop %v1876
  %v2004 = vmul.f32 %v2003, 0.6931472
  %v2005 = vlog2.pop %v1878
  %v2006 = vmul.f32 %v2005, 0.6931472
  %v2007 = vlog2.pop %v1880
  %v2008 = vmul.f32 %v2007, 0.6931472
  %v2009 = vlog2.pop %v1882
  %v2010 = vmul.f32 %v2009, 0.6931472
  %v2011 = vlog2.pop %v1884
  %v2012 = vmul.f32 %v2011, 0.6931472
  %v2013 = vlog2.pop %v1886
  %v2014 = vmul.f32 %v2013, 0.6931472
  %v2015 = vlog2.pop %v1888
  %v2016 = vmul.f32 %v2015, 0.6931472
  %v2017 = vlog2.pop %v1890
  %v2018 = vmul.f32 %v2017, 0.6931472
  %v2019 = vlog2.pop %v1892
  %v2020 = vmul.f32 %v2019, 0.6931472
  %v2021 = vlog2.pop %v1894
  %v2022 = vmul.f32 %v2021, 0.6931472
  %v2023 = vlog2.pop %v1896
  %v2024 = vmul.f32 %v2023, 0.6931472
  %v2025 = vlog2.pop %v1898
  %v2026 = vmul.f32 %v2025, 0.6931472
  %v2027 = vlog2.pop %v1900
  %v2028 = vmul.f32 %v2027, 0.6931472
  %v2029 = vlog2.pop %v1902
  %v2030 = vmul.f32 %v2029, 0.6931472
  %v2031 = vlog2.pop %v1904
  %v2032 = vmul.f32 %v2031, 0.6931472
  %v2033 = vlog2.pop %v1906
  %v2034 = vmul.f32 %v2033, 0.6931472
  %v2035 = vlog2.pop %v1908
  %v2036 = vmul.f32 %v2035, 0.6931472
  %v2037 = vlog2.pop %v1910
  %v2038 = vmul.f32 %v2037, 0.6931472
  %v2039 = vlog2.pop %v1912
  %v2040 = vmul.f32 %v2039, 0.6931472
  %v2041 = vlog2.pop %v1914
  %v2042 = vmul.f32 %v2041, 0.6931472
  %v2043 = vlog2.pop %v1916
  %v2044 = vmul.f32 %v2043, 0.6931472
  %v2045 = vlog2.pop %v1918
  %v2046 = vmul.f32 %v2045, 0.6931472
  %v2047 = vlog2.pop %v1920
  %v2048 = vmul.f32 %v2047, 0.6931472
  %v2049 = vlog2.pop %v1922
  %v2050 = vmul.f32 %v2049, 0.6931472
  %v2051 = vlog2.pop %v1924
  %v2052 = vmul.f32 %v2051, 0.6931472
  %v2053 = vlog2.pop %v1926
  %v2054 = vmul.f32 %v2053, 0.6931472
  %v2055 = vlog2.pop %v1928
  %v2056 = vmul.f32 %v2055, 0.6931472
  %v2057 = vlog2.pop %v1930
  %v2058 = vmul.f32 %v2057, 0.6931472
  %v2059 = vlog2.pop %v1932
  %v2060 = vmul.f32 %v2059, 0.6931472
  %v2061 = vlog2.pop %v1934
  %v2062 = vmul.f32 %v2061, 0.6931472
  %v2063 = vlog2.pop %v1936
  %v2064 = vmul.f32 %v2063, 0.6931472
  %v2065 = vlog2.pop %v1938
  %v2066 = vmul.f32 %v2065, 0.6931472
  %v2067 = vlog2.pop %v1940
  %v2068 = vmul.f32 %v2067, 0.6931472
  %v2069 = vlog2.pop %v1942
  %v2070 = vmul.f32 %v2069, 0.6931472
  %v2071 = vsel %vm1431, %v1623, 0.0
  %v2072 = vsel %vm1432, %v1624, 0.0
  %v2073 = vsel %vm1433, %v1625, 0.0
  %v2074 = vsel %vm1434, %v1626, 0.0
  %v2075 = vsel %vm1435, %v1627, 0.0
  %v2076 = vsel %vm1436, %v1628, 0.0
  %v2077 = vsel %vm1437, %v1629, 0.0
  %v2078 = vsel %vm1438, %v1630, 0.0
  %v2079 = vsel %vm1439, %v1631, 0.0
  %v2080 = vsel %vm1440, %v1632, 0.0
  %v2081 = vsel %vm1441, %v1633, 0.0
  %v2082 = vsel %vm1442, %v1634, 0.0
  %v2083 = vsel %vm1443, %v1635, 0.0
  %v2084 = vsel %vm1444, %v1636, 0.0
  %v2085 = vsel %vm1445, %v1637, 0.0
  %v2086 = vsel %vm1446, %v1638, 0.0
  %v2087 = vsel %vm1447, %v1639, 0.0
  %v2088 = vsel %vm1448, %v1640, 0.0
  %v2089 = vsel %vm1449, %v1641, 0.0
  %v2090 = vsel %vm1450, %v1642, 0.0
  %v2091 = vsel %vm1451, %v1643, 0.0
  %v2092 = vsel %vm1452, %v1644, 0.0
  %v2093 = vsel %vm1453, %v1645, 0.0
  %v2094 = vsel %vm1454, %v1646, 0.0
  %v2095 = vsel %vm1455, %v1647, 0.0
  %v2096 = vsel %vm1456, %v1648, 0.0
  %v2097 = vsel %vm1457, %v1649, 0.0
  %v2098 = vsel %vm1458, %v1650, 0.0
  %v2099 = vsel %vm1459, %v1651, 0.0
  %v2100 = vsel %vm1460, %v1652, 0.0
  %v2101 = vsel %vm1461, %v1653, 0.0
  %v2102 = vsel %vm1462, %v1654, 0.0
  %v2103 = vsel %vm1463, %v1655, 0.0
  %v2104 = vsel %vm1464, %v1656, 0.0
  %v2105 = vsel %vm1465, %v1657, 0.0
  %v2106 = vsel %vm1466, %v1658, 0.0
  %v2107 = vsel %vm1467, %v1659, 0.0
  %v2108 = vsel %vm1468, %v1660, 0.0
  %v2109 = vsel %vm1469, %v1661, 0.0
  %v2110 = vsel %vm1470, %v1662, 0.0
  %v2111 = vsel %vm1471, %v1663, 0.0
  %v2112 = vsel %vm1472, %v1664, 0.0
  %v2113 = vsel %vm1473, %v1665, 0.0
  %v2114 = vsel %vm1474, %v1666, 0.0
  %v2115 = vsel %vm1475, %v1667, 0.0
  %v2116 = vsel %vm1476, %v1668, 0.0
  %v2117 = vsel %vm1477, %v1669, 0.0
  %v2118 = vsel %vm1478, %v1670, 0.0
  %v2119 = vsel %vm1479, %v1671, 0.0
  %v2120 = vsel %vm1480, %v1672, 0.0
  %v2121 = vsel %vm1481, %v1673, 0.0
  %v2122 = vsel %vm1482, %v1674, 0.0
  %v2123 = vsel %vm1483, %v1675, 0.0
  %v2124 = vsel %vm1484, %v1676, 0.0
  %v2125 = vsel %vm1485, %v1677, 0.0
  %v2126 = vsel %vm1486, %v1678, 0.0
  %v2127 = vsel %vm1487, %v1679, 0.0
  %v2128 = vsel %vm1488, %v1680, 0.0
  %v2129 = vsel %vm1489, %v1681, 0.0
  %v2130 = vsel %vm1490, %v1682, 0.0
  %v2131 = vsel %vm1491, %v1683, 0.0
  %v2132 = vsel %vm1492, %v1684, 0.0
  %v2133 = vsel %vm1493, %v1685, 0.0
  %v2134 = vsel %vm1494, %v1686, 0.0
  %2135 = vadd.xlane.f32.xlu0 %v2071
  %v2136 = vpop.xlane.xlu0 %2135
  %2137 = vadd.xlane.f32.xlu0 %v2072
  %v2138 = vpop.xlane.xlu0 %2137
  %2139 = vadd.xlane.f32.xlu0 %v2073
  %v2140 = vpop.xlane.xlu0 %2139
  %2141 = vadd.xlane.f32.xlu0 %v2074
  %v2142 = vpop.xlane.xlu0 %2141
  %2143 = vadd.xlane.f32.xlu0 %v2075
  %v2144 = vpop.xlane.xlu0 %2143
  %2145 = vadd.xlane.f32.xlu0 %v2076
  %v2146 = vpop.xlane.xlu0 %2145
  %2147 = vadd.xlane.f32.xlu0 %v2077
  %v2148 = vpop.xlane.xlu0 %2147
  %2149 = vadd.xlane.f32.xlu0 %v2078
  %v2150 = vpop.xlane.xlu0 %2149
  %2151 = vadd.xlane.f32.xlu0 %v2079
  %v2152 = vpop.xlane.xlu0 %2151
  %2153 = vadd.xlane.f32.xlu0 %v2080
  %v2154 = vpop.xlane.xlu0 %2153
  %2155 = vadd.xlane.f32.xlu0 %v2081
  %v2156 = vpop.xlane.xlu0 %2155
  %2157 = vadd.xlane.f32.xlu0 %v2082
  %v2158 = vpop.xlane.xlu0 %2157
  %2159 = vadd.xlane.f32.xlu0 %v2083
  %v2160 = vpop.xlane.xlu0 %2159
  %2161 = vadd.xlane.f32.xlu0 %v2084
  %v2162 = vpop.xlane.xlu0 %2161
  %2163 = vadd.xlane.f32.xlu0 %v2085
  %v2164 = vpop.xlane.xlu0 %2163
  %2165 = vadd.xlane.f32.xlu0 %v2086
  %v2166 = vpop.xlane.xlu0 %2165
  %2167 = vadd.xlane.f32.xlu0 %v2087
  %v2168 = vpop.xlane.xlu0 %2167
  %2169 = vadd.xlane.f32.xlu0 %v2088
  %v2170 = vpop.xlane.xlu0 %2169
  %2171 = vadd.xlane.f32.xlu0 %v2089
  %v2172 = vpop.xlane.xlu0 %2171
  %2173 = vadd.xlane.f32.xlu0 %v2090
  %v2174 = vpop.xlane.xlu0 %2173
  %2175 = vadd.xlane.f32.xlu0 %v2091
  %v2176 = vpop.xlane.xlu0 %2175
  %2177 = vadd.xlane.f32.xlu0 %v2092
  %v2178 = vpop.xlane.xlu0 %2177
  %2179 = vadd.xlane.f32.xlu0 %v2093
  %v2180 = vpop.xlane.xlu0 %2179
  %2181 = vadd.xlane.f32.xlu0 %v2094
  %v2182 = vpop.xlane.xlu0 %2181
  %2183 = vadd.xlane.f32.xlu0 %v2095
  %v2184 = vpop.xlane.xlu0 %2183
  %2185 = vadd.xlane.f32.xlu0 %v2096
  %v2186 = vpop.xlane.xlu0 %2185
  %2187 = vadd.xlane.f32.xlu0 %v2097
  %v2188 = vpop.xlane.xlu0 %2187
  %2189 = vadd.xlane.f32.xlu0 %v2098
  %v2190 = vpop.xlane.xlu0 %2189
  %2191 = vadd.xlane.f32.xlu0 %v2099
  %v2192 = vpop.xlane.xlu0 %2191
  %2193 = vadd.xlane.f32.xlu0 %v2100
  %v2194 = vpop.xlane.xlu0 %2193
  %2195 = vadd.xlane.f32.xlu0 %v2101
  %v2196 = vpop.xlane.xlu0 %2195
  %2197 = vadd.xlane.f32.xlu0 %v2102
  %v2198 = vpop.xlane.xlu0 %2197
  %2199 = vadd.xlane.f32.xlu0 %v2103
  %v2200 = vpop.xlane.xlu0 %2199
  %2201 = vadd.xlane.f32.xlu0 %v2104
  %v2202 = vpop.xlane.xlu0 %2201
  %2203 = vadd.xlane.f32.xlu0 %v2105
  %v2204 = vpop.xlane.xlu0 %2203
  %2205 = vadd.xlane.f32.xlu0 %v2106
  %v2206 = vpop.xlane.xlu0 %2205
  %2207 = vadd.xlane.f32.xlu0 %v2107
  %v2208 = vpop.xlane.xlu0 %2207
  %2209 = vadd.xlane.f32.xlu0 %v2108
  %v2210 = vpop.xlane.xlu0 %2209
  %2211 = vadd.xlane.f32.xlu0 %v2109
  %v2212 = vpop.xlane.xlu0 %2211
  %2213 = vadd.xlane.f32.xlu0 %v2110
  %v2214 = vpop.xlane.xlu0 %2213
  %2215 = vadd.xlane.f32.xlu0 %v2111
  %v2216 = vpop.xlane.xlu0 %2215
  %2217 = vadd.xlane.f32.xlu0 %v2112
  %v2218 = vpop.xlane.xlu0 %2217
  %2219 = vadd.xlane.f32.xlu0 %v2113
  %v2220 = vpop.xlane.xlu0 %2219
  %2221 = vadd.xlane.f32.xlu0 %v2114
  %v2222 = vpop.xlane.xlu0 %2221
  %2223 = vadd.xlane.f32.xlu0 %v2115
  %v2224 = vpop.xlane.xlu0 %2223
  %2225 = vadd.xlane.f32.xlu0 %v2116
  %v2226 = vpop.xlane.xlu0 %2225
  %2227 = vadd.xlane.f32.xlu0 %v2117
  %v2228 = vpop.xlane.xlu0 %2227
  %2229 = vadd.xlane.f32.xlu0 %v2118
  %v2230 = vpop.xlane.xlu0 %2229
  %2231 = vadd.xlane.f32.xlu0 %v2119
  %v2232 = vpop.xlane.xlu0 %2231
  %2233 = vadd.xlane.f32.xlu0 %v2120
  %v2234 = vpop.xlane.xlu0 %2233
  %2235 = vadd.xlane.f32.xlu0 %v2121
  %v2236 = vpop.xlane.xlu0 %2235
  %2237 = vadd.xlane.f32.xlu0 %v2122
  %v2238 = vpop.xlane.xlu0 %2237
  %2239 = vadd.xlane.f32.xlu0 %v2123
  %v2240 = vpop.xlane.xlu0 %2239
  %2241 = vadd.xlane.f32.xlu0 %v2124
  %v2242 = vpop.xlane.xlu0 %2241
  %2243 = vadd.xlane.f32.xlu0 %v2125
  %v2244 = vpop.xlane.xlu0 %2243
  %2245 = vadd.xlane.f32.xlu0 %v2126
  %v2246 = vpop.xlane.xlu0 %2245
  %2247 = vadd.xlane.f32.xlu0 %v2127
  %v2248 = vpop.xlane.xlu0 %2247
  %2249 = vadd.xlane.f32.xlu0 %v2128
  %v2250 = vpop.xlane.xlu0 %2249
  %2251 = vadd.xlane.f32.xlu0 %v2129
  %v2252 = vpop.xlane.xlu0 %2251
  %2253 = vadd.xlane.f32.xlu0 %v2130
  %v2254 = vpop.xlane.xlu0 %2253
  %2255 = vadd.xlane.f32.xlu0 %v2131
  %v2256 = vpop.xlane.xlu0 %2255
  %2257 = vadd.xlane.f32.xlu0 %v2132
  %v2258 = vpop.xlane.xlu0 %2257
  %2259 = vadd.xlane.f32.xlu0 %v2133
  %v2260 = vpop.xlane.xlu0 %2259
  %2261 = vadd.xlane.f32.xlu0 %v2134
  %v2262 = vpop.xlane.xlu0 %2261
  %s2263 = sadd.s32 0, 0
  %s2264 = smul.u32 %s2263, 512
  %v2265 = vlaneseq
  %v2266 = vshrl.u32 %v2265, 7
  %v2267 = vadd.s32 %v2266, 8
  %v2268 = vadd.s32 %v2266, 16
  %v2269 = vadd.s32 %v2266, 24
  %v2270 = vadd.s32 %v2266, 32
  %v2271 = vadd.s32 %v2266, 40
  %v2272 = vadd.s32 %v2266, 48
  %v2273 = vadd.s32 %v2266, 56
  %v2274 = vadd.s32 %v2266, 64
  %v2275 = vadd.s32 %v2266, 72
  %v2276 = vadd.s32 %v2266, 80
  %v2277 = vadd.s32 %v2266, 88
  %v2278 = vadd.s32 %v2266, 96
  %v2279 = vadd.s32 %v2266, 104
  %v2280 = vadd.s32 %v2266, 112
  %v2281 = vadd.s32 %v2266, 120
  %v2282 = vadd.s32 %v2266, 128
  %v2283 = vadd.s32 %v2266, 136
  %v2284 = vadd.s32 %v2266, 144
  %v2285 = vadd.s32 %v2266, 152
  %v2286 = vadd.s32 %v2266, 160
  %v2287 = vadd.s32 %v2266, 168
  %v2288 = vadd.s32 %v2266, 176
  %v2289 = vadd.s32 %v2266, 184
  %v2290 = vadd.s32 %v2266, 192
  %v2291 = vadd.s32 %v2266, 200
  %v2292 = vadd.s32 %v2266, 208
  %v2293 = vadd.s32 %v2266, 216
  %v2294 = vadd.s32 %v2266, 224
  %v2295 = vadd.s32 %v2266, 232
  %v2296 = vadd.s32 %v2266, 240
  %v2297 = vadd.s32 %v2266, 248
  %v2298 = vadd.s32 %v2266, 256
  %v2299 = vadd.s32 %v2266, 264
  %v2300 = vadd.s32 %v2266, 272
  %v2301 = vadd.s32 %v2266, 280
  %v2302 = vadd.s32 %v2266, 288
  %v2303 = vadd.s32 %v2266, 296
  %v2304 = vadd.s32 %v2266, 304
  %v2305 = vadd.s32 %v2266, 312
  %v2306 = vadd.s32 %v2266, 320
  %v2307 = vadd.s32 %v2266, 328
  %v2308 = vadd.s32 %v2266, 336
  %v2309 = vadd.s32 %v2266, 344
  %v2310 = vadd.s32 %v2266, 352
  %v2311 = vadd.s32 %v2266, 360
  %v2312 = vadd.s32 %v2266, 368
  %v2313 = vadd.s32 %v2266, 376
  %v2314 = vadd.s32 %v2266, 384
  %v2315 = vadd.s32 %v2266, 392
  %v2316 = vadd.s32 %v2266, 400
  %v2317 = vadd.s32 %v2266, 408
  %v2318 = vadd.s32 %v2266, 416
  %v2319 = vadd.s32 %v2266, 424
  %v2320 = vadd.s32 %v2266, 432
  %v2321 = vadd.s32 %v2266, 440
  %v2322 = vadd.s32 %v2266, 448
  %v2323 = vadd.s32 %v2266, 456
  %v2324 = vadd.s32 %v2266, 464
  %v2325 = vadd.s32 %v2266, 472
  %v2326 = vadd.s32 %v2266, 480
  %v2327 = vadd.s32 %v2266, 488
  %v2328 = vadd.s32 %v2266, 496
  %v2329 = vadd.s32 %v2266, 504
  %v2330 = vstv %s2264
  %v2331 = vadd.s32 %v2330, %v2266
  %v2332 = vadd.s32 %v2330, %v2267
  %v2333 = vadd.s32 %v2330, %v2268
  %v2334 = vadd.s32 %v2330, %v2269
  %v2335 = vadd.s32 %v2330, %v2270
  %v2336 = vadd.s32 %v2330, %v2271
  %v2337 = vadd.s32 %v2330, %v2272
  %v2338 = vadd.s32 %v2330, %v2273
  %v2339 = vadd.s32 %v2330, %v2274
  %v2340 = vadd.s32 %v2330, %v2275
  %v2341 = vadd.s32 %v2330, %v2276
  %v2342 = vadd.s32 %v2330, %v2277
  %v2343 = vadd.s32 %v2330, %v2278
  %v2344 = vadd.s32 %v2330, %v2279
  %v2345 = vadd.s32 %v2330, %v2280
  %v2346 = vadd.s32 %v2330, %v2281
  %v2347 = vadd.s32 %v2330, %v2282
  %v2348 = vadd.s32 %v2330, %v2283
  %v2349 = vadd.s32 %v2330, %v2284
  %v2350 = vadd.s32 %v2330, %v2285
  %v2351 = vadd.s32 %v2330, %v2286
  %v2352 = vadd.s32 %v2330, %v2287
  %v2353 = vadd.s32 %v2330, %v2288
  %v2354 = vadd.s32 %v2330, %v2289
  %v2355 = vadd.s32 %v2330, %v2290
  %v2356 = vadd.s32 %v2330, %v2291
  %v2357 = vadd.s32 %v2330, %v2292
  %v2358 = vadd.s32 %v2330, %v2293
  %v2359 = vadd.s32 %v2330, %v2294
  %v2360 = vadd.s32 %v2330, %v2295
  %v2361 = vadd.s32 %v2330, %v2296
  %v2362 = vadd.s32 %v2330, %v2297
  %v2363 = vadd.s32 %v2330, %v2298
  %v2364 = vadd.s32 %v2330, %v2299
  %v2365 = vadd.s32 %v2330, %v2300
  %v2366 = vadd.s32 %v2330, %v2301
  %v2367 = vadd.s32 %v2330, %v2302
  %v2368 = vadd.s32 %v2330, %v2303
  %v2369 = vadd.s32 %v2330, %v2304
  %v2370 = vadd.s32 %v2330, %v2305
  %v2371 = vadd.s32 %v2330, %v2306
  %v2372 = vadd.s32 %v2330, %v2307
  %v2373 = vadd.s32 %v2330, %v2308
  %v2374 = vadd.s32 %v2330, %v2309
  %v2375 = vadd.s32 %v2330, %v2310
  %v2376 = vadd.s32 %v2330, %v2311
  %v2377 = vadd.s32 %v2330, %v2312
  %v2378 = vadd.s32 %v2330, %v2313
  %v2379 = vadd.s32 %v2330, %v2314
  %v2380 = vadd.s32 %v2330, %v2315
  %v2381 = vadd.s32 %v2330, %v2316
  %v2382 = vadd.s32 %v2330, %v2317
  %v2383 = vadd.s32 %v2330, %v2318
  %v2384 = vadd.s32 %v2330, %v2319
  %v2385 = vadd.s32 %v2330, %v2320
  %v2386 = vadd.s32 %v2330, %v2321
  %v2387 = vadd.s32 %v2330, %v2322
  %v2388 = vadd.s32 %v2330, %v2323
  %v2389 = vadd.s32 %v2330, %v2324
  %v2390 = vadd.s32 %v2330, %v2325
  %v2391 = vadd.s32 %v2330, %v2326
  %v2392 = vadd.s32 %v2330, %v2327
  %v2393 = vadd.s32 %v2330, %v2328
  %v2394 = vadd.s32 %v2330, %v2329
  %vm2395 = vcmp.lt.s32.totalorder %v2331, 512
  %vm2396 = vcmp.lt.s32.totalorder %v2332, 512
  %vm2397 = vcmp.lt.s32.totalorder %v2333, 512
  %vm2398 = vcmp.lt.s32.totalorder %v2334, 512
  %vm2399 = vcmp.lt.s32.totalorder %v2335, 512
  %vm2400 = vcmp.lt.s32.totalorder %v2336, 512
  %vm2401 = vcmp.lt.s32.totalorder %v2337, 512
  %vm2402 = vcmp.lt.s32.totalorder %v2338, 512
  %vm2403 = vcmp.lt.s32.totalorder %v2339, 512
  %vm2404 = vcmp.lt.s32.totalorder %v2340, 512
  %vm2405 = vcmp.lt.s32.totalorder %v2341, 512
  %vm2406 = vcmp.lt.s32.totalorder %v2342, 512
  %vm2407 = vcmp.lt.s32.totalorder %v2343, 512
  %vm2408 = vcmp.lt.s32.totalorder %v2344, 512
  %vm2409 = vcmp.lt.s32.totalorder %v2345, 512
  %vm2410 = vcmp.lt.s32.totalorder %v2346, 512
  %vm2411 = vcmp.lt.s32.totalorder %v2347, 512
  %vm2412 = vcmp.lt.s32.totalorder %v2348, 512
  %vm2413 = vcmp.lt.s32.totalorder %v2349, 512
  %vm2414 = vcmp.lt.s32.totalorder %v2350, 512
  %vm2415 = vcmp.lt.s32.totalorder %v2351, 512
  %vm2416 = vcmp.lt.s32.totalorder %v2352, 512
  %vm2417 = vcmp.lt.s32.totalorder %v2353, 512
  %vm2418 = vcmp.lt.s32.totalorder %v2354, 512
  %vm2419 = vcmp.lt.s32.totalorder %v2355, 512
  %vm2420 = vcmp.lt.s32.totalorder %v2356, 512
  %vm2421 = vcmp.lt.s32.totalorder %v2357, 512
  %vm2422 = vcmp.lt.s32.totalorder %v2358, 512
  %vm2423 = vcmp.lt.s32.totalorder %v2359, 512
  %vm2424 = vcmp.lt.s32.totalorder %v2360, 512
  %vm2425 = vcmp.lt.s32.totalorder %v2361, 512
  %vm2426 = vcmp.lt.s32.totalorder %v2362, 512
  %vm2427 = vcmp.lt.s32.totalorder %v2363, 512
  %vm2428 = vcmp.lt.s32.totalorder %v2364, 512
  %vm2429 = vcmp.lt.s32.totalorder %v2365, 512
  %vm2430 = vcmp.lt.s32.totalorder %v2366, 512
  %vm2431 = vcmp.lt.s32.totalorder %v2367, 512
  %vm2432 = vcmp.lt.s32.totalorder %v2368, 512
  %vm2433 = vcmp.lt.s32.totalorder %v2369, 512
  %vm2434 = vcmp.lt.s32.totalorder %v2370, 512
  %vm2435 = vcmp.lt.s32.totalorder %v2371, 512
  %vm2436 = vcmp.lt.s32.totalorder %v2372, 512
  %vm2437 = vcmp.lt.s32.totalorder %v2373, 512
  %vm2438 = vcmp.lt.s32.totalorder %v2374, 512
  %vm2439 = vcmp.lt.s32.totalorder %v2375, 512
  %vm2440 = vcmp.lt.s32.totalorder %v2376, 512
  %vm2441 = vcmp.lt.s32.totalorder %v2377, 512
  %vm2442 = vcmp.lt.s32.totalorder %v2378, 512
  %vm2443 = vcmp.lt.s32.totalorder %v2379, 512
  %vm2444 = vcmp.lt.s32.totalorder %v2380, 512
  %vm2445 = vcmp.lt.s32.totalorder %v2381, 512
  %vm2446 = vcmp.lt.s32.totalorder %v2382, 512
  %vm2447 = vcmp.lt.s32.totalorder %v2383, 512
  %vm2448 = vcmp.lt.s32.totalorder %v2384, 512
  %vm2449 = vcmp.lt.s32.totalorder %v2385, 512
  %vm2450 = vcmp.lt.s32.totalorder %v2386, 512
  %vm2451 = vcmp.lt.s32.totalorder %v2387, 512
  %vm2452 = vcmp.lt.s32.totalorder %v2388, 512
  %vm2453 = vcmp.lt.s32.totalorder %v2389, 512
  %vm2454 = vcmp.lt.s32.totalorder %v2390, 512
  %vm2455 = vcmp.lt.s32.totalorder %v2391, 512
  %vm2456 = vcmp.lt.s32.totalorder %v2392, 512
  %vm2457 = vcmp.lt.s32.totalorder %v2393, 512
  %vm2458 = vcmp.lt.s32.totalorder %v2394, 512
  %v2459 = vsel %vm2395, 1, 0
  %v2460 = vsel %vm2396, 1, 0
  %v2461 = vsel %vm2397, 1, 0
  %v2462 = vsel %vm2398, 1, 0
  %v2463 = vsel %vm2399, 1, 0
  %v2464 = vsel %vm2400, 1, 0
  %v2465 = vsel %vm2401, 1, 0
  %v2466 = vsel %vm2402, 1, 0
  %v2467 = vsel %vm2403, 1, 0
  %v2468 = vsel %vm2404, 1, 0
  %v2469 = vsel %vm2405, 1, 0
  %v2470 = vsel %vm2406, 1, 0
  %v2471 = vsel %vm2407, 1, 0
  %v2472 = vsel %vm2408, 1, 0
  %v2473 = vsel %vm2409, 1, 0
  %v2474 = vsel %vm2410, 1, 0
  %v2475 = vsel %vm2411, 1, 0
  %v2476 = vsel %vm2412, 1, 0
  %v2477 = vsel %vm2413, 1, 0
  %v2478 = vsel %vm2414, 1, 0
  %v2479 = vsel %vm2415, 1, 0
  %v2480 = vsel %vm2416, 1, 0
  %v2481 = vsel %vm2417, 1, 0
  %v2482 = vsel %vm2418, 1, 0
  %v2483 = vsel %vm2419, 1, 0
  %v2484 = vsel %vm2420, 1, 0
  %v2485 = vsel %vm2421, 1, 0
  %v2486 = vsel %vm2422, 1, 0
  %v2487 = vsel %vm2423, 1, 0
  %v2488 = vsel %vm2424, 1, 0
  %v2489 = vsel %vm2425, 1, 0
  %v2490 = vsel %vm2426, 1, 0
  %v2491 = vsel %vm2427, 1, 0
  %v2492 = vsel %vm2428, 1, 0
  %v2493 = vsel %vm2429, 1, 0
  %v2494 = vsel %vm2430, 1, 0
  %v2495 = vsel %vm2431, 1, 0
  %v2496 = vsel %vm2432, 1, 0
  %v2497 = vsel %vm2433, 1, 0
  %v2498 = vsel %vm2434, 1, 0
  %v2499 = vsel %vm2435, 1, 0
  %v2500 = vsel %vm2436, 1, 0
  %v2501 = vsel %vm2437, 1, 0
  %v2502 = vsel %vm2438, 1, 0
  %v2503 = vsel %vm2439, 1, 0
  %v2504 = vsel %vm2440, 1, 0
  %v2505 = vsel %vm2441, 1, 0
  %v2506 = vsel %vm2442, 1, 0
  %v2507 = vsel %vm2443, 1, 0
  %v2508 = vsel %vm2444, 1, 0
  %v2509 = vsel %vm2445, 1, 0
  %v2510 = vsel %vm2446, 1, 0
  %v2511 = vsel %vm2447, 1, 0
  %v2512 = vsel %vm2448, 1, 0
  %v2513 = vsel %vm2449, 1, 0
  %v2514 = vsel %vm2450, 1, 0
  %v2515 = vsel %vm2451, 1, 0
  %v2516 = vsel %vm2452, 1, 0
  %v2517 = vsel %vm2453, 1, 0
  %v2518 = vsel %vm2454, 1, 0
  %v2519 = vsel %vm2455, 1, 0
  %v2520 = vsel %vm2456, 1, 0
  %v2521 = vsel %vm2457, 1, 0
  %v2522 = vsel %vm2458, 1, 0
  %v2523 = vcvt.s32.f32 %v2459
  %v2524 = vcvt.s32.f32 %v2460
  %v2525 = vcvt.s32.f32 %v2461
  %v2526 = vcvt.s32.f32 %v2462
  %v2527 = vcvt.s32.f32 %v2463
  %v2528 = vcvt.s32.f32 %v2464
  %v2529 = vcvt.s32.f32 %v2465
  %v2530 = vcvt.s32.f32 %v2466
  %v2531 = vcvt.s32.f32 %v2467
  %v2532 = vcvt.s32.f32 %v2468
  %v2533 = vcvt.s32.f32 %v2469
  %v2534 = vcvt.s32.f32 %v2470
  %v2535 = vcvt.s32.f32 %v2471
  %v2536 = vcvt.s32.f32 %v2472
  %v2537 = vcvt.s32.f32 %v2473
  %v2538 = vcvt.s32.f32 %v2474
  %v2539 = vcvt.s32.f32 %v2475
  %v2540 = vcvt.s32.f32 %v2476
  %v2541 = vcvt.s32.f32 %v2477
  %v2542 = vcvt.s32.f32 %v2478
  %v2543 = vcvt.s32.f32 %v2479
  %v2544 = vcvt.s32.f32 %v2480
  %v2545 = vcvt.s32.f32 %v2481
  %v2546 = vcvt.s32.f32 %v2482
  %v2547 = vcvt.s32.f32 %v2483
  %v2548 = vcvt.s32.f32 %v2484
  %v2549 = vcvt.s32.f32 %v2485
  %v2550 = vcvt.s32.f32 %v2486
  %v2551 = vcvt.s32.f32 %v2487
  %v2552 = vcvt.s32.f32 %v2488
  %v2553 = vcvt.s32.f32 %v2489
  %v2554 = vcvt.s32.f32 %v2490
  %v2555 = vcvt.s32.f32 %v2491
  %v2556 = vcvt.s32.f32 %v2492
  %v2557 = vcvt.s32.f32 %v2493
  %v2558 = vcvt.s32.f32 %v2494
  %v2559 = vcvt.s32.f32 %v2495
  %v2560 = vcvt.s32.f32 %v2496
  %v2561 = vcvt.s32.f32 %v2497
  %v2562 = vcvt.s32.f32 %v2498
  %v2563 = vcvt.s32.f32 %v2499
  %v2564 = vcvt.s32.f32 %v2500
  %v2565 = vcvt.s32.f32 %v2501
  %v2566 = vcvt.s32.f32 %v2502
  %v2567 = vcvt.s32.f32 %v2503
  %v2568 = vcvt.s32.f32 %v2504
  %v2569 = vcvt.s32.f32 %v2505
  %v2570 = vcvt.s32.f32 %v2506
  %v2571 = vcvt.s32.f32 %v2507
  %v2572 = vcvt.s32.f32 %v2508
  %v2573 = vcvt.s32.f32 %v2509
  %v2574 = vcvt.s32.f32 %v2510
  %v2575 = vcvt.s32.f32 %v2511
  %v2576 = vcvt.s32.f32 %v2512
  %v2577 = vcvt.s32.f32 %v2513
  %v2578 = vcvt.s32.f32 %v2514
  %v2579 = vcvt.s32.f32 %v2515
  %v2580 = vcvt.s32.f32 %v2516
  %v2581 = vcvt.s32.f32 %v2517
  %v2582 = vcvt.s32.f32 %v2518
  %v2583 = vcvt.s32.f32 %v2519
  %v2584 = vcvt.s32.f32 %v2520
  %v2585 = vcvt.s32.f32 %v2521
  %v2586 = vcvt.s32.f32 %v2522
  %v2587 = vsub.f32 %v1944, %v2136
  %v2588 = vsub.f32 %v1946, %v2138
  %v2589 = vsub.f32 %v1948, %v2140
  %v2590 = vsub.f32 %v1950, %v2142
  %v2591 = vsub.f32 %v1952, %v2144
  %v2592 = vsub.f32 %v1954, %v2146
  %v2593 = vsub.f32 %v1956, %v2148
  %v2594 = vsub.f32 %v1958, %v2150
  %v2595 = vsub.f32 %v1960, %v2152
  %v2596 = vsub.f32 %v1962, %v2154
  %v2597 = vsub.f32 %v1964, %v2156
  %v2598 = vsub.f32 %v1966, %v2158
  %v2599 = vsub.f32 %v1968, %v2160
  %v2600 = vsub.f32 %v1970, %v2162
  %v2601 = vsub.f32 %v1972, %v2164
  %v2602 = vsub.f32 %v1974, %v2166
  %v2603 = vsub.f32 %v1976, %v2168
  %v2604 = vsub.f32 %v1978, %v2170
  %v2605 = vsub.f32 %v1980, %v2172
  %v2606 = vsub.f32 %v1982, %v2174
  %v2607 = vsub.f32 %v1984, %v2176
  %v2608 = vsub.f32 %v1986, %v2178
  %v2609 = vsub.f32 %v1988, %v2180
  %v2610 = vsub.f32 %v1990, %v2182
  %v2611 = vsub.f32 %v1992, %v2184
  %v2612 = vsub.f32 %v1994, %v2186
  %v2613 = vsub.f32 %v1996, %v2188
  %v2614 = vsub.f32 %v1998, %v2190
  %v2615 = vsub.f32 %v2000, %v2192
  %v2616 = vsub.f32 %v2002, %v2194
  %v2617 = vsub.f32 %v2004, %v2196
  %v2618 = vsub.f32 %v2006, %v2198
  %v2619 = vsub.f32 %v2008, %v2200
  %v2620 = vsub.f32 %v2010, %v2202
  %v2621 = vsub.f32 %v2012, %v2204
  %v2622 = vsub.f32 %v2014, %v2206
  %v2623 = vsub.f32 %v2016, %v2208
  %v2624 = vsub.f32 %v2018, %v2210
  %v2625 = vsub.f32 %v2020, %v2212
  %v2626 = vsub.f32 %v2022, %v2214
  %v2627 = vsub.f32 %v2024, %v2216
  %v2628 = vsub.f32 %v2026, %v2218
  %v2629 = vsub.f32 %v2028, %v2220
  %v2630 = vsub.f32 %v2030, %v2222
  %v2631 = vsub.f32 %v2032, %v2224
  %v2632 = vsub.f32 %v2034, %v2226
  %v2633 = vsub.f32 %v2036, %v2228
  %v2634 = vsub.f32 %v2038, %v2230
  %v2635 = vsub.f32 %v2040, %v2232
  %v2636 = vsub.f32 %v2042, %v2234
  %v2637 = vsub.f32 %v2044, %v2236
  %v2638 = vsub.f32 %v2046, %v2238
  %v2639 = vsub.f32 %v2048, %v2240
  %v2640 = vsub.f32 %v2050, %v2242
  %v2641 = vsub.f32 %v2052, %v2244
  %v2642 = vsub.f32 %v2054, %v2246
  %v2643 = vsub.f32 %v2056, %v2248
  %v2644 = vsub.f32 %v2058, %v2250
  %v2645 = vsub.f32 %v2060, %v2252
  %v2646 = vsub.f32 %v2062, %v2254
  %v2647 = vsub.f32 %v2064, %v2256
  %v2648 = vsub.f32 %v2066, %v2258
  %v2649 = vsub.f32 %v2068, %v2260
  %v2650 = vsub.f32 %v2070, %v2262
  %v2651 = vmul.f32 %v2587, %v2523
  %v2652 = vmul.f32 %v2588, %v2524
  %v2653 = vmul.f32 %v2589, %v2525
  %v2654 = vmul.f32 %v2590, %v2526
  %v2655 = vmul.f32 %v2591, %v2527
  %v2656 = vmul.f32 %v2592, %v2528
  %v2657 = vmul.f32 %v2593, %v2529
  %v2658 = vmul.f32 %v2594, %v2530
  %v2659 = vmul.f32 %v2595, %v2531
  %v2660 = vmul.f32 %v2596, %v2532
  %v2661 = vmul.f32 %v2597, %v2533
  %v2662 = vmul.f32 %v2598, %v2534
  %v2663 = vmul.f32 %v2599, %v2535
  %v2664 = vmul.f32 %v2600, %v2536
  %v2665 = vmul.f32 %v2601, %v2537
  %v2666 = vmul.f32 %v2602, %v2538
  %v2667 = vmul.f32 %v2603, %v2539
  %v2668 = vmul.f32 %v2604, %v2540
  %v2669 = vmul.f32 %v2605, %v2541
  %v2670 = vmul.f32 %v2606, %v2542
  %v2671 = vmul.f32 %v2607, %v2543
  %v2672 = vmul.f32 %v2608, %v2544
  %v2673 = vmul.f32 %v2609, %v2545
  %v2674 = vmul.f32 %v2610, %v2546
  %v2675 = vmul.f32 %v2611, %v2547
  %v2676 = vmul.f32 %v2612, %v2548
  %v2677 = vmul.f32 %v2613, %v2549
  %v2678 = vmul.f32 %v2614, %v2550
  %v2679 = vmul.f32 %v2615, %v2551
  %v2680 = vmul.f32 %v2616, %v2552
  %v2681 = vmul.f32 %v2617, %v2553
  %v2682 = vmul.f32 %v2618, %v2554
  %v2683 = vmul.f32 %v2619, %v2555
  %v2684 = vmul.f32 %v2620, %v2556
  %v2685 = vmul.f32 %v2621, %v2557
  %v2686 = vmul.f32 %v2622, %v2558
  %v2687 = vmul.f32 %v2623, %v2559
  %v2688 = vmul.f32 %v2624, %v2560
  %v2689 = vmul.f32 %v2625, %v2561
  %v2690 = vmul.f32 %v2626, %v2562
  %v2691 = vmul.f32 %v2627, %v2563
  %v2692 = vmul.f32 %v2628, %v2564
  %v2693 = vmul.f32 %v2629, %v2565
  %v2694 = vmul.f32 %v2630, %v2566
  %v2695 = vmul.f32 %v2631, %v2567
  %v2696 = vmul.f32 %v2632, %v2568
  %v2697 = vmul.f32 %v2633, %v2569
  %v2698 = vmul.f32 %v2634, %v2570
  %v2699 = vmul.f32 %v2635, %v2571
  %v2700 = vmul.f32 %v2636, %v2572
  %v2701 = vmul.f32 %v2637, %v2573
  %v2702 = vmul.f32 %v2638, %v2574
  %v2703 = vmul.f32 %v2639, %v2575
  %v2704 = vmul.f32 %v2640, %v2576
  %v2705 = vmul.f32 %v2641, %v2577
  %v2706 = vmul.f32 %v2642, %v2578
  %v2707 = vmul.f32 %v2643, %v2579
  %v2708 = vmul.f32 %v2644, %v2580
  %v2709 = vmul.f32 %v2645, %v2581
  %v2710 = vmul.f32 %v2646, %v2582
  %v2711 = vmul.f32 %v2647, %v2583
  %v2712 = vmul.f32 %v2648, %v2584
  %v2713 = vmul.f32 %v2649, %v2585
  %v2714 = vmul.f32 %v2650, %v2586
  %vm2715 = vcmp.ge.s32.totalorder %v1173, 0
  %vm2716 = vcmp.ge.s32.totalorder %v1174, 0
  %vm2717 = vcmp.ge.s32.totalorder %v1175, 0
  %vm2718 = vcmp.ge.s32.totalorder %v1176, 0
  %vm2719 = vcmp.ge.s32.totalorder %v1177, 0
  %vm2720 = vcmp.ge.s32.totalorder %v1178, 0
  %vm2721 = vcmp.ge.s32.totalorder %v1179, 0
  %vm2722 = vcmp.ge.s32.totalorder %v1180, 0
  %vm2723 = vcmp.ge.s32.totalorder %v1181, 0
  %vm2724 = vcmp.ge.s32.totalorder %v1182, 0
  %vm2725 = vcmp.ge.s32.totalorder %v1183, 0
  %vm2726 = vcmp.ge.s32.totalorder %v1184, 0
  %vm2727 = vcmp.ge.s32.totalorder %v1185, 0
  %vm2728 = vcmp.ge.s32.totalorder %v1186, 0
  %vm2729 = vcmp.ge.s32.totalorder %v1187, 0
  %vm2730 = vcmp.ge.s32.totalorder %v1188, 0
  %vm2731 = vcmp.ge.s32.totalorder %v1189, 0
  %vm2732 = vcmp.ge.s32.totalorder %v1190, 0
  %vm2733 = vcmp.ge.s32.totalorder %v1191, 0
  %vm2734 = vcmp.ge.s32.totalorder %v1192, 0
  %vm2735 = vcmp.ge.s32.totalorder %v1193, 0
  %vm2736 = vcmp.ge.s32.totalorder %v1194, 0
  %vm2737 = vcmp.ge.s32.totalorder %v1195, 0
  %vm2738 = vcmp.ge.s32.totalorder %v1196, 0
  %vm2739 = vcmp.ge.s32.totalorder %v1197, 0
  %vm2740 = vcmp.ge.s32.totalorder %v1198, 0
  %vm2741 = vcmp.ge.s32.totalorder %v1199, 0
  %vm2742 = vcmp.ge.s32.totalorder %v1200, 0
  %vm2743 = vcmp.ge.s32.totalorder %v1201, 0
  %vm2744 = vcmp.ge.s32.totalorder %v1202, 0
  %vm2745 = vcmp.ge.s32.totalorder %v1203, 0
  %vm2746 = vcmp.ge.s32.totalorder %v1204, 0
  %vm2747 = vcmp.ge.s32.totalorder %v1205, 0
  %vm2748 = vcmp.ge.s32.totalorder %v1206, 0
  %vm2749 = vcmp.ge.s32.totalorder %v1207, 0
  %vm2750 = vcmp.ge.s32.totalorder %v1208, 0
  %vm2751 = vcmp.ge.s32.totalorder %v1209, 0
  %vm2752 = vcmp.ge.s32.totalorder %v1210, 0
  %vm2753 = vcmp.ge.s32.totalorder %v1211, 0
  %vm2754 = vcmp.ge.s32.totalorder %v1212, 0
  %vm2755 = vcmp.ge.s32.totalorder %v1213, 0
  %vm2756 = vcmp.ge.s32.totalorder %v1214, 0
  %vm2757 = vcmp.ge.s32.totalorder %v1215, 0
  %vm2758 = vcmp.ge.s32.totalorder %v1216, 0
  %vm2759 = vcmp.ge.s32.totalorder %v1217, 0
  %vm2760 = vcmp.ge.s32.totalorder %v1218, 0
  %vm2761 = vcmp.ge.s32.totalorder %v1219, 0
  %vm2762 = vcmp.ge.s32.totalorder %v1220, 0
  %vm2763 = vcmp.ge.s32.totalorder %v1221, 0
  %vm2764 = vcmp.ge.s32.totalorder %v1222, 0
  %vm2765 = vcmp.ge.s32.totalorder %v1223, 0
  %vm2766 = vcmp.ge.s32.totalorder %v1224, 0
  %vm2767 = vcmp.ge.s32.totalorder %v1225, 0
  %vm2768 = vcmp.ge.s32.totalorder %v1226, 0
  %vm2769 = vcmp.ge.s32.totalorder %v1227, 0
  %vm2770 = vcmp.ge.s32.totalorder %v1228, 0
  %vm2771 = vcmp.ge.s32.totalorder %v1229, 0
  %vm2772 = vcmp.ge.s32.totalorder %v1230, 0
  %vm2773 = vcmp.ge.s32.totalorder %v1231, 0
  %vm2774 = vcmp.ge.s32.totalorder %v1232, 0
  %vm2775 = vcmp.ge.s32.totalorder %v1233, 0
  %vm2776 = vcmp.ge.s32.totalorder %v1234, 0
  %vm2777 = vcmp.ge.s32.totalorder %v1235, 0
  %vm2778 = vcmp.ge.s32.totalorder %v1236, 0
  %v2779 = vsel %vm2715, 1, 0
  %v2780 = vsel %vm2716, 1, 0
  %v2781 = vsel %vm2717, 1, 0
  %v2782 = vsel %vm2718, 1, 0
  %v2783 = vsel %vm2719, 1, 0
  %v2784 = vsel %vm2720, 1, 0
  %v2785 = vsel %vm2721, 1, 0
  %v2786 = vsel %vm2722, 1, 0
  %v2787 = vsel %vm2723, 1, 0
  %v2788 = vsel %vm2724, 1, 0
  %v2789 = vsel %vm2725, 1, 0
  %v2790 = vsel %vm2726, 1, 0
  %v2791 = vsel %vm2727, 1, 0
  %v2792 = vsel %vm2728, 1, 0
  %v2793 = vsel %vm2729, 1, 0
  %v2794 = vsel %vm2730, 1, 0
  %v2795 = vsel %vm2731, 1, 0
  %v2796 = vsel %vm2732, 1, 0
  %v2797 = vsel %vm2733, 1, 0
  %v2798 = vsel %vm2734, 1, 0
  %v2799 = vsel %vm2735, 1, 0
  %v2800 = vsel %vm2736, 1, 0
  %v2801 = vsel %vm2737, 1, 0
  %v2802 = vsel %vm2738, 1, 0
  %v2803 = vsel %vm2739, 1, 0
  %v2804 = vsel %vm2740, 1, 0
  %v2805 = vsel %vm2741, 1, 0
  %v2806 = vsel %vm2742, 1, 0
  %v2807 = vsel %vm2743, 1, 0
  %v2808 = vsel %vm2744, 1, 0
  %v2809 = vsel %vm2745, 1, 0
  %v2810 = vsel %vm2746, 1, 0
  %v2811 = vsel %vm2747, 1, 0
  %v2812 = vsel %vm2748, 1, 0
  %v2813 = vsel %vm2749, 1, 0
  %v2814 = vsel %vm2750, 1, 0
  %v2815 = vsel %vm2751, 1, 0
  %v2816 = vsel %vm2752, 1, 0
  %v2817 = vsel %vm2753, 1, 0
  %v2818 = vsel %vm2754, 1, 0
  %v2819 = vsel %vm2755, 1, 0
  %v2820 = vsel %vm2756, 1, 0
  %v2821 = vsel %vm2757, 1, 0
  %v2822 = vsel %vm2758, 1, 0
  %v2823 = vsel %vm2759, 1, 0
  %v2824 = vsel %vm2760, 1, 0
  %v2825 = vsel %vm2761, 1, 0
  %v2826 = vsel %vm2762, 1, 0
  %v2827 = vsel %vm2763, 1, 0
  %v2828 = vsel %vm2764, 1, 0
  %v2829 = vsel %vm2765, 1, 0
  %v2830 = vsel %vm2766, 1, 0
  %v2831 = vsel %vm2767, 1, 0
  %v2832 = vsel %vm2768, 1, 0
  %v2833 = vsel %vm2769, 1, 0
  %v2834 = vsel %vm2770, 1, 0
  %v2835 = vsel %vm2771, 1, 0
  %v2836 = vsel %vm2772, 1, 0
  %v2837 = vsel %vm2773, 1, 0
  %v2838 = vsel %vm2774, 1, 0
  %v2839 = vsel %vm2775, 1, 0
  %v2840 = vsel %vm2776, 1, 0
  %v2841 = vsel %vm2777, 1, 0
  %v2842 = vsel %vm2778, 1, 0
  %v2843 = vcvt.s32.f32 %v2779
  %v2844 = vcvt.s32.f32 %v2780
  %v2845 = vcvt.s32.f32 %v2781
  %v2846 = vcvt.s32.f32 %v2782
  %v2847 = vcvt.s32.f32 %v2783
  %v2848 = vcvt.s32.f32 %v2784
  %v2849 = vcvt.s32.f32 %v2785
  %v2850 = vcvt.s32.f32 %v2786
  %v2851 = vcvt.s32.f32 %v2787
  %v2852 = vcvt.s32.f32 %v2788
  %v2853 = vcvt.s32.f32 %v2789
  %v2854 = vcvt.s32.f32 %v2790
  %v2855 = vcvt.s32.f32 %v2791
  %v2856 = vcvt.s32.f32 %v2792
  %v2857 = vcvt.s32.f32 %v2793
  %v2858 = vcvt.s32.f32 %v2794
  %v2859 = vcvt.s32.f32 %v2795
  %v2860 = vcvt.s32.f32 %v2796
  %v2861 = vcvt.s32.f32 %v2797
  %v2862 = vcvt.s32.f32 %v2798
  %v2863 = vcvt.s32.f32 %v2799
  %v2864 = vcvt.s32.f32 %v2800
  %v2865 = vcvt.s32.f32 %v2801
  %v2866 = vcvt.s32.f32 %v2802
  %v2867 = vcvt.s32.f32 %v2803
  %v2868 = vcvt.s32.f32 %v2804
  %v2869 = vcvt.s32.f32 %v2805
  %v2870 = vcvt.s32.f32 %v2806
  %v2871 = vcvt.s32.f32 %v2807
  %v2872 = vcvt.s32.f32 %v2808
  %v2873 = vcvt.s32.f32 %v2809
  %v2874 = vcvt.s32.f32 %v2810
  %v2875 = vcvt.s32.f32 %v2811
  %v2876 = vcvt.s32.f32 %v2812
  %v2877 = vcvt.s32.f32 %v2813
  %v2878 = vcvt.s32.f32 %v2814
  %v2879 = vcvt.s32.f32 %v2815
  %v2880 = vcvt.s32.f32 %v2816
  %v2881 = vcvt.s32.f32 %v2817
  %v2882 = vcvt.s32.f32 %v2818
  %v2883 = vcvt.s32.f32 %v2819
  %v2884 = vcvt.s32.f32 %v2820
  %v2885 = vcvt.s32.f32 %v2821
  %v2886 = vcvt.s32.f32 %v2822
  %v2887 = vcvt.s32.f32 %v2823
  %v2888 = vcvt.s32.f32 %v2824
  %v2889 = vcvt.s32.f32 %v2825
  %v2890 = vcvt.s32.f32 %v2826
  %v2891 = vcvt.s32.f32 %v2827
  %v2892 = vcvt.s32.f32 %v2828
  %v2893 = vcvt.s32.f32 %v2829
  %v2894 = vcvt.s32.f32 %v2830
  %v2895 = vcvt.s32.f32 %v2831
  %v2896 = vcvt.s32.f32 %v2832
  %v2897 = vcvt.s32.f32 %v2833
  %v2898 = vcvt.s32.f32 %v2834
  %v2899 = vcvt.s32.f32 %v2835
  %v2900 = vcvt.s32.f32 %v2836
  %v2901 = vcvt.s32.f32 %v2837
  %v2902 = vcvt.s32.f32 %v2838
  %v2903 = vcvt.s32.f32 %v2839
  %v2904 = vcvt.s32.f32 %v2840
  %v2905 = vcvt.s32.f32 %v2841
  %v2906 = vcvt.s32.f32 %v2842
  %v2907 = vmul.f32 %v2843, %v2523
  %v2908 = vmul.f32 %v2844, %v2524
  %v2909 = vmul.f32 %v2845, %v2525
  %v2910 = vmul.f32 %v2846, %v2526
  %v2911 = vmul.f32 %v2847, %v2527
  %v2912 = vmul.f32 %v2848, %v2528
  %v2913 = vmul.f32 %v2849, %v2529
  %v2914 = vmul.f32 %v2850, %v2530
  %v2915 = vmul.f32 %v2851, %v2531
  %v2916 = vmul.f32 %v2852, %v2532
  %v2917 = vmul.f32 %v2853, %v2533
  %v2918 = vmul.f32 %v2854, %v2534
  %v2919 = vmul.f32 %v2855, %v2535
  %v2920 = vmul.f32 %v2856, %v2536
  %v2921 = vmul.f32 %v2857, %v2537
  %v2922 = vmul.f32 %v2858, %v2538
  %v2923 = vmul.f32 %v2859, %v2539
  %v2924 = vmul.f32 %v2860, %v2540
  %v2925 = vmul.f32 %v2861, %v2541
  %v2926 = vmul.f32 %v2862, %v2542
  %v2927 = vmul.f32 %v2863, %v2543
  %v2928 = vmul.f32 %v2864, %v2544
  %v2929 = vmul.f32 %v2865, %v2545
  %v2930 = vmul.f32 %v2866, %v2546
  %v2931 = vmul.f32 %v2867, %v2547
  %v2932 = vmul.f32 %v2868, %v2548
  %v2933 = vmul.f32 %v2869, %v2549
  %v2934 = vmul.f32 %v2870, %v2550
  %v2935 = vmul.f32 %v2871, %v2551
  %v2936 = vmul.f32 %v2872, %v2552
  %v2937 = vmul.f32 %v2873, %v2553
  %v2938 = vmul.f32 %v2874, %v2554
  %v2939 = vmul.f32 %v2875, %v2555
  %v2940 = vmul.f32 %v2876, %v2556
  %v2941 = vmul.f32 %v2877, %v2557
  %v2942 = vmul.f32 %v2878, %v2558
  %v2943 = vmul.f32 %v2879, %v2559
  %v2944 = vmul.f32 %v2880, %v2560
  %v2945 = vmul.f32 %v2881, %v2561
  %v2946 = vmul.f32 %v2882, %v2562
  %v2947 = vmul.f32 %v2883, %v2563
  %v2948 = vmul.f32 %v2884, %v2564
  %v2949 = vmul.f32 %v2885, %v2565
  %v2950 = vmul.f32 %v2886, %v2566
  %v2951 = vmul.f32 %v2887, %v2567
  %v2952 = vmul.f32 %v2888, %v2568
  %v2953 = vmul.f32 %v2889, %v2569
  %v2954 = vmul.f32 %v2890, %v2570
  %v2955 = vmul.f32 %v2891, %v2571
  %v2956 = vmul.f32 %v2892, %v2572
  %v2957 = vmul.f32 %v2893, %v2573
  %v2958 = vmul.f32 %v2894, %v2574
  %v2959 = vmul.f32 %v2895, %v2575
  %v2960 = vmul.f32 %v2896, %v2576
  %v2961 = vmul.f32 %v2897, %v2577
  %v2962 = vmul.f32 %v2898, %v2578
  %v2963 = vmul.f32 %v2899, %v2579
  %v2964 = vmul.f32 %v2900, %v2580
  %v2965 = vmul.f32 %v2901, %v2581
  %v2966 = vmul.f32 %v2902, %v2582
  %v2967 = vmul.f32 %v2903, %v2583
  %v2968 = vmul.f32 %v2904, %v2584
  %v2969 = vmul.f32 %v2905, %v2585
  %v2970 = vmul.f32 %v2906, %v2586
  %vm2971 = vcmp.eq.f32.partialorder %v2136, 0.0
  %vm2972 = vcmp.eq.f32.partialorder %v2138, 0.0
  %vm2973 = vcmp.eq.f32.partialorder %v2140, 0.0
  %vm2974 = vcmp.eq.f32.partialorder %v2142, 0.0
  %vm2975 = vcmp.eq.f32.partialorder %v2144, 0.0
  %vm2976 = vcmp.eq.f32.partialorder %v2146, 0.0
  %vm2977 = vcmp.eq.f32.partialorder %v2148, 0.0
  %vm2978 = vcmp.eq.f32.partialorder %v2150, 0.0
  %vm2979 = vcmp.eq.f32.partialorder %v2152, 0.0
  %vm2980 = vcmp.eq.f32.partialorder %v2154, 0.0
  %vm2981 = vcmp.eq.f32.partialorder %v2156, 0.0
  %vm2982 = vcmp.eq.f32.partialorder %v2158, 0.0
  %vm2983 = vcmp.eq.f32.partialorder %v2160, 0.0
  %vm2984 = vcmp.eq.f32.partialorder %v2162, 0.0
  %vm2985 = vcmp.eq.f32.partialorder %v2164, 0.0
  %vm2986 = vcmp.eq.f32.partialorder %v2166, 0.0
  %vm2987 = vcmp.eq.f32.partialorder %v2168, 0.0
  %vm2988 = vcmp.eq.f32.partialorder %v2170, 0.0
  %vm2989 = vcmp.eq.f32.partialorder %v2172, 0.0
  %vm2990 = vcmp.eq.f32.partialorder %v2174, 0.0
  %vm2991 = vcmp.eq.f32.partialorder %v2176, 0.0
  %vm2992 = vcmp.eq.f32.partialorder %v2178, 0.0
  %vm2993 = vcmp.eq.f32.partialorder %v2180, 0.0
  %vm2994 = vcmp.eq.f32.partialorder %v2182, 0.0
  %vm2995 = vcmp.eq.f32.partialorder %v2184, 0.0
  %vm2996 = vcmp.eq.f32.partialorder %v2186, 0.0
  %vm2997 = vcmp.eq.f32.partialorder %v2188, 0.0
  %vm2998 = vcmp.eq.f32.partialorder %v2190, 0.0
  %vm2999 = vcmp.eq.f32.partialorder %v2192, 0.0
  %vm3000 = vcmp.eq.f32.partialorder %v2194, 0.0
  %vm3001 = vcmp.eq.f32.partialorder %v2196, 0.0
  %vm3002 = vcmp.eq.f32.partialorder %v2198, 0.0
  %vm3003 = vcmp.eq.f32.partialorder %v2200, 0.0
  %vm3004 = vcmp.eq.f32.partialorder %v2202, 0.0
  %vm3005 = vcmp.eq.f32.partialorder %v2204, 0.0
  %vm3006 = vcmp.eq.f32.partialorder %v2206, 0.0
  %vm3007 = vcmp.eq.f32.partialorder %v2208, 0.0
  %vm3008 = vcmp.eq.f32.partialorder %v2210, 0.0
  %vm3009 = vcmp.eq.f32.partialorder %v2212, 0.0
  %vm3010 = vcmp.eq.f32.partialorder %v2214, 0.0
  %vm3011 = vcmp.eq.f32.partialorder %v2216, 0.0
  %vm3012 = vcmp.eq.f32.partialorder %v2218, 0.0
  %vm3013 = vcmp.eq.f32.partialorder %v2220, 0.0
  %vm3014 = vcmp.eq.f32.partialorder %v2222, 0.0
  %vm3015 = vcmp.eq.f32.partialorder %v2224, 0.0
  %vm3016 = vcmp.eq.f32.partialorder %v2226, 0.0
  %vm3017 = vcmp.eq.f32.partialorder %v2228, 0.0
  %vm3018 = vcmp.eq.f32.partialorder %v2230, 0.0
  %vm3019 = vcmp.eq.f32.partialorder %v2232, 0.0
  %vm3020 = vcmp.eq.f32.partialorder %v2234, 0.0
  %vm3021 = vcmp.eq.f32.partialorder %v2236, 0.0
  %vm3022 = vcmp.eq.f32.partialorder %v2238, 0.0
  %vm3023 = vcmp.eq.f32.partialorder %v2240, 0.0
  %vm3024 = vcmp.eq.f32.partialorder %v2242, 0.0
  %vm3025 = vcmp.eq.f32.partialorder %v2244, 0.0
  %vm3026 = vcmp.eq.f32.partialorder %v2246, 0.0
  %vm3027 = vcmp.eq.f32.partialorder %v2248, 0.0
  %vm3028 = vcmp.eq.f32.partialorder %v2250, 0.0
  %vm3029 = vcmp.eq.f32.partialorder %v2252, 0.0
  %vm3030 = vcmp.eq.f32.partialorder %v2254, 0.0
  %vm3031 = vcmp.eq.f32.partialorder %v2256, 0.0
  %vm3032 = vcmp.eq.f32.partialorder %v2258, 0.0
  %vm3033 = vcmp.eq.f32.partialorder %v2260, 0.0
  %vm3034 = vcmp.eq.f32.partialorder %v2262, 0.0
  %v3035 = vsel %vm2971, 1, 0
  %v3036 = vsel %vm2972, 1, 0
  %v3037 = vsel %vm2973, 1, 0
  %v3038 = vsel %vm2974, 1, 0
  %v3039 = vsel %vm2975, 1, 0
  %v3040 = vsel %vm2976, 1, 0
  %v3041 = vsel %vm2977, 1, 0
  %v3042 = vsel %vm2978, 1, 0
  %v3043 = vsel %vm2979, 1, 0
  %v3044 = vsel %vm2980, 1, 0
  %v3045 = vsel %vm2981, 1, 0
  %v3046 = vsel %vm2982, 1, 0
  %v3047 = vsel %vm2983, 1, 0
  %v3048 = vsel %vm2984, 1, 0
  %v3049 = vsel %vm2985, 1, 0
  %v3050 = vsel %vm2986, 1, 0
  %v3051 = vsel %vm2987, 1, 0
  %v3052 = vsel %vm2988, 1, 0
  %v3053 = vsel %vm2989, 1, 0
  %v3054 = vsel %vm2990, 1, 0
  %v3055 = vsel %vm2991, 1, 0
  %v3056 = vsel %vm2992, 1, 0
  %v3057 = vsel %vm2993, 1, 0
  %v3058 = vsel %vm2994, 1, 0
  %v3059 = vsel %vm2995, 1, 0
  %v3060 = vsel %vm2996, 1, 0
  %v3061 = vsel %vm2997, 1, 0
  %v3062 = vsel %vm2998, 1, 0
  %v3063 = vsel %vm2999, 1, 0
  %v3064 = vsel %vm3000, 1, 0
  %v3065 = vsel %vm3001, 1, 0
  %v3066 = vsel %vm3002, 1, 0
  %v3067 = vsel %vm3003, 1, 0
  %v3068 = vsel %vm3004, 1, 0
  %v3069 = vsel %vm3005, 1, 0
  %v3070 = vsel %vm3006, 1, 0
  %v3071 = vsel %vm3007, 1, 0
  %v3072 = vsel %vm3008, 1, 0
  %v3073 = vsel %vm3009, 1, 0
  %v3074 = vsel %vm3010, 1, 0
  %v3075 = vsel %vm3011, 1, 0
  %v3076 = vsel %vm3012, 1, 0
  %v3077 = vsel %vm3013, 1, 0
  %v3078 = vsel %vm3014, 1, 0
  %v3079 = vsel %vm3015, 1, 0
  %v3080 = vsel %vm3016, 1, 0
  %v3081 = vsel %vm3017, 1, 0
  %v3082 = vsel %vm3018, 1, 0
  %v3083 = vsel %vm3019, 1, 0
  %v3084 = vsel %vm3020, 1, 0
  %v3085 = vsel %vm3021, 1, 0
  %v3086 = vsel %vm3022, 1, 0
  %v3087 = vsel %vm3023, 1, 0
  %v3088 = vsel %vm3024, 1, 0
  %v3089 = vsel %vm3025, 1, 0
  %v3090 = vsel %vm3026, 1, 0
  %v3091 = vsel %vm3027, 1, 0
  %v3092 = vsel %vm3028, 1, 0
  %v3093 = vsel %vm3029, 1, 0
  %v3094 = vsel %vm3030, 1, 0
  %v3095 = vsel %vm3031, 1, 0
  %v3096 = vsel %vm3032, 1, 0
  %v3097 = vsel %vm3033, 1, 0
  %v3098 = vsel %vm3034, 1, 0
  %v3099 = vcvt.s32.f32 %v3035
  %v3100 = vcvt.s32.f32 %v3036
  %v3101 = vcvt.s32.f32 %v3037
  %v3102 = vcvt.s32.f32 %v3038
  %v3103 = vcvt.s32.f32 %v3039
  %v3104 = vcvt.s32.f32 %v3040
  %v3105 = vcvt.s32.f32 %v3041
  %v3106 = vcvt.s32.f32 %v3042
  %v3107 = vcvt.s32.f32 %v3043
  %v3108 = vcvt.s32.f32 %v3044
  %v3109 = vcvt.s32.f32 %v3045
  %v3110 = vcvt.s32.f32 %v3046
  %v3111 = vcvt.s32.f32 %v3047
  %v3112 = vcvt.s32.f32 %v3048
  %v3113 = vcvt.s32.f32 %v3049
  %v3114 = vcvt.s32.f32 %v3050
  %v3115 = vcvt.s32.f32 %v3051
  %v3116 = vcvt.s32.f32 %v3052
  %v3117 = vcvt.s32.f32 %v3053
  %v3118 = vcvt.s32.f32 %v3054
  %v3119 = vcvt.s32.f32 %v3055
  %v3120 = vcvt.s32.f32 %v3056
  %v3121 = vcvt.s32.f32 %v3057
  %v3122 = vcvt.s32.f32 %v3058
  %v3123 = vcvt.s32.f32 %v3059
  %v3124 = vcvt.s32.f32 %v3060
  %v3125 = vcvt.s32.f32 %v3061
  %v3126 = vcvt.s32.f32 %v3062
  %v3127 = vcvt.s32.f32 %v3063
  %v3128 = vcvt.s32.f32 %v3064
  %v3129 = vcvt.s32.f32 %v3065
  %v3130 = vcvt.s32.f32 %v3066
  %v3131 = vcvt.s32.f32 %v3067
  %v3132 = vcvt.s32.f32 %v3068
  %v3133 = vcvt.s32.f32 %v3069
  %v3134 = vcvt.s32.f32 %v3070
  %v3135 = vcvt.s32.f32 %v3071
  %v3136 = vcvt.s32.f32 %v3072
  %v3137 = vcvt.s32.f32 %v3073
  %v3138 = vcvt.s32.f32 %v3074
  %v3139 = vcvt.s32.f32 %v3075
  %v3140 = vcvt.s32.f32 %v3076
  %v3141 = vcvt.s32.f32 %v3077
  %v3142 = vcvt.s32.f32 %v3078
  %v3143 = vcvt.s32.f32 %v3079
  %v3144 = vcvt.s32.f32 %v3080
  %v3145 = vcvt.s32.f32 %v3081
  %v3146 = vcvt.s32.f32 %v3082
  %v3147 = vcvt.s32.f32 %v3083
  %v3148 = vcvt.s32.f32 %v3084
  %v3149 = vcvt.s32.f32 %v3085
  %v3150 = vcvt.s32.f32 %v3086
  %v3151 = vcvt.s32.f32 %v3087
  %v3152 = vcvt.s32.f32 %v3088
  %v3153 = vcvt.s32.f32 %v3089
  %v3154 = vcvt.s32.f32 %v3090
  %v3155 = vcvt.s32.f32 %v3091
  %v3156 = vcvt.s32.f32 %v3092
  %v3157 = vcvt.s32.f32 %v3093
  %v3158 = vcvt.s32.f32 %v3094
  %v3159 = vcvt.s32.f32 %v3095
  %v3160 = vcvt.s32.f32 %v3096
  %v3161 = vcvt.s32.f32 %v3097
  %v3162 = vcvt.s32.f32 %v3098
  %v3163 = vmul.f32 %v3099, %v2907
  %v3164 = vmul.f32 %v3100, %v2908
  %v3165 = vmul.f32 %v3101, %v2909
  %v3166 = vmul.f32 %v3102, %v2910
  %v3167 = vmul.f32 %v3103, %v2911
  %v3168 = vmul.f32 %v3104, %v2912
  %v3169 = vmul.f32 %v3105, %v2913
  %v3170 = vmul.f32 %v3106, %v2914
  %v3171 = vmul.f32 %v3107, %v2915
  %v3172 = vmul.f32 %v3108, %v2916
  %v3173 = vmul.f32 %v3109, %v2917
  %v3174 = vmul.f32 %v3110, %v2918
  %v3175 = vmul.f32 %v3111, %v2919
  %v3176 = vmul.f32 %v3112, %v2920
  %v3177 = vmul.f32 %v3113, %v2921
  %v3178 = vmul.f32 %v3114, %v2922
  %v3179 = vmul.f32 %v3115, %v2923
  %v3180 = vmul.f32 %v3116, %v2924
  %v3181 = vmul.f32 %v3117, %v2925
  %v3182 = vmul.f32 %v3118, %v2926
  %v3183 = vmul.f32 %v3119, %v2927
  %v3184 = vmul.f32 %v3120, %v2928
  %v3185 = vmul.f32 %v3121, %v2929
  %v3186 = vmul.f32 %v3122, %v2930
  %v3187 = vmul.f32 %v3123, %v2931
  %v3188 = vmul.f32 %v3124, %v2932
  %v3189 = vmul.f32 %v3125, %v2933
  %v3190 = vmul.f32 %v3126, %v2934
  %v3191 = vmul.f32 %v3127, %v2935
  %v3192 = vmul.f32 %v3128, %v2936
  %v3193 = vmul.f32 %v3129, %v2937
  %v3194 = vmul.f32 %v3130, %v2938
  %v3195 = vmul.f32 %v3131, %v2939
  %v3196 = vmul.f32 %v3132, %v2940
  %v3197 = vmul.f32 %v3133, %v2941
  %v3198 = vmul.f32 %v3134, %v2942
  %v3199 = vmul.f32 %v3135, %v2943
  %v3200 = vmul.f32 %v3136, %v2944
  %v3201 = vmul.f32 %v3137, %v2945
  %v3202 = vmul.f32 %v3138, %v2946
  %v3203 = vmul.f32 %v3139, %v2947
  %v3204 = vmul.f32 %v3140, %v2948
  %v3205 = vmul.f32 %v3141, %v2949
  %v3206 = vmul.f32 %v3142, %v2950
  %v3207 = vmul.f32 %v3143, %v2951
  %v3208 = vmul.f32 %v3144, %v2952
  %v3209 = vmul.f32 %v3145, %v2953
  %v3210 = vmul.f32 %v3146, %v2954
  %v3211 = vmul.f32 %v3147, %v2955
  %v3212 = vmul.f32 %v3148, %v2956
  %v3213 = vmul.f32 %v3149, %v2957
  %v3214 = vmul.f32 %v3150, %v2958
  %v3215 = vmul.f32 %v3151, %v2959
  %v3216 = vmul.f32 %v3152, %v2960
  %v3217 = vmul.f32 %v3153, %v2961
  %v3218 = vmul.f32 %v3154, %v2962
  %v3219 = vmul.f32 %v3155, %v2963
  %v3220 = vmul.f32 %v3156, %v2964
  %v3221 = vmul.f32 %v3157, %v2965
  %v3222 = vmul.f32 %v3158, %v2966
  %v3223 = vmul.f32 %v3159, %v2967
  %v3224 = vmul.f32 %v3160, %v2968
  %v3225 = vmul.f32 %v3161, %v2969
  %v3226 = vmul.f32 %v3162, %v2970
  %v3227 = vld [vmem:[#allocation2] sm:$0x1]
  %v3228 = vadd.f32 %v2651, %v2652
  %v3229 = vadd.f32 %v3228, %v2653
  %v3230 = vadd.f32 %v3229, %v2654
  %v3231 = vadd.f32 %v3230, %v2655
  %v3232 = vadd.f32 %v3231, %v2656
  %v3233 = vadd.f32 %v3232, %v2657
  %v3234 = vadd.f32 %v3233, %v2658
  %v3235 = vadd.f32 %v3234, %v2659
  %v3236 = vadd.f32 %v3235, %v2660
  %v3237 = vadd.f32 %v3236, %v2661
  %v3238 = vadd.f32 %v3237, %v2662
  %v3239 = vadd.f32 %v3238, %v2663
  %v3240 = vadd.f32 %v3239, %v2664
  %v3241 = vadd.f32 %v3240, %v2665
  %v3242 = vadd.f32 %v3241, %v2666
  %v3243 = vadd.f32 %v3242, %v2667
  %v3244 = vadd.f32 %v3243, %v2668
  %v3245 = vadd.f32 %v3244, %v2669
  %v3246 = vadd.f32 %v3245, %v2670
  %v3247 = vadd.f32 %v3246, %v2671
  %v3248 = vadd.f32 %v3247, %v2672
  %v3249 = vadd.f32 %v3248, %v2673
  %v3250 = vadd.f32 %v3249, %v2674
  %v3251 = vadd.f32 %v3250, %v2675
  %v3252 = vadd.f32 %v3251, %v2676
  %v3253 = vadd.f32 %v3252, %v2677
  %v3254 = vadd.f32 %v3253, %v2678
  %v3255 = vadd.f32 %v3254, %v2679
  %v3256 = vadd.f32 %v3255, %v2680
  %v3257 = vadd.f32 %v3256, %v2681
  %v3258 = vadd.f32 %v3257, %v2682
  %v3259 = vadd.f32 %v3258, %v2683
  %v3260 = vadd.f32 %v3259, %v2684
  %v3261 = vadd.f32 %v3260, %v2685
  %v3262 = vadd.f32 %v3261, %v2686
  %v3263 = vadd.f32 %v3262, %v2687
  %v3264 = vadd.f32 %v3263, %v2688
  %v3265 = vadd.f32 %v3264, %v2689
  %v3266 = vadd.f32 %v3265, %v2690
  %v3267 = vadd.f32 %v3266, %v2691
  %v3268 = vadd.f32 %v3267, %v2692
  %v3269 = vadd.f32 %v3268, %v2693
  %v3270 = vadd.f32 %v3269, %v2694
  %v3271 = vadd.f32 %v3270, %v2695
  %v3272 = vadd.f32 %v3271, %v2696
  %v3273 = vadd.f32 %v3272, %v2697
  %v3274 = vadd.f32 %v3273, %v2698
  %v3275 = vadd.f32 %v3274, %v2699
  %v3276 = vadd.f32 %v3275, %v2700
  %v3277 = vadd.f32 %v3276, %v2701
  %v3278 = vadd.f32 %v3277, %v2702
  %v3279 = vadd.f32 %v3278, %v2703
  %v3280 = vadd.f32 %v3279, %v2704
  %v3281 = vadd.f32 %v3280, %v2705
  %v3282 = vadd.f32 %v3281, %v2706
  %v3283 = vadd.f32 %v3282, %v2707
  %v3284 = vadd.f32 %v3283, %v2708
  %v3285 = vadd.f32 %v3284, %v2709
  %v3286 = vadd.f32 %v3285, %v2710
  %v3287 = vadd.f32 %v3286, %v2711
  %v3288 = vadd.f32 %v3287, %v2712
  %v3289 = vadd.f32 %v3288, %v2713
  %v3290 = vadd.f32 %v3289, %v2714
  %v3291 = vrot.slane %v3290, 4
  %v3292 = vadd.f32 %v3290, %v3291
  %v3293 = vrot.slane %v3292, 2
  %v3294 = vadd.f32 %v3292, %v3293
  %v3295 = vrot.slane %v3294, 1
  %v3296 = vadd.f32 %v3294, %v3295
  %v3297 = vadd.f32 %v3227, %v3296
  %vm3298 = vcmask 0
  %3299 = vst.msk [vmem:[#allocation2] sm:$0x1] %vm3298, %v3297
  %v3300 = vld [vmem:[#allocation3] sm:$0x1]
  %vm3301 = vcmask 7168
  %v3302 = vsel %vm3301, %v3163, 0.0
  %v3303 = vsel %vm3301, %v3164, 0.0
  %v3304 = vadd.f32 %v3302, %v3303
  %v3305 = vsel %vm3301, %v3165, 0.0
  %v3306 = vadd.f32 %v3304, %v3305
  %v3307 = vsel %vm3301, %v3166, 0.0
  %v3308 = vadd.f32 %v3306, %v3307
  %v3309 = vsel %vm3301, %v3167, 0.0
  %v3310 = vadd.f32 %v3308, %v3309
  %v3311 = vsel %vm3301, %v3168, 0.0
  %v3312 = vadd.f32 %v3310, %v3311
  %v3313 = vsel %vm3301, %v3169, 0.0
  %v3314 = vadd.f32 %v3312, %v3313
  %v3315 = vsel %vm3301, %v3170, 0.0
  %v3316 = vadd.f32 %v3314, %v3315
  %v3317 = vsel %vm3301, %v3171, 0.0
  %v3318 = vadd.f32 %v3316, %v3317
  %v3319 = vsel %vm3301, %v3172, 0.0
  %v3320 = vadd.f32 %v3318, %v3319
  %v3321 = vsel %vm3301, %v3173, 0.0
  %v3322 = vadd.f32 %v3320, %v3321
  %v3323 = vsel %vm3301, %v3174, 0.0
  %v3324 = vadd.f32 %v3322, %v3323
  %v3325 = vsel %vm3301, %v3175, 0.0
  %v3326 = vadd.f32 %v3324, %v3325
  %v3327 = vsel %vm3301, %v3176, 0.0
  %v3328 = vadd.f32 %v3326, %v3327
  %v3329 = vsel %vm3301, %v3177, 0.0
  %v3330 = vadd.f32 %v3328, %v3329
  %v3331 = vsel %vm3301, %v3178, 0.0
  %v3332 = vadd.f32 %v3330, %v3331
  %v3333 = vsel %vm3301, %v3179, 0.0
  %v3334 = vadd.f32 %v3332, %v3333
  %v3335 = vsel %vm3301, %v3180, 0.0
  %v3336 = vadd.f32 %v3334, %v3335
  %v3337 = vsel %vm3301, %v3181, 0.0
  %v3338 = vadd.f32 %v3336, %v3337
  %v3339 = vsel %vm3301, %v3182, 0.0
  %v3340 = vadd.f32 %v3338, %v3339
  %v3341 = vsel %vm3301, %v3183, 0.0
  %v3342 = vadd.f32 %v3340, %v3341
  %v3343 = vsel %vm3301, %v3184, 0.0
  %v3344 = vadd.f32 %v3342, %v3343
  %v3345 = vsel %vm3301, %v3185, 0.0
  %v3346 = vadd.f32 %v3344, %v3345
  %v3347 = vsel %vm3301, %v3186, 0.0
  %v3348 = vadd.f32 %v3346, %v3347
  %v3349 = vsel %vm3301, %v3187, 0.0
  %v3350 = vadd.f32 %v3348, %v3349
  %v3351 = vsel %vm3301, %v3188, 0.0
  %v3352 = vadd.f32 %v3350, %v3351
  %v3353 = vsel %vm3301, %v3189, 0.0
  %v3354 = vadd.f32 %v3352, %v3353
  %v3355 = vsel %vm3301, %v3190, 0.0
  %v3356 = vadd.f32 %v3354, %v3355
  %v3357 = vsel %vm3301, %v3191, 0.0
  %v3358 = vadd.f32 %v3356, %v3357
  %v3359 = vsel %vm3301, %v3192, 0.0
  %v3360 = vadd.f32 %v3358, %v3359
  %v3361 = vsel %vm3301, %v3193, 0.0
  %v3362 = vadd.f32 %v3360, %v3361
  %v3363 = vsel %vm3301, %v3194, 0.0
  %v3364 = vadd.f32 %v3362, %v3363
  %v3365 = vsel %vm3301, %v3195, 0.0
  %v3366 = vadd.f32 %v3364, %v3365
  %v3367 = vsel %vm3301, %v3196, 0.0
  %v3368 = vadd.f32 %v3366, %v3367
  %v3369 = vsel %vm3301, %v3197, 0.0
  %v3370 = vadd.f32 %v3368, %v3369
  %v3371 = vsel %vm3301, %v3198, 0.0
  %v3372 = vadd.f32 %v3370, %v3371
  %v3373 = vsel %vm3301, %v3199, 0.0
  %v3374 = vadd.f32 %v3372, %v3373
  %v3375 = vsel %vm3301, %v3200, 0.0
  %v3376 = vadd.f32 %v3374, %v3375
  %v3377 = vsel %vm3301, %v3201, 0.0
  %v3378 = vadd.f32 %v3376, %v3377
  %v3379 = vsel %vm3301, %v3202, 0.0
  %v3380 = vadd.f32 %v3378, %v3379
  %v3381 = vsel %vm3301, %v3203, 0.0
  %v3382 = vadd.f32 %v3380, %v3381
  %v3383 = vsel %vm3301, %v3204, 0.0
  %v3384 = vadd.f32 %v3382, %v3383
  %v3385 = vsel %vm3301, %v3205, 0.0
  %v3386 = vadd.f32 %v3384, %v3385
  %v3387 = vsel %vm3301, %v3206, 0.0
  %v3388 = vadd.f32 %v3386, %v3387
  %v3389 = vsel %vm3301, %v3207, 0.0
  %v3390 = vadd.f32 %v3388, %v3389
  %v3391 = vsel %vm3301, %v3208, 0.0
  %v3392 = vadd.f32 %v3390, %v3391
  %v3393 = vsel %vm3301, %v3209, 0.0
  %v3394 = vadd.f32 %v3392, %v3393
  %v3395 = vsel %vm3301, %v3210, 0.0
  %v3396 = vadd.f32 %v3394, %v3395
  %v3397 = vsel %vm3301, %v3211, 0.0
  %v3398 = vadd.f32 %v3396, %v3397
  %v3399 = vsel %vm3301, %v3212, 0.0
  %v3400 = vadd.f32 %v3398, %v3399
  %v3401 = vsel %vm3301, %v3213, 0.0
  %v3402 = vadd.f32 %v3400, %v3401
  %v3403 = vsel %vm3301, %v3214, 0.0
  %v3404 = vadd.f32 %v3402, %v3403
  %v3405 = vsel %vm3301, %v3215, 0.0
  %v3406 = vadd.f32 %v3404, %v3405
  %v3407 = vsel %vm3301, %v3216, 0.0
  %v3408 = vadd.f32 %v3406, %v3407
  %v3409 = vsel %vm3301, %v3217, 0.0
  %v3410 = vadd.f32 %v3408, %v3409
  %v3411 = vsel %vm3301, %v3218, 0.0
  %v3412 = vadd.f32 %v3410, %v3411
  %v3413 = vsel %vm3301, %v3219, 0.0
  %v3414 = vadd.f32 %v3412, %v3413
  %v3415 = vsel %vm3301, %v3220, 0.0
  %v3416 = vadd.f32 %v3414, %v3415
  %v3417 = vsel %vm3301, %v3221, 0.0
  %v3418 = vadd.f32 %v3416, %v3417
  %v3419 = vsel %vm3301, %v3222, 0.0
  %v3420 = vadd.f32 %v3418, %v3419
  %v3421 = vsel %vm3301, %v3223, 0.0
  %v3422 = vadd.f32 %v3420, %v3421
  %v3423 = vsel %vm3301, %v3224, 0.0
  %v3424 = vadd.f32 %v3422, %v3423
  %v3425 = vsel %vm3301, %v3225, 0.0
  %v3426 = vadd.f32 %v3424, %v3425
  %v3427 = vsel %vm3301, %v3226, 0.0
  %v3428 = vadd.f32 %v3426, %v3427
  %v3429 = vrot.slane %v3428, 4
  %v3430 = vadd.f32 %v3428, %v3429
  %v3431 = vrot.slane %v3430, 2
  %v3432 = vadd.f32 %v3430, %v3431
  %v3433 = vrot.slane %v3432, 1
  %v3434 = vadd.f32 %v3432, %v3433
  %v3435 = vadd.f32 %v3300, %v3434
  %3436 = vst.msk [vmem:[#allocation3] sm:$0x1] %vm3298, %v3435
  %v3437 = vld [vmem:[#allocation4] sm:$0x1]
  %v3438 = vsel %vm3301, %v2907, 0.0
  %v3439 = vsel %vm3301, %v2908, 0.0
  %v3440 = vadd.f32 %v3438, %v3439
  %v3441 = vsel %vm3301, %v2909, 0.0
  %v3442 = vadd.f32 %v3440, %v3441
  %v3443 = vsel %vm3301, %v2910, 0.0
  %v3444 = vadd.f32 %v3442, %v3443
  %v3445 = vsel %vm3301, %v2911, 0.0
  %v3446 = vadd.f32 %v3444, %v3445
  %v3447 = vsel %vm3301, %v2912, 0.0
  %v3448 = vadd.f32 %v3446, %v3447
  %v3449 = vsel %vm3301, %v2913, 0.0
  %v3450 = vadd.f32 %v3448, %v3449
  %v3451 = vsel %vm3301, %v2914, 0.0
  %v3452 = vadd.f32 %v3450, %v3451
  %v3453 = vsel %vm3301, %v2915, 0.0
  %v3454 = vadd.f32 %v3452, %v3453
  %v3455 = vsel %vm3301, %v2916, 0.0
  %v3456 = vadd.f32 %v3454, %v3455
  %v3457 = vsel %vm3301, %v2917, 0.0
  %v3458 = vadd.f32 %v3456, %v3457
  %v3459 = vsel %vm3301, %v2918, 0.0
  %v3460 = vadd.f32 %v3458, %v3459
  %v3461 = vsel %vm3301, %v2919, 0.0
  %v3462 = vadd.f32 %v3460, %v3461
  %v3463 = vsel %vm3301, %v2920, 0.0
  %v3464 = vadd.f32 %v3462, %v3463
  %v3465 = vsel %vm3301, %v2921, 0.0
  %v3466 = vadd.f32 %v3464, %v3465
  %v3467 = vsel %vm3301, %v2922, 0.0
  %v3468 = vadd.f32 %v3466, %v3467
  %v3469 = vsel %vm3301, %v2923, 0.0
  %v3470 = vadd.f32 %v3468, %v3469
  %v3471 = vsel %vm3301, %v2924, 0.0
  %v3472 = vadd.f32 %v3470, %v3471
  %v3473 = vsel %vm3301, %v2925, 0.0
  %v3474 = vadd.f32 %v3472, %v3473
  %v3475 = vsel %vm3301, %v2926, 0.0
  %v3476 = vadd.f32 %v3474, %v3475
  %v3477 = vsel %vm3301, %v2927, 0.0
  %v3478 = vadd.f32 %v3476, %v3477
  %v3479 = vsel %vm3301, %v2928, 0.0
  %v3480 = vadd.f32 %v3478, %v3479
  %v3481 = vsel %vm3301, %v2929, 0.0
  %v3482 = vadd.f32 %v3480, %v3481
  %v3483 = vsel %vm3301, %v2930, 0.0
  %v3484 = vadd.f32 %v3482, %v3483
  %v3485 = vsel %vm3301, %v2931, 0.0
  %v3486 = vadd.f32 %v3484, %v3485
  %v3487 = vsel %vm3301, %v2932, 0.0
  %v3488 = vadd.f32 %v3486, %v3487
  %v3489 = vsel %vm3301, %v2933, 0.0
  %v3490 = vadd.f32 %v3488, %v3489
  %v3491 = vsel %vm3301, %v2934, 0.0
  %v3492 = vadd.f32 %v3490, %v3491
  %v3493 = vsel %vm3301, %v2935, 0.0
  %v3494 = vadd.f32 %v3492, %v3493
  %v3495 = vsel %vm3301, %v2936, 0.0
  %v3496 = vadd.f32 %v3494, %v3495
  %v3497 = vsel %vm3301, %v2937, 0.0
  %v3498 = vadd.f32 %v3496, %v3497
  %v3499 = vsel %vm3301, %v2938, 0.0
  %v3500 = vadd.f32 %v3498, %v3499
  %v3501 = vsel %vm3301, %v2939, 0.0
  %v3502 = vadd.f32 %v3500, %v3501
  %v3503 = vsel %vm3301, %v2940, 0.0
  %v3504 = vadd.f32 %v3502, %v3503
  %v3505 = vsel %vm3301, %v2941, 0.0
  %v3506 = vadd.f32 %v3504, %v3505
  %v3507 = vsel %vm3301, %v2942, 0.0
  %v3508 = vadd.f32 %v3506, %v3507
  %v3509 = vsel %vm3301, %v2943, 0.0
  %v3510 = vadd.f32 %v3508, %v3509
  %v3511 = vsel %vm3301, %v2944, 0.0
  %v3512 = vadd.f32 %v3510, %v3511
  %v3513 = vsel %vm3301, %v2945, 0.0
  %v3514 = vadd.f32 %v3512, %v3513
  %v3515 = vsel %vm3301, %v2946, 0.0
  %v3516 = vadd.f32 %v3514, %v3515
  %v3517 = vsel %vm3301, %v2947, 0.0
  %v3518 = vadd.f32 %v3516, %v3517
  %v3519 = vsel %vm3301, %v2948, 0.0
  %v3520 = vadd.f32 %v3518, %v3519
  %v3521 = vsel %vm3301, %v2949, 0.0
  %v3522 = vadd.f32 %v3520, %v3521
  %v3523 = vsel %vm3301, %v2950, 0.0
  %v3524 = vadd.f32 %v3522, %v3523
  %v3525 = vsel %vm3301, %v2951, 0.0
  %v3526 = vadd.f32 %v3524, %v3525
  %v3527 = vsel %vm3301, %v2952, 0.0
  %v3528 = vadd.f32 %v3526, %v3527
  %v3529 = vsel %vm3301, %v2953, 0.0
  %v3530 = vadd.f32 %v3528, %v3529
  %v3531 = vsel %vm3301, %v2954, 0.0
  %v3532 = vadd.f32 %v3530, %v3531
  %v3533 = vsel %vm3301, %v2955, 0.0
  %v3534 = vadd.f32 %v3532, %v3533
  %v3535 = vsel %vm3301, %v2956, 0.0
  %v3536 = vadd.f32 %v3534, %v3535
  %v3537 = vsel %vm3301, %v2957, 0.0
  %v3538 = vadd.f32 %v3536, %v3537
  %v3539 = vsel %vm3301, %v2958, 0.0
  %v3540 = vadd.f32 %v3538, %v3539
  %v3541 = vsel %vm3301, %v2959, 0.0
  %v3542 = vadd.f32 %v3540, %v3541
  %v3543 = vsel %vm3301, %v2960, 0.0
  %v3544 = vadd.f32 %v3542, %v3543
  %v3545 = vsel %vm3301, %v2961, 0.0
  %v3546 = vadd.f32 %v3544, %v3545
  %v3547 = vsel %vm3301, %v2962, 0.0
  %v3548 = vadd.f32 %v3546, %v3547
  %v3549 = vsel %vm3301, %v2963, 0.0
  %v3550 = vadd.f32 %v3548, %v3549
  %v3551 = vsel %vm3301, %v2964, 0.0
  %v3552 = vadd.f32 %v3550, %v3551
  %v3553 = vsel %vm3301, %v2965, 0.0
  %v3554 = vadd.f32 %v3552, %v3553
  %v3555 = vsel %vm3301, %v2966, 0.0
  %v3556 = vadd.f32 %v3554, %v3555
  %v3557 = vsel %vm3301, %v2967, 0.0
  %v3558 = vadd.f32 %v3556, %v3557
  %v3559 = vsel %vm3301, %v2968, 0.0
  %v3560 = vadd.f32 %v3558, %v3559
  %v3561 = vsel %vm3301, %v2969, 0.0
  %v3562 = vadd.f32 %v3560, %v3561
  %v3563 = vsel %vm3301, %v2970, 0.0
  %v3564 = vadd.f32 %v3562, %v3563
  %v3565 = vrot.slane %v3564, 4
  %v3566 = vadd.f32 %v3564, %v3565
  %v3567 = vrot.slane %v3566, 2
  %v3568 = vadd.f32 %v3566, %v3567
  %v3569 = vrot.slane %v3568, 1
  %v3570 = vadd.f32 %v3568, %v3569
  %v3571 = vadd.f32 %v3437, %v3570
  %3572 = vst.msk [vmem:[#allocation4] sm:$0x1] %vm3298, %v3571
  // Predicated region
  $region30: #{segmentation_module_forward.1} parent=0 // pred_check
    %p3573 = pneg %p68
  $region31: #{segmentation_module_forward.1} parent=0 // pred_check_branch
    %3575 = sbr.rel (%p3573) target = $region33
  $region32: #{segmentation_module_forward.1} parent=0 // pred_region
    %v3576 = vld [vmem:[#allocation2] sm:$0x1]
    %v3578 = vlaneseq
    %v3579 = vshrl.u32 %v3578, 7
    %v3580 = vsub.s32 0, %v3579
    %v3581 = vrot.slane %v3576, %v3580
    %3582 = vset.pattern.permute.xlu0 0
    %3583 = vperm.xlu0 %3582, %v3581
    %v3584 = vpop.permute.xlu0 %3583
    %v3586 = vld [vmem:[#allocation3] sm:$0x1]
    %v3588 = vlaneseq
    %v3589 = vshrl.u32 %v3588, 7
    %v3590 = vsub.s32 0, %v3589
    %v3591 = vrot.slane %v3586, %v3590
    %3592 = vset.pattern.permute.xlu0 0
    %3593 = vperm.xlu0 %3592, %v3591
    %v3594 = vpop.permute.xlu0 %3593
    %v3596 = vld [vmem:[#allocation4] sm:$0x1]
    %v3598 = vlaneseq
    %v3599 = vshrl.u32 %v3598, 7
    %v3600 = vsub.s32 0, %v3599
    %v3601 = vrot.slane %v3596, %v3600
    %3602 = vset.pattern.permute.xlu0 0
    %3603 = vperm.xlu0 %3602, %v3601
    %v3604 = vpop.permute.xlu0 %3603
    %vm3606 = vcmp.eq.s32.totalorder %v1238, 0
    %v3607 = vsel %vm3606, %v3584, 0.0
    %vm3608 = vcmp.eq.s32.totalorder %v1238, 1
    %v3609 = vsel %vm3608, %v3594, 0.0
    %v3610 = vadd.f32 %v3607, %v3609
    %vm3611 = vcmp.eq.s32.totalorder %v1238, 2
    %v3612 = vsel %vm3611, %v3604, 0.0
    %v3613 = vadd.f32 %v3610, %v3612
    %3614 = vst [vmem:[%s6] sm:$0xff] %v3613
  $region33: #{segmentation_module_forward.1} parent=0 // pred_fallthru
    _
  // Predicated region
  $region34: #{segmentation_module_forward.1} parent=0 // pred_check
    _
  $region35: #{segmentation_module_forward.1} parent=0 // pred_check_branch
    %3616 = sbr.rel (0) target = $region37
  $region36: #{segmentation_module_forward.1} parent=0 // pred_region
    _
  $region37: #{segmentation_module_forward.1} parent=0 // pred_fallthru
    _
  // Predicated region
  $region38: #{segmentation_module_forward.1} parent=0 // pred_check
    _
  $region39: #{segmentation_module_forward.1} parent=0 // pred_check_branch
    %3618 = sbr.rel (0) target = $region41
  $region40: #{segmentation_module_forward.1} parent=0 // pred_region
    _
  $region41: #{segmentation_module_forward.1} parent=0 // pred_fallthru
    _

</llo_original>
